<compile_context>
chip_gen: v7x
topology: tpu7x:2x2x1
jax: 0.10.0
libtpu: 0.0.40
codegen_flags: <defaults>
</compile_context>

<pallas_src>
import jax
import jax.numpy as jnp
from jax.experimental import pallas as pl
from jax.experimental.pallas import tpu as pltpu

HIDDEN = 100                     # hidden_dim in the PyTorch module
H_PAD = 128                      # lane-aligned output-feature dim
K = HIDDEN * HIDDEN              # flattened bilinear reduction dim (10000)
K_PAD = 10240                    # lane-aligned K (row K carries the folded bias)


def _classifier_kernel(outer_ref, w_ref, w2_ref, b2_ref, out_ref):
    # Whole flattened bilinear contraction (incl. folded bias row) in one fat
    # MXU matmul: bf16 inputs, f32 accumulation.
    mix = jnp.dot(outer_ref[...], w_ref[...],
                  preferred_element_type=jnp.float32)          # (TB, 128)
    z = jax.nn.sigmoid(mix)                                    # padded cols -> 0.5
    # Final Linear(out_features=1): VPU multiply + lane reduce.  w2's padded
    # lanes are zero, cancelling the 0.5's from padded output columns.
    lin = jnp.sum(z * w2_ref[...], axis=-1, keepdims=True) + b2_ref[0]
    out_ref[...] = jax.nn.sigmoid(lin)                         # (TB, 1)


def prepare_params(params):
    """One-time weight re-layout + bias folding + padding + bf16 cast (init time)."""
    W, bias, W2, b2 = (params["bil_w"], params["bil_b"],
                       params["lin_w"], params["lin_b"])
    # W_flat[i*HIDDEN + j, o] = W[o, i, j].  Row K holds the bilinear bias; the
    # matching LHS lane is pinned to 1.0, folding the bias add into the matmul.
    w_flat = jnp.transpose(W, (1, 2, 0)).reshape(K, HIDDEN)
    w_pad = jnp.zeros((K_PAD, H_PAD), jnp.float32)
    w_pad = w_pad.at[:K, :HIDDEN].set(w_flat)
    w_pad = w_pad.at[K, :HIDDEN].set(bias)
    w2_row = jnp.zeros((1, H_PAD), jnp.float32).at[0, :HIDDEN].set(W2[0])
    return {
        "w_flat": w_pad.astype(jnp.bfloat16),            # ~2.6 MiB: the only big HBM read
        "w2": w2_row,                                    # (1, 128) f32 VMEM row
        "b2": jnp.asarray(b2, jnp.float32).reshape((1,)),  # SMEM scalar
    }


@jax.jit
def classifier_forward(geek, job, prepped):
    """geek, job: (B, HIDDEN) float32.  Returns (B, 1) match score."""
    B = geek.shape[0]
    if B <= 128:                                   # one batch tile
        b_pad = max(16, ((B + 15) // 16) * 16)     # bf16-sublane aligned
        tb = b_pad
    else:                                          # many tiles; W stays resident
        b_pad = ((B + 127) // 128) * 128
        tb = 128
    nb = b_pad // tb

    # Fused (under jit) outer-product + bias lane + pad + bf16 cast.
    outer = (geek[:, :, None] * job[:, None, :]).reshape(B, K)
    outer = jnp.concatenate([outer, jnp.ones((B, 1), outer.dtype)], axis=1)  # bias lane
    outer_p = jnp.pad(outer, ((0, b_pad - B), (0, K_PAD - (K + 1)))).astype(jnp.bfloat16)

    out = pl.pallas_call(
        _classifier_kernel,
        out_shape=jax.ShapeDtypeStruct((b_pad, 1), jnp.float32),
        grid_spec=pltpu.PrefetchScalarGridSpec(
            num_scalar_prefetch=0,
            grid=(nb,),
            in_specs=[
                pl.BlockSpec((tb, K_PAD), lambda b: (b, 0)),        # outer-product tile
                pl.BlockSpec((K_PAD, H_PAD), lambda b: (0, 0)),     # whole W, resident
                pl.BlockSpec((1, H_PAD), lambda b: (0, 0)),         # final linear weight row
                pl.BlockSpec(memory_space=pltpu.MemorySpace.SMEM),  # final linear bias scalar
            ],
            out_specs=pl.BlockSpec((tb, 1), lambda b: (b, 0)),
        ),
        compiler_params=pltpu.CompilerParams(
            dimension_semantics=("parallel",)),     # batch axis -> both TCs on v7x
    )(outer_p, prepped["w_flat"], prepped["w2"], prepped["b2"])

    return out[:B, :]


def init_params(key):
    """Deterministic init matching PyTorch layer shapes (Bilinear + Linear)."""
    k1, k2, k3, k4 = jax.random.split(key, 4)
    bound = 1.0 / jnp.sqrt(jnp.float32(HIDDEN))
    return {
        "bil_w": jax.random.uniform(k1, (HIDDEN, HIDDEN, HIDDEN),
                                    jnp.float32, -bound, bound),
        "bil_b": jax.random.uniform(k2, (HIDDEN,), jnp.float32, -bound, bound),
        "lin_w": jax.random.uniform(k3, (1, HIDDEN), jnp.float32, -bound, bound),
        "lin_b": jax.random.uniform(k4, (1,), jnp.float32, -bound, bound),
    }


def reference_forward(geek, job, params):
    """Full-precision (f32) reference of the PyTorch forward."""
    mix = jnp.einsum("bi,oij,bj->bo", geek, params["bil_w"], job,
                     precision=jax.lax.Precision.HIGHEST) + params["bil_b"]
    z = jax.nn.sigmoid(mix)
    lin = z @ params["lin_w"].T + params["lin_b"]
    return jax.nn.sigmoid(lin)


def quantized_reference(geek, job, prepped):
    """Reference with the same bf16 quantization / f32 accumulation as the kernel."""
    B = geek.shape[0]
    outer = (geek[:, :, None] * job[:, None, :]).reshape(B, K)
    outer = jnp.concatenate([outer, jnp.ones((B, 1), outer.dtype)], axis=1)
    outer = outer.astype(jnp.bfloat16).astype(jnp.float32)
    w = prepped["w_flat"][:K + 1].astype(jnp.float32)
    mix = jnp.dot(outer, w, precision=jax.lax.Precision.HIGHEST)
    z = jax.nn.sigmoid(mix)
    lin = jnp.sum(z * prepped["w2"], axis=-1, keepdims=True) + prepped["b2"][0]
    return jax.nn.sigmoid(lin)


if __name__ == "__main__":
    key = jax.random.PRNGKey(0)
    kp, kg, kj = jax.random.split(key, 3)
    params = init_params(kp)
    prepped = jax.tree_util.tree_map(jax.block_until_ready, prepare_params(params))

    B = 4
    geek = jax.random.normal(kg, (B, HIDDEN), jnp.float32)
    job = jax.random.normal(kj, (B, HIDDEN), jnp.float32)

    out = jax.block_until_ready(classifier_forward(geek, job, prepped))
    assert out.shape == (B, 1)

    # Tight check vs. a reference using the same bf16 quantization (only
    # accumulation-order differences remain), plus a loose sanity check vs.
    # the full-f32 reference (bf16 weights => ~1e-3 level differences).
    ref_q = quantized_reference(geek, job, prepped)
    ref_f = reference_forward(geek, job, params)
    assert jnp.allclose(out, ref_q, atol=1e-4, rtol=1e-4), (out, ref_q)
    assert jnp.allclose(out, ref_f, atol=2e-2, rtol=2e-2), (out, ref_f)
    print("KERNEL_OK")
</pallas_src>

<mosaic_0001>
module attributes {stable_mosaic.version = 11 : i64} {
  func.func @_classifier_kernel(%arg0: i32, %arg1: memref<16x10240xbf16, #tpu.memory_space<vmem>>, %arg2: memref<10240x128xbf16, #tpu.memory_space<vmem>>, %arg3: memref<1x128xf32, #tpu.memory_space<vmem>>, %arg4: memref<1xf32, #tpu.memory_space<smem>>, %arg5: memref<16x1xf32, #tpu.memory_space<vmem>>) attributes {dimension_semantics = [#tpu.dimension_semantics<parallel>], iteration_bounds = array<i64: 1>, scalar_prefetch = 0 : i64, scratch_operands = 0 : i64, tpu.core_type = #tpu.core_type<tc>, window_params = [{transform_indices = @transform_0, window_bounds = array<i64: 16, 10240>}, {pipeline_mode = #tpu.pipeline_mode<synchronous>, transform_indices = @transform_1, window_bounds = array<i64: 10240, 128>}, {pipeline_mode = #tpu.pipeline_mode<synchronous>, transform_indices = @transform_2, window_bounds = array<i64: 1, 128>}, {transform_indices = @transform_3, window_bounds = array<i64: 1>}, {transform_indices = @transform_4, window_bounds = array<i64: 16, 1>}]} {
    %c0 = arith.constant 0 : index
    %c0_0 = arith.constant 0 : index
    %0 = vector.load %arg1[%c0, %c0_0] : memref<16x10240xbf16, #tpu.memory_space<vmem>>, vector<16x10240xbf16>
    %c0_1 = arith.constant 0 : index
    %c0_2 = arith.constant 0 : index
    %1 = vector.load %arg2[%c0_1, %c0_2] : memref<10240x128xbf16, #tpu.memory_space<vmem>>, vector<10240x128xbf16>
    %cst = arith.constant dense<0.000000e+00> : vector<16x128xf32>
    %2 = tpu.matmul %0, %1, %cst {dimension_numbers = #tpu.dot_dimension_numbers<[1], [0], [0], [1], [0, 0, 1, 1], [], []>} : vector<16x10240xbf16>, vector<10240x128xbf16>, vector<16x128xf32> -> vector<16x128xf32>
    %3 = arith.negf %2 : vector<16x128xf32>
    %4 = math.exp %3 : vector<16x128xf32>
    %cst_3 = arith.constant 1.000000e+00 : f32
    %5 = vector.broadcast %cst_3 : f32 to vector<16x128xf32>
    %6 = arith.addf %5, %4 : vector<16x128xf32>
    %7 = arith.divf %5, %6 : vector<16x128xf32>
    %c0_4 = arith.constant 0 : index
    %c0_5 = arith.constant 0 : index
    %8 = vector.load %arg3[%c0_4, %c0_5] : memref<1x128xf32, #tpu.memory_space<vmem>>, vector<1x128xf32>
    %9 = vector.broadcast %8 : vector<1x128xf32> to vector<16x128xf32>
    %10 = arith.mulf %7, %9 : vector<16x128xf32>
    %cst_6 = arith.constant dense<0.000000e+00> : vector<16xf32>
    %11 = vector.multi_reduction <add>, %10, %cst_6 [1] : vector<16x128xf32> to vector<16xf32>
    %12 = vector.shape_cast %11 : vector<16xf32> to vector<16x1xf32>
    %c0_7 = arith.constant 0 : index
    %13 = memref.load %arg4[%c0_7] : memref<1xf32, #tpu.memory_space<smem>>
    %14 = vector.broadcast %13 : f32 to vector<16x1xf32>
    %15 = arith.addf %12, %14 : vector<16x1xf32>
    %16 = arith.negf %15 : vector<16x1xf32>
    %17 = math.exp %16 : vector<16x1xf32>
    %cst_8 = arith.constant 1.000000e+00 : f32
    %18 = vector.broadcast %cst_8 : f32 to vector<16x1xf32>
    %19 = arith.addf %18, %17 : vector<16x1xf32>
    %20 = arith.divf %18, %19 : vector<16x1xf32>
    %c0_9 = arith.constant 0 : index
    %c0_10 = arith.constant 0 : index
    %21 = vector.load %arg5[%c0_9, %c0_10] : memref<16x1xf32, #tpu.memory_space<vmem>>, vector<16x1xf32>
    tpu.vector_store %arg5[%c0_9, %c0_10], %20 {strides = array<i32>} : memref<16x1xf32, #tpu.memory_space<vmem>>, vector<16x1xf32>,
    return
  }
  func.func @transform_0(%arg0: i32) -> (i32, i32) {
    %c0_i32 = arith.constant 0 : i32
    %c0_i32_0 = arith.constant 0 : i32
    return %arg0, %c0_i32 : i32, i32
  }
  func.func @transform_1(%arg0: i32) -> (i32, i32) {
    %c0_i32 = arith.constant 0 : i32
    %c0_i32_0 = arith.constant 0 : i32
    %c0_i32_1 = arith.constant 0 : i32
    return %c0_i32, %c0_i32_0 : i32, i32
  }
  func.func @transform_2(%arg0: i32) -> (i32, i32) {
    %c0_i32 = arith.constant 0 : i32
    %c0_i32_0 = arith.constant 0 : i32
    %c0_i32_1 = arith.constant 0 : i32
    return %c0_i32, %c0_i32_0 : i32, i32
  }
  func.func @transform_3(%arg0: i32) -> i32 {
    %c0_i32 = arith.constant 0 : i32
    %c0_i32_0 = arith.constant 0 : i32
    return %c0_i32 : i32
  }
  func.func @transform_4(%arg0: i32) -> (i32, i32) {
    %c0_i32 = arith.constant 0 : i32
    %c0_i32_0 = arith.constant 0 : i32
    return %arg0, %c0_i32 : i32, i32
  }
}

</mosaic_0001>

<llo_original>
// kernel: classifier_forward.1
$region0: #{classifier_forward.1}
  #allocation0 [shape = 'u32[]', space=smem, size = 0x4, offset = 0x4, fixed_abs, tag = 'smem constant byte address 0x4 - core index']
  #allocation1 [shape = 'u32[144,128]{1,0:T(1,128)}', space=vmem, size = 0x12000, scoped, tag = 'internal scratch']
  #allocation2 [shape = 'f32[1]{0:T(128)S(6)}', space=smem, size = 0x200, scoped, tag = 'scoped memory for classifier_forward.1']
  %s0 = inlined_call_operand.vmem [shape: bf16[16,10240], index: 0, kind: input, shape index: {}]
  %s1 = inlined_call_operand.hbm [shape: bf16[10240,128], index: 1, kind: input, shape index: {}]
  %s2 = inlined_call_operand.hbm [shape: f32[1,128], index: 2, kind: input, shape index: {}]
  %s3 = inlined_call_operand.<no memory space> [shape: f32[1], index: 3, kind: input, shape index: {}]
  %s4 = inlined_call_operand.vmem [shape: f32[16,1], index: 4, kind: output, shape index: {}]
  %s5 = sld [smem:[#allocation0]]
  $region34: #{classifier_forward.1} parent=0
    _
  %s7 = ssub.s32 1, %s5
  %s8 = scalar_select 0, %s7, %s5
  %9 = sst [smem:[#allocation2]] %s3
  $region1: #{classifier_forward.1} parent=0
    #allocation3 [shape = 'u8[2621440]{0}', space=vmem, size = 0x280000, scoped, tag = 'input window, operand 1, single buffered']
    #allocation4 [shape = 's32[1]{0}', space=sflag, size = 0x4, scoped, tag = 'scoped memory for classifier_forward.1']
    #allocation5 [shape = 'u8[512]{0}', space=vmem, size = 0x400, scoped, tag = 'input window, operand 2, single buffered']
    #allocation6 [shape = 's32[1]{0}', space=sflag, size = 0x4, scoped, tag = 'scoped memory for classifier_forward.1']
    %10 = vsyncpa [#allocation4], 0
    %11 = vsyncpa [#allocation6], 0
    // Predicated region
    $region2: #{classifier_forward.1} parent=1 // pred_check
      _
    $region3: #{classifier_forward.1} parent=1 // pred_check_branch
      %13 = sbr.rel (0) target = $region5
    $region4: #{classifier_forward.1} parent=1 // pred_region
      _
    $region5: #{classifier_forward.1} parent=1 // pred_fallthru
      _
    // Predicated region
    $region6: #{classifier_forward.1} parent=1 // pred_check
      _
    $region7: #{classifier_forward.1} parent=1 // pred_check_branch
      %15 = sbr.rel (0) target = $region9
    $region8: #{classifier_forward.1} parent=1 // pred_region
      %s17 = ssub.s32 81920, 81920
      %18 = vsyncadd [#allocation4], %s17
      %s19 = sshll.u32 [#allocation3], 4
      %s20 = int_to_ptr.vmem [resolvable:$true] %s19
      %25 = dma.hbm_to_vmem [thread:$0]  %s1, 81920, %s20, [#allocation4], 64, 64, 4
    $region9: #{classifier_forward.1} parent=1 // pred_fallthru
      _
    // Predicated region
    $region10: #{classifier_forward.1} parent=1 // pred_check
      _
    $region11: #{classifier_forward.1} parent=1 // pred_check_branch
      %27 = sbr.rel (0) target = $region13
    $region12: #{classifier_forward.1} parent=1 // pred_region
      %s29 = ssub.s32 16, 16
      %30 = vsyncadd [#allocation6], %s29
      %s32 = sshll.u32 [#allocation5], 4
      %s33 = int_to_ptr.vmem [resolvable:$true] %s32
      %35 = dma.hbm_to_vmem [thread:$0]  %s2, 16, %s33, [#allocation6]
    $region13: #{classifier_forward.1} parent=1 // pred_fallthru
      _
    // Predicated region
    $region14: #{classifier_forward.1} parent=1 // pred_check
      _
    $region15: #{classifier_forward.1} parent=1 // pred_check_branch
      %37 = sbr.rel (0) target = $region17
    $region16: #{classifier_forward.1} parent=1 // pred_region
      _
    $region17: #{classifier_forward.1} parent=1 // pred_fallthru
      _
    // Predicated region
    $region18: #{classifier_forward.1} parent=1 // pred_check
      _
    $region19: #{classifier_forward.1} parent=1 // pred_check_branch
      %39 = sbr.rel (0) target = $region21
    $region20: #{classifier_forward.1} parent=1 // pred_region
      %40 = dma.done [#allocation4], 81920
    $region21: #{classifier_forward.1} parent=1 // pred_fallthru
      _
    // Predicated region
    $region22: #{classifier_forward.1} parent=1 // pred_check
      _
    $region23: #{classifier_forward.1} parent=1 // pred_check_branch
      %42 = sbr.rel (0) target = $region25
    $region24: #{classifier_forward.1} parent=1 // pred_region
      %43 = dma.done [#allocation6], 16
    $region25: #{classifier_forward.1} parent=1 // pred_fallthru
      _
    %v45 = vld [vmem:[%s0] sm:$0xff]
    %v46 = vld [vmem:[%s0 + $0x8] sm:$0xff]
    %v47 = vld [vmem:[%s0 + $0x10] sm:$0xff]
    %v48 = vld [vmem:[%s0 + $0x18] sm:$0xff]
    %v49 = vld [vmem:[%s0 + $0x20] sm:$0xff]
    %v50 = vld [vmem:[%s0 + $0x28] sm:$0xff]
    %v51 = vld [vmem:[%s0 + $0x30] sm:$0xff]
    %v52 = vld [vmem:[%s0 + $0x38] sm:$0xff]
    %v53 = vld [vmem:[%s0 + $0x40] sm:$0xff]
    %v54 = vld [vmem:[%s0 + $0x48] sm:$0xff]
    %v55 = vld [vmem:[%s0 + $0x50] sm:$0xff]
    %v56 = vld [vmem:[%s0 + $0x58] sm:$0xff]
    %v57 = vld [vmem:[%s0 + $0x60] sm:$0xff]
    %v58 = vld [vmem:[%s0 + $0x68] sm:$0xff]
    %v59 = vld [vmem:[%s0 + $0x70] sm:$0xff]
    %v60 = vld [vmem:[%s0 + $0x78] sm:$0xff]
    %v61 = vld [vmem:[%s0 + $0x80] sm:$0xff]
    %v62 = vld [vmem:[%s0 + $0x88] sm:$0xff]
    %v63 = vld [vmem:[%s0 + $0x90] sm:$0xff]
    %v64 = vld [vmem:[%s0 + $0x98] sm:$0xff]
    %v65 = vld [vmem:[%s0 + $0xa0] sm:$0xff]
    %v66 = vld [vmem:[%s0 + $0xa8] sm:$0xff]
    %v67 = vld [vmem:[%s0 + $0xb0] sm:$0xff]
    %v68 = vld [vmem:[%s0 + $0xb8] sm:$0xff]
    %v69 = vld [vmem:[%s0 + $0xc0] sm:$0xff]
    %v70 = vld [vmem:[%s0 + $0xc8] sm:$0xff]
    %v71 = vld [vmem:[%s0 + $0xd0] sm:$0xff]
    %v72 = vld [vmem:[%s0 + $0xd8] sm:$0xff]
    %v73 = vld [vmem:[%s0 + $0xe0] sm:$0xff]
    %v74 = vld [vmem:[%s0 + $0xe8] sm:$0xff]
    %v75 = vld [vmem:[%s0 + $0xf0] sm:$0xff]
    %v76 = vld [vmem:[%s0 + $0xf8] sm:$0xff]
    %v77 = vld [vmem:[%s0 + $0x100] sm:$0xff]
    %v78 = vld [vmem:[%s0 + $0x108] sm:$0xff]
    %v79 = vld [vmem:[%s0 + $0x110] sm:$0xff]
    %v80 = vld [vmem:[%s0 + $0x118] sm:$0xff]
    %v81 = vld [vmem:[%s0 + $0x120] sm:$0xff]
    %v82 = vld [vmem:[%s0 + $0x128] sm:$0xff]
    %v83 = vld [vmem:[%s0 + $0x130] sm:$0xff]
    %v84 = vld [vmem:[%s0 + $0x138] sm:$0xff]
    %v85 = vld [vmem:[%s0 + $0x140] sm:$0xff]
    %v86 = vld [vmem:[%s0 + $0x148] sm:$0xff]
    %v87 = vld [vmem:[%s0 + $0x150] sm:$0xff]
    %v88 = vld [vmem:[%s0 + $0x158] sm:$0xff]
    %v89 = vld [vmem:[%s0 + $0x160] sm:$0xff]
    %v90 = vld [vmem:[%s0 + $0x168] sm:$0xff]
    %v91 = vld [vmem:[%s0 + $0x170] sm:$0xff]
    %v92 = vld [vmem:[%s0 + $0x178] sm:$0xff]
    %v93 = vld [vmem:[%s0 + $0x180] sm:$0xff]
    %v94 = vld [vmem:[%s0 + $0x188] sm:$0xff]
    %v95 = vld [vmem:[%s0 + $0x190] sm:$0xff]
    %v96 = vld [vmem:[%s0 + $0x198] sm:$0xff]
    %v97 = vld [vmem:[%s0 + $0x1a0] sm:$0xff]
    %v98 = vld [vmem:[%s0 + $0x1a8] sm:$0xff]
    %v99 = vld [vmem:[%s0 + $0x1b0] sm:$0xff]
    %v100 = vld [vmem:[%s0 + $0x1b8] sm:$0xff]
    %v101 = vld [vmem:[%s0 + $0x1c0] sm:$0xff]
    %v102 = vld [vmem:[%s0 + $0x1c8] sm:$0xff]
    %v103 = vld [vmem:[%s0 + $0x1d0] sm:$0xff]
    %v104 = vld [vmem:[%s0 + $0x1d8] sm:$0xff]
    %v105 = vld [vmem:[%s0 + $0x1e0] sm:$0xff]
    %v106 = vld [vmem:[%s0 + $0x1e8] sm:$0xff]
    %v107 = vld [vmem:[%s0 + $0x1f0] sm:$0xff]
    %v108 = vld [vmem:[%s0 + $0x1f8] sm:$0xff]
    %v109 = vld [vmem:[%s0 + $0x200] sm:$0xff]
    %v110 = vld [vmem:[%s0 + $0x208] sm:$0xff]
    %v111 = vld [vmem:[%s0 + $0x210] sm:$0xff]
    %v112 = vld [vmem:[%s0 + $0x218] sm:$0xff]
    %v113 = vld [vmem:[%s0 + $0x220] sm:$0xff]
    %v114 = vld [vmem:[%s0 + $0x228] sm:$0xff]
    %v115 = vld [vmem:[%s0 + $0x230] sm:$0xff]
    %v116 = vld [vmem:[%s0 + $0x238] sm:$0xff]
    %v117 = vld [vmem:[%s0 + $0x240] sm:$0xff]
    %v118 = vld [vmem:[%s0 + $0x248] sm:$0xff]
    %v119 = vld [vmem:[%s0 + $0x250] sm:$0xff]
    %v120 = vld [vmem:[%s0 + $0x258] sm:$0xff]
    %v121 = vld [vmem:[%s0 + $0x260] sm:$0xff]
    %v122 = vld [vmem:[%s0 + $0x268] sm:$0xff]
    %v123 = vld [vmem:[%s0 + $0x270] sm:$0xff]
    %v124 = vld [vmem:[%s0 + $0x278] sm:$0xff]
    %v125 = vld [vmem:[#allocation3] sm:$0xf]
    %v126 = vld [vmem:[#allocation3 + $0x4] sm:$0xf]
    %v127 = vld [vmem:[#allocation3 + $0x8] sm:$0xf]
    %v128 = vld [vmem:[#allocation3 + $0xc] sm:$0xf]
    %v129 = vld [vmem:[#allocation3 + $0x10] sm:$0xf]
    %v130 = vld [vmem:[#allocation3 + $0x14] sm:$0xf]
    %v131 = vld [vmem:[#allocation3 + $0x18] sm:$0xf]
    %v132 = vld [vmem:[#allocation3 + $0x1c] sm:$0xf]
    %v133 = vld [vmem:[#allocation3 + $0x20] sm:$0xf]
    %v134 = vld [vmem:[#allocation3 + $0x24] sm:$0xf]
    %v135 = vld [vmem:[#allocation3 + $0x28] sm:$0xf]
    %v136 = vld [vmem:[#allocation3 + $0x2c] sm:$0xf]
    %v137 = vld [vmem:[#allocation3 + $0x30] sm:$0xf]
    %v138 = vld [vmem:[#allocation3 + $0x34] sm:$0xf]
    %v139 = vld [vmem:[#allocation3 + $0x38] sm:$0xf]
    %v140 = vld [vmem:[#allocation3 + $0x3c] sm:$0xf]
    %v141 = vld [vmem:[#allocation3 + $0x40] sm:$0xf]
    %v142 = vld [vmem:[#allocation3 + $0x44] sm:$0xf]
    %v143 = vld [vmem:[#allocation3 + $0x48] sm:$0xf]
    %v144 = vld [vmem:[#allocation3 + $0x4c] sm:$0xf]
    %v145 = vld [vmem:[#allocation3 + $0x50] sm:$0xf]
    %v146 = vld [vmem:[#allocation3 + $0x54] sm:$0xf]
    %v147 = vld [vmem:[#allocation3 + $0x58] sm:$0xf]
    %v148 = vld [vmem:[#allocation3 + $0x5c] sm:$0xf]
    %v149 = vld [vmem:[#allocation3 + $0x60] sm:$0xf]
    %v150 = vld [vmem:[#allocation3 + $0x64] sm:$0xf]
    %v151 = vld [vmem:[#allocation3 + $0x68] sm:$0xf]
    %v152 = vld [vmem:[#allocation3 + $0x6c] sm:$0xf]
    %v153 = vld [vmem:[#allocation3 + $0x70] sm:$0xf]
    %v154 = vld [vmem:[#allocation3 + $0x74] sm:$0xf]
    %v155 = vld [vmem:[#allocation3 + $0x78] sm:$0xf]
    %v156 = vld [vmem:[#allocation3 + $0x7c] sm:$0xf]
    %v157 = vld [vmem:[#allocation3 + $0x80] sm:$0xf]
    %v158 = vld [vmem:[#allocation3 + $0x84] sm:$0xf]
    %v159 = vld [vmem:[#allocation3 + $0x88] sm:$0xf]
    %v160 = vld [vmem:[#allocation3 + $0x8c] sm:$0xf]
    %v161 = vld [vmem:[#allocation3 + $0x90] sm:$0xf]
    %v162 = vld [vmem:[#allocation3 + $0x94] sm:$0xf]
    %v163 = vld [vmem:[#allocation3 + $0x98] sm:$0xf]
    %v164 = vld [vmem:[#allocation3 + $0x9c] sm:$0xf]
    %v165 = vld [vmem:[#allocation3 + $0xa0] sm:$0xf]
    %v166 = vld [vmem:[#allocation3 + $0xa4] sm:$0xf]
    %v167 = vld [vmem:[#allocation3 + $0xa8] sm:$0xf]
    %v168 = vld [vmem:[#allocation3 + $0xac] sm:$0xf]
    %v169 = vld [vmem:[#allocation3 + $0xb0] sm:$0xf]
    %v170 = vld [vmem:[#allocation3 + $0xb4] sm:$0xf]
    %v171 = vld [vmem:[#allocation3 + $0xb8] sm:$0xf]
    %v172 = vld [vmem:[#allocation3 + $0xbc] sm:$0xf]
    %v173 = vld [vmem:[#allocation3 + $0xc0] sm:$0xf]
    %v174 = vld [vmem:[#allocation3 + $0xc4] sm:$0xf]
    %v175 = vld [vmem:[#allocation3 + $0xc8] sm:$0xf]
    %v176 = vld [vmem:[#allocation3 + $0xcc] sm:$0xf]
    %v177 = vld [vmem:[#allocation3 + $0xd0] sm:$0xf]
    %v178 = vld [vmem:[#allocation3 + $0xd4] sm:$0xf]
    %v179 = vld [vmem:[#allocation3 + $0xd8] sm:$0xf]
    %v180 = vld [vmem:[#allocation3 + $0xdc] sm:$0xf]
    %v181 = vld [vmem:[#allocation3 + $0xe0] sm:$0xf]
    %v182 = vld [vmem:[#allocation3 + $0xe4] sm:$0xf]
    %v183 = vld [vmem:[#allocation3 + $0xe8] sm:$0xf]
    %v184 = vld [vmem:[#allocation3 + $0xec] sm:$0xf]
    %v185 = vld [vmem:[#allocation3 + $0xf0] sm:$0xf]
    %v186 = vld [vmem:[#allocation3 + $0xf4] sm:$0xf]
    %v187 = vld [vmem:[#allocation3 + $0xf8] sm:$0xf]
    %v188 = vld [vmem:[#allocation3 + $0xfc] sm:$0xf]
    %v189 = vld [vmem:[#allocation3 + $0x100] sm:$0xf]
    %v190 = vld [vmem:[#allocation3 + $0x104] sm:$0xf]
    %v191 = vld [vmem:[#allocation3 + $0x108] sm:$0xf]
    %v192 = vld [vmem:[#allocation3 + $0x10c] sm:$0xf]
    %v193 = vld [vmem:[#allocation3 + $0x110] sm:$0xf]
    %v194 = vld [vmem:[#allocation3 + $0x114] sm:$0xf]
    %v195 = vld [vmem:[#allocation3 + $0x118] sm:$0xf]
    %v196 = vld [vmem:[#allocation3 + $0x11c] sm:$0xf]
    %v197 = vld [vmem:[#allocation3 + $0x120] sm:$0xf]
    %v198 = vld [vmem:[#allocation3 + $0x124] sm:$0xf]
    %v199 = vld [vmem:[#allocation3 + $0x128] sm:$0xf]
    %v200 = vld [vmem:[#allocation3 + $0x12c] sm:$0xf]
    %v201 = vld [vmem:[#allocation3 + $0x130] sm:$0xf]
    %v202 = vld [vmem:[#allocation3 + $0x134] sm:$0xf]
    %v203 = vld [vmem:[#allocation3 + $0x138] sm:$0xf]
    %v204 = vld [vmem:[#allocation3 + $0x13c] sm:$0xf]
    %v205 = vld [vmem:[#allocation3 + $0x140] sm:$0xf]
    %v206 = vld [vmem:[#allocation3 + $0x144] sm:$0xf]
    %v207 = vld [vmem:[#allocation3 + $0x148] sm:$0xf]
    %v208 = vld [vmem:[#allocation3 + $0x14c] sm:$0xf]
    %v209 = vld [vmem:[#allocation3 + $0x150] sm:$0xf]
    %v210 = vld [vmem:[#allocation3 + $0x154] sm:$0xf]
    %v211 = vld [vmem:[#allocation3 + $0x158] sm:$0xf]
    %v212 = vld [vmem:[#allocation3 + $0x15c] sm:$0xf]
    %v213 = vld [vmem:[#allocation3 + $0x160] sm:$0xf]
    %v214 = vld [vmem:[#allocation3 + $0x164] sm:$0xf]
    %v215 = vld [vmem:[#allocation3 + $0x168] sm:$0xf]
    %v216 = vld [vmem:[#allocation3 + $0x16c] sm:$0xf]
    %v217 = vld [vmem:[#allocation3 + $0x170] sm:$0xf]
    %v218 = vld [vmem:[#allocation3 + $0x174] sm:$0xf]
    %v219 = vld [vmem:[#allocation3 + $0x178] sm:$0xf]
    %v220 = vld [vmem:[#allocation3 + $0x17c] sm:$0xf]
    %v221 = vld [vmem:[#allocation3 + $0x180] sm:$0xf]
    %v222 = vld [vmem:[#allocation3 + $0x184] sm:$0xf]
    %v223 = vld [vmem:[#allocation3 + $0x188] sm:$0xf]
    %v224 = vld [vmem:[#allocation3 + $0x18c] sm:$0xf]
    %v225 = vld [vmem:[#allocation3 + $0x190] sm:$0xf]
    %v226 = vld [vmem:[#allocation3 + $0x194] sm:$0xf]
    %v227 = vld [vmem:[#allocation3 + $0x198] sm:$0xf]
    %v228 = vld [vmem:[#allocation3 + $0x19c] sm:$0xf]
    %v229 = vld [vmem:[#allocation3 + $0x1a0] sm:$0xf]
    %v230 = vld [vmem:[#allocation3 + $0x1a4] sm:$0xf]
    %v231 = vld [vmem:[#allocation3 + $0x1a8] sm:$0xf]
    %v232 = vld [vmem:[#allocation3 + $0x1ac] sm:$0xf]
    %v233 = vld [vmem:[#allocation3 + $0x1b0] sm:$0xf]
    %v234 = vld [vmem:[#allocation3 + $0x1b4] sm:$0xf]
    %v235 = vld [vmem:[#allocation3 + $0x1b8] sm:$0xf]
    %v236 = vld [vmem:[#allocation3 + $0x1bc] sm:$0xf]
    %v237 = vld [vmem:[#allocation3 + $0x1c0] sm:$0xf]
    %v238 = vld [vmem:[#allocation3 + $0x1c4] sm:$0xf]
    %v239 = vld [vmem:[#allocation3 + $0x1c8] sm:$0xf]
    %v240 = vld [vmem:[#allocation3 + $0x1cc] sm:$0xf]
    %v241 = vld [vmem:[#allocation3 + $0x1d0] sm:$0xf]
    %v242 = vld [vmem:[#allocation3 + $0x1d4] sm:$0xf]
    %v243 = vld [vmem:[#allocation3 + $0x1d8] sm:$0xf]
    %v244 = vld [vmem:[#allocation3 + $0x1dc] sm:$0xf]
    %v245 = vld [vmem:[#allocation3 + $0x1e0] sm:$0xf]
    %v246 = vld [vmem:[#allocation3 + $0x1e4] sm:$0xf]
    %v247 = vld [vmem:[#allocation3 + $0x1e8] sm:$0xf]
    %v248 = vld [vmem:[#allocation3 + $0x1ec] sm:$0xf]
    %v249 = vld [vmem:[#allocation3 + $0x1f0] sm:$0xf]
    %v250 = vld [vmem:[#allocation3 + $0x1f4] sm:$0xf]
    %v251 = vld [vmem:[#allocation3 + $0x1f8] sm:$0xf]
    %v252 = vld [vmem:[#allocation3 + $0x1fc] sm:$0xf]
    %v253 = vld [vmem:[#allocation3 + $0x200] sm:$0xf]
    %v254 = vld [vmem:[#allocation3 + $0x204] sm:$0xf]
    %v255 = vld [vmem:[#allocation3 + $0x208] sm:$0xf]
    %v256 = vld [vmem:[#allocation3 + $0x20c] sm:$0xf]
    %v257 = vld [vmem:[#allocation3 + $0x210] sm:$0xf]
    %v258 = vld [vmem:[#allocation3 + $0x214] sm:$0xf]
    %v259 = vld [vmem:[#allocation3 + $0x218] sm:$0xf]
    %v260 = vld [vmem:[#allocation3 + $0x21c] sm:$0xf]
    %v261 = vld [vmem:[#allocation3 + $0x220] sm:$0xf]
    %v262 = vld [vmem:[#allocation3 + $0x224] sm:$0xf]
    %v263 = vld [vmem:[#allocation3 + $0x228] sm:$0xf]
    %v264 = vld [vmem:[#allocation3 + $0x22c] sm:$0xf]
    %v265 = vld [vmem:[#allocation3 + $0x230] sm:$0xf]
    %v266 = vld [vmem:[#allocation3 + $0x234] sm:$0xf]
    %v267 = vld [vmem:[#allocation3 + $0x238] sm:$0xf]
    %v268 = vld [vmem:[#allocation3 + $0x23c] sm:$0xf]
    %v269 = vld [vmem:[#allocation3 + $0x240] sm:$0xf]
    %v270 = vld [vmem:[#allocation3 + $0x244] sm:$0xf]
    %v271 = vld [vmem:[#allocation3 + $0x248] sm:$0xf]
    %v272 = vld [vmem:[#allocation3 + $0x24c] sm:$0xf]
    %v273 = vld [vmem:[#allocation3 + $0x250] sm:$0xf]
    %v274 = vld [vmem:[#allocation3 + $0x254] sm:$0xf]
    %v275 = vld [vmem:[#allocation3 + $0x258] sm:$0xf]
    %v276 = vld [vmem:[#allocation3 + $0x25c] sm:$0xf]
    %v277 = vld [vmem:[#allocation3 + $0x260] sm:$0xf]
    %v278 = vld [vmem:[#allocation3 + $0x264] sm:$0xf]
    %v279 = vld [vmem:[#allocation3 + $0x268] sm:$0xf]
    %v280 = vld [vmem:[#allocation3 + $0x26c] sm:$0xf]
    %v281 = vld [vmem:[#allocation3 + $0x270] sm:$0xf]
    %v282 = vld [vmem:[#allocation3 + $0x274] sm:$0xf]
    %v283 = vld [vmem:[#allocation3 + $0x278] sm:$0xf]
    %v284 = vld [vmem:[#allocation3 + $0x27c] sm:$0xf]
    %v285 = vld [vmem:[#allocation3 + $0x280] sm:$0xf]
    %v286 = vld [vmem:[#allocation3 + $0x284] sm:$0xf]
    %v287 = vld [vmem:[#allocation3 + $0x288] sm:$0xf]
    %v288 = vld [vmem:[#allocation3 + $0x28c] sm:$0xf]
    %v289 = vld [vmem:[#allocation3 + $0x290] sm:$0xf]
    %v290 = vld [vmem:[#allocation3 + $0x294] sm:$0xf]
    %v291 = vld [vmem:[#allocation3 + $0x298] sm:$0xf]
    %v292 = vld [vmem:[#allocation3 + $0x29c] sm:$0xf]
    %v293 = vld [vmem:[#allocation3 + $0x2a0] sm:$0xf]
    %v294 = vld [vmem:[#allocation3 + $0x2a4] sm:$0xf]
    %v295 = vld [vmem:[#allocation3 + $0x2a8] sm:$0xf]
    %v296 = vld [vmem:[#allocation3 + $0x2ac] sm:$0xf]
    %v297 = vld [vmem:[#allocation3 + $0x2b0] sm:$0xf]
    %v298 = vld [vmem:[#allocation3 + $0x2b4] sm:$0xf]
    %v299 = vld [vmem:[#allocation3 + $0x2b8] sm:$0xf]
    %v300 = vld [vmem:[#allocation3 + $0x2bc] sm:$0xf]
    %v301 = vld [vmem:[#allocation3 + $0x2c0] sm:$0xf]
    %v302 = vld [vmem:[#allocation3 + $0x2c4] sm:$0xf]
    %v303 = vld [vmem:[#allocation3 + $0x2c8] sm:$0xf]
    %v304 = vld [vmem:[#allocation3 + $0x2cc] sm:$0xf]
    %v305 = vld [vmem:[#allocation3 + $0x2d0] sm:$0xf]
    %v306 = vld [vmem:[#allocation3 + $0x2d4] sm:$0xf]
    %v307 = vld [vmem:[#allocation3 + $0x2d8] sm:$0xf]
    %v308 = vld [vmem:[#allocation3 + $0x2dc] sm:$0xf]
    %v309 = vld [vmem:[#allocation3 + $0x2e0] sm:$0xf]
    %v310 = vld [vmem:[#allocation3 + $0x2e4] sm:$0xf]
    %v311 = vld [vmem:[#allocation3 + $0x2e8] sm:$0xf]
    %v312 = vld [vmem:[#allocation3 + $0x2ec] sm:$0xf]
    %v313 = vld [vmem:[#allocation3 + $0x2f0] sm:$0xf]
    %v314 = vld [vmem:[#allocation3 + $0x2f4] sm:$0xf]
    %v315 = vld [vmem:[#allocation3 + $0x2f8] sm:$0xf]
    %v316 = vld [vmem:[#allocation3 + $0x2fc] sm:$0xf]
    %v317 = vld [vmem:[#allocation3 + $0x300] sm:$0xf]
    %v318 = vld [vmem:[#allocation3 + $0x304] sm:$0xf]
    %v319 = vld [vmem:[#allocation3 + $0x308] sm:$0xf]
    %v320 = vld [vmem:[#allocation3 + $0x30c] sm:$0xf]
    %v321 = vld [vmem:[#allocation3 + $0x310] sm:$0xf]
    %v322 = vld [vmem:[#allocation3 + $0x314] sm:$0xf]
    %v323 = vld [vmem:[#allocation3 + $0x318] sm:$0xf]
    %v324 = vld [vmem:[#allocation3 + $0x31c] sm:$0xf]
    %v325 = vld [vmem:[#allocation3 + $0x320] sm:$0xf]
    %v326 = vld [vmem:[#allocation3 + $0x324] sm:$0xf]
    %v327 = vld [vmem:[#allocation3 + $0x328] sm:$0xf]
    %v328 = vld [vmem:[#allocation3 + $0x32c] sm:$0xf]
    %v329 = vld [vmem:[#allocation3 + $0x330] sm:$0xf]
    %v330 = vld [vmem:[#allocation3 + $0x334] sm:$0xf]
    %v331 = vld [vmem:[#allocation3 + $0x338] sm:$0xf]
    %v332 = vld [vmem:[#allocation3 + $0x33c] sm:$0xf]
    %v333 = vld [vmem:[#allocation3 + $0x340] sm:$0xf]
    %v334 = vld [vmem:[#allocation3 + $0x344] sm:$0xf]
    %v335 = vld [vmem:[#allocation3 + $0x348] sm:$0xf]
    %v336 = vld [vmem:[#allocation3 + $0x34c] sm:$0xf]
    %v337 = vld [vmem:[#allocation3 + $0x350] sm:$0xf]
    %v338 = vld [vmem:[#allocation3 + $0x354] sm:$0xf]
    %v339 = vld [vmem:[#allocation3 + $0x358] sm:$0xf]
    %v340 = vld [vmem:[#allocation3 + $0x35c] sm:$0xf]
    %v341 = vld [vmem:[#allocation3 + $0x360] sm:$0xf]
    %v342 = vld [vmem:[#allocation3 + $0x364] sm:$0xf]
    %v343 = vld [vmem:[#allocation3 + $0x368] sm:$0xf]
    %v344 = vld [vmem:[#allocation3 + $0x36c] sm:$0xf]
    %v345 = vld [vmem:[#allocation3 + $0x370] sm:$0xf]
    %v346 = vld [vmem:[#allocation3 + $0x374] sm:$0xf]
    %v347 = vld [vmem:[#allocation3 + $0x378] sm:$0xf]
    %v348 = vld [vmem:[#allocation3 + $0x37c] sm:$0xf]
    %v349 = vld [vmem:[#allocation3 + $0x380] sm:$0xf]
    %v350 = vld [vmem:[#allocation3 + $0x384] sm:$0xf]
    %v351 = vld [vmem:[#allocation3 + $0x388] sm:$0xf]
    %v352 = vld [vmem:[#allocation3 + $0x38c] sm:$0xf]
    %v353 = vld [vmem:[#allocation3 + $0x390] sm:$0xf]
    %v354 = vld [vmem:[#allocation3 + $0x394] sm:$0xf]
    %v355 = vld [vmem:[#allocation3 + $0x398] sm:$0xf]
    %v356 = vld [vmem:[#allocation3 + $0x39c] sm:$0xf]
    %v357 = vld [vmem:[#allocation3 + $0x3a0] sm:$0xf]
    %v358 = vld [vmem:[#allocation3 + $0x3a4] sm:$0xf]
    %v359 = vld [vmem:[#allocation3 + $0x3a8] sm:$0xf]
    %v360 = vld [vmem:[#allocation3 + $0x3ac] sm:$0xf]
    %v361 = vld [vmem:[#allocation3 + $0x3b0] sm:$0xf]
    %v362 = vld [vmem:[#allocation3 + $0x3b4] sm:$0xf]
    %v363 = vld [vmem:[#allocation3 + $0x3b8] sm:$0xf]
    %v364 = vld [vmem:[#allocation3 + $0x3bc] sm:$0xf]
    %v365 = vld [vmem:[#allocation3 + $0x3c0] sm:$0xf]
    %v366 = vld [vmem:[#allocation3 + $0x3c4] sm:$0xf]
    %v367 = vld [vmem:[#allocation3 + $0x3c8] sm:$0xf]
    %v368 = vld [vmem:[#allocation3 + $0x3cc] sm:$0xf]
    %v369 = vld [vmem:[#allocation3 + $0x3d0] sm:$0xf]
    %v370 = vld [vmem:[#allocation3 + $0x3d4] sm:$0xf]
    %v371 = vld [vmem:[#allocation3 + $0x3d8] sm:$0xf]
    %v372 = vld [vmem:[#allocation3 + $0x3dc] sm:$0xf]
    %v373 = vld [vmem:[#allocation3 + $0x3e0] sm:$0xf]
    %v374 = vld [vmem:[#allocation3 + $0x3e4] sm:$0xf]
    %v375 = vld [vmem:[#allocation3 + $0x3e8] sm:$0xf]
    %v376 = vld [vmem:[#allocation3 + $0x3ec] sm:$0xf]
    %v377 = vld [vmem:[#allocation3 + $0x3f0] sm:$0xf]
    %v378 = vld [vmem:[#allocation3 + $0x3f4] sm:$0xf]
    %v379 = vld [vmem:[#allocation3 + $0x3f8] sm:$0xf]
    %v380 = vld [vmem:[#allocation3 + $0x3fc] sm:$0xf]
    %v381 = vld [vmem:[#allocation3 + $0x400] sm:$0xf]
    %v382 = vld [vmem:[#allocation3 + $0x404] sm:$0xf]
    %v383 = vld [vmem:[#allocation3 + $0x408] sm:$0xf]
    %v384 = vld [vmem:[#allocation3 + $0x40c] sm:$0xf]
    %v385 = vld [vmem:[#allocation3 + $0x410] sm:$0xf]
    %v386 = vld [vmem:[#allocation3 + $0x414] sm:$0xf]
    %v387 = vld [vmem:[#allocation3 + $0x418] sm:$0xf]
    %v388 = vld [vmem:[#allocation3 + $0x41c] sm:$0xf]
    %v389 = vld [vmem:[#allocation3 + $0x420] sm:$0xf]
    %v390 = vld [vmem:[#allocation3 + $0x424] sm:$0xf]
    %v391 = vld [vmem:[#allocation3 + $0x428] sm:$0xf]
    %v392 = vld [vmem:[#allocation3 + $0x42c] sm:$0xf]
    %v393 = vld [vmem:[#allocation3 + $0x430] sm:$0xf]
    %v394 = vld [vmem:[#allocation3 + $0x434] sm:$0xf]
    %v395 = vld [vmem:[#allocation3 + $0x438] sm:$0xf]
    %v396 = vld [vmem:[#allocation3 + $0x43c] sm:$0xf]
    %v397 = vld [vmem:[#allocation3 + $0x440] sm:$0xf]
    %v398 = vld [vmem:[#allocation3 + $0x444] sm:$0xf]
    %v399 = vld [vmem:[#allocation3 + $0x448] sm:$0xf]
    %v400 = vld [vmem:[#allocation3 + $0x44c] sm:$0xf]
    %v401 = vld [vmem:[#allocation3 + $0x450] sm:$0xf]
    %v402 = vld [vmem:[#allocation3 + $0x454] sm:$0xf]
    %v403 = vld [vmem:[#allocation3 + $0x458] sm:$0xf]
    %v404 = vld [vmem:[#allocation3 + $0x45c] sm:$0xf]
    %v405 = vld [vmem:[#allocation3 + $0x460] sm:$0xf]
    %v406 = vld [vmem:[#allocation3 + $0x464] sm:$0xf]
    %v407 = vld [vmem:[#allocation3 + $0x468] sm:$0xf]
    %v408 = vld [vmem:[#allocation3 + $0x46c] sm:$0xf]
    %v409 = vld [vmem:[#allocation3 + $0x470] sm:$0xf]
    %v410 = vld [vmem:[#allocation3 + $0x474] sm:$0xf]
    %v411 = vld [vmem:[#allocation3 + $0x478] sm:$0xf]
    %v412 = vld [vmem:[#allocation3 + $0x47c] sm:$0xf]
    %v413 = vld [vmem:[#allocation3 + $0x480] sm:$0xf]
    %v414 = vld [vmem:[#allocation3 + $0x484] sm:$0xf]
    %v415 = vld [vmem:[#allocation3 + $0x488] sm:$0xf]
    %v416 = vld [vmem:[#allocation3 + $0x48c] sm:$0xf]
    %v417 = vld [vmem:[#allocation3 + $0x490] sm:$0xf]
    %v418 = vld [vmem:[#allocation3 + $0x494] sm:$0xf]
    %v419 = vld [vmem:[#allocation3 + $0x498] sm:$0xf]
    %v420 = vld [vmem:[#allocation3 + $0x49c] sm:$0xf]
    %v421 = vld [vmem:[#allocation3 + $0x4a0] sm:$0xf]
    %v422 = vld [vmem:[#allocation3 + $0x4a4] sm:$0xf]
    %v423 = vld [vmem:[#allocation3 + $0x4a8] sm:$0xf]
    %v424 = vld [vmem:[#allocation3 + $0x4ac] sm:$0xf]
    %v425 = vld [vmem:[#allocation3 + $0x4b0] sm:$0xf]
    %v426 = vld [vmem:[#allocation3 + $0x4b4] sm:$0xf]
    %v427 = vld [vmem:[#allocation3 + $0x4b8] sm:$0xf]
    %v428 = vld [vmem:[#allocation3 + $0x4bc] sm:$0xf]
    %v429 = vld [vmem:[#allocation3 + $0x4c0] sm:$0xf]
    %v430 = vld [vmem:[#allocation3 + $0x4c4] sm:$0xf]
    %v431 = vld [vmem:[#allocation3 + $0x4c8] sm:$0xf]
    %v432 = vld [vmem:[#allocation3 + $0x4cc] sm:$0xf]
    %v433 = vld [vmem:[#allocation3 + $0x4d0] sm:$0xf]
    %v434 = vld [vmem:[#allocation3 + $0x4d4] sm:$0xf]
    %v435 = vld [vmem:[#allocation3 + $0x4d8] sm:$0xf]
    %v436 = vld [vmem:[#allocation3 + $0x4dc] sm:$0xf]
    %v437 = vld [vmem:[#allocation3 + $0x4e0] sm:$0xf]
    %v438 = vld [vmem:[#allocation3 + $0x4e4] sm:$0xf]
    %v439 = vld [vmem:[#allocation3 + $0x4e8] sm:$0xf]
    %v440 = vld [vmem:[#allocation3 + $0x4ec] sm:$0xf]
    %v441 = vld [vmem:[#allocation3 + $0x4f0] sm:$0xf]
    %v442 = vld [vmem:[#allocation3 + $0x4f4] sm:$0xf]
    %v443 = vld [vmem:[#allocation3 + $0x4f8] sm:$0xf]
    %v444 = vld [vmem:[#allocation3 + $0x4fc] sm:$0xf]
    %v445 = vld [vmem:[#allocation3 + $0x500] sm:$0xf]
    %v446 = vld [vmem:[#allocation3 + $0x504] sm:$0xf]
    %v447 = vld [vmem:[#allocation3 + $0x508] sm:$0xf]
    %v448 = vld [vmem:[#allocation3 + $0x50c] sm:$0xf]
    %v449 = vld [vmem:[#allocation3 + $0x510] sm:$0xf]
    %v450 = vld [vmem:[#allocation3 + $0x514] sm:$0xf]
    %v451 = vld [vmem:[#allocation3 + $0x518] sm:$0xf]
    %v452 = vld [vmem:[#allocation3 + $0x51c] sm:$0xf]
    %v453 = vld [vmem:[#allocation3 + $0x520] sm:$0xf]
    %v454 = vld [vmem:[#allocation3 + $0x524] sm:$0xf]
    %v455 = vld [vmem:[#allocation3 + $0x528] sm:$0xf]
    %v456 = vld [vmem:[#allocation3 + $0x52c] sm:$0xf]
    %v457 = vld [vmem:[#allocation3 + $0x530] sm:$0xf]
    %v458 = vld [vmem:[#allocation3 + $0x534] sm:$0xf]
    %v459 = vld [vmem:[#allocation3 + $0x538] sm:$0xf]
    %v460 = vld [vmem:[#allocation3 + $0x53c] sm:$0xf]
    %v461 = vld [vmem:[#allocation3 + $0x540] sm:$0xf]
    %v462 = vld [vmem:[#allocation3 + $0x544] sm:$0xf]
    %v463 = vld [vmem:[#allocation3 + $0x548] sm:$0xf]
    %v464 = vld [vmem:[#allocation3 + $0x54c] sm:$0xf]
    %v465 = vld [vmem:[#allocation3 + $0x550] sm:$0xf]
    %v466 = vld [vmem:[#allocation3 + $0x554] sm:$0xf]
    %v467 = vld [vmem:[#allocation3 + $0x558] sm:$0xf]
    %v468 = vld [vmem:[#allocation3 + $0x55c] sm:$0xf]
    %v469 = vld [vmem:[#allocation3 + $0x560] sm:$0xf]
    %v470 = vld [vmem:[#allocation3 + $0x564] sm:$0xf]
    %v471 = vld [vmem:[#allocation3 + $0x568] sm:$0xf]
    %v472 = vld [vmem:[#allocation3 + $0x56c] sm:$0xf]
    %v473 = vld [vmem:[#allocation3 + $0x570] sm:$0xf]
    %v474 = vld [vmem:[#allocation3 + $0x574] sm:$0xf]
    %v475 = vld [vmem:[#allocation3 + $0x578] sm:$0xf]
    %v476 = vld [vmem:[#allocation3 + $0x57c] sm:$0xf]
    %v477 = vld [vmem:[#allocation3 + $0x580] sm:$0xf]
    %v478 = vld [vmem:[#allocation3 + $0x584] sm:$0xf]
    %v479 = vld [vmem:[#allocation3 + $0x588] sm:$0xf]
    %v480 = vld [vmem:[#allocation3 + $0x58c] sm:$0xf]
    %v481 = vld [vmem:[#allocation3 + $0x590] sm:$0xf]
    %v482 = vld [vmem:[#allocation3 + $0x594] sm:$0xf]
    %v483 = vld [vmem:[#allocation3 + $0x598] sm:$0xf]
    %v484 = vld [vmem:[#allocation3 + $0x59c] sm:$0xf]
    %v485 = vld [vmem:[#allocation3 + $0x5a0] sm:$0xf]
    %v486 = vld [vmem:[#allocation3 + $0x5a4] sm:$0xf]
    %v487 = vld [vmem:[#allocation3 + $0x5a8] sm:$0xf]
    %v488 = vld [vmem:[#allocation3 + $0x5ac] sm:$0xf]
    %v489 = vld [vmem:[#allocation3 + $0x5b0] sm:$0xf]
    %v490 = vld [vmem:[#allocation3 + $0x5b4] sm:$0xf]
    %v491 = vld [vmem:[#allocation3 + $0x5b8] sm:$0xf]
    %v492 = vld [vmem:[#allocation3 + $0x5bc] sm:$0xf]
    %v493 = vld [vmem:[#allocation3 + $0x5c0] sm:$0xf]
    %v494 = vld [vmem:[#allocation3 + $0x5c4] sm:$0xf]
    %v495 = vld [vmem:[#allocation3 + $0x5c8] sm:$0xf]
    %v496 = vld [vmem:[#allocation3 + $0x5cc] sm:$0xf]
    %v497 = vld [vmem:[#allocation3 + $0x5d0] sm:$0xf]
    %v498 = vld [vmem:[#allocation3 + $0x5d4] sm:$0xf]
    %v499 = vld [vmem:[#allocation3 + $0x5d8] sm:$0xf]
    %v500 = vld [vmem:[#allocation3 + $0x5dc] sm:$0xf]
    %v501 = vld [vmem:[#allocation3 + $0x5e0] sm:$0xf]
    %v502 = vld [vmem:[#allocation3 + $0x5e4] sm:$0xf]
    %v503 = vld [vmem:[#allocation3 + $0x5e8] sm:$0xf]
    %v504 = vld [vmem:[#allocation3 + $0x5ec] sm:$0xf]
    %v505 = vld [vmem:[#allocation3 + $0x5f0] sm:$0xf]
    %v506 = vld [vmem:[#allocation3 + $0x5f4] sm:$0xf]
    %v507 = vld [vmem:[#allocation3 + $0x5f8] sm:$0xf]
    %v508 = vld [vmem:[#allocation3 + $0x5fc] sm:$0xf]
    %v509 = vld [vmem:[#allocation3 + $0x600] sm:$0xf]
    %v510 = vld [vmem:[#allocation3 + $0x604] sm:$0xf]
    %v511 = vld [vmem:[#allocation3 + $0x608] sm:$0xf]
    %v512 = vld [vmem:[#allocation3 + $0x60c] sm:$0xf]
    %v513 = vld [vmem:[#allocation3 + $0x610] sm:$0xf]
    %v514 = vld [vmem:[#allocation3 + $0x614] sm:$0xf]
    %v515 = vld [vmem:[#allocation3 + $0x618] sm:$0xf]
    %v516 = vld [vmem:[#allocation3 + $0x61c] sm:$0xf]
    %v517 = vld [vmem:[#allocation3 + $0x620] sm:$0xf]
    %v518 = vld [vmem:[#allocation3 + $0x624] sm:$0xf]
    %v519 = vld [vmem:[#allocation3 + $0x628] sm:$0xf]
    %v520 = vld [vmem:[#allocation3 + $0x62c] sm:$0xf]
    %v521 = vld [vmem:[#allocation3 + $0x630] sm:$0xf]
    %v522 = vld [vmem:[#allocation3 + $0x634] sm:$0xf]
    %v523 = vld [vmem:[#allocation3 + $0x638] sm:$0xf]
    %v524 = vld [vmem:[#allocation3 + $0x63c] sm:$0xf]
    %v525 = vld [vmem:[#allocation3 + $0x640] sm:$0xf]
    %v526 = vld [vmem:[#allocation3 + $0x644] sm:$0xf]
    %v527 = vld [vmem:[#allocation3 + $0x648] sm:$0xf]
    %v528 = vld [vmem:[#allocation3 + $0x64c] sm:$0xf]
    %v529 = vld [vmem:[#allocation3 + $0x650] sm:$0xf]
    %v530 = vld [vmem:[#allocation3 + $0x654] sm:$0xf]
    %v531 = vld [vmem:[#allocation3 + $0x658] sm:$0xf]
    %v532 = vld [vmem:[#allocation3 + $0x65c] sm:$0xf]
    %v533 = vld [vmem:[#allocation3 + $0x660] sm:$0xf]
    %v534 = vld [vmem:[#allocation3 + $0x664] sm:$0xf]
    %v535 = vld [vmem:[#allocation3 + $0x668] sm:$0xf]
    %v536 = vld [vmem:[#allocation3 + $0x66c] sm:$0xf]
    %v537 = vld [vmem:[#allocation3 + $0x670] sm:$0xf]
    %v538 = vld [vmem:[#allocation3 + $0x674] sm:$0xf]
    %v539 = vld [vmem:[#allocation3 + $0x678] sm:$0xf]
    %v540 = vld [vmem:[#allocation3 + $0x67c] sm:$0xf]
    %v541 = vld [vmem:[#allocation3 + $0x680] sm:$0xf]
    %v542 = vld [vmem:[#allocation3 + $0x684] sm:$0xf]
    %v543 = vld [vmem:[#allocation3 + $0x688] sm:$0xf]
    %v544 = vld [vmem:[#allocation3 + $0x68c] sm:$0xf]
    %v545 = vld [vmem:[#allocation3 + $0x690] sm:$0xf]
    %v546 = vld [vmem:[#allocation3 + $0x694] sm:$0xf]
    %v547 = vld [vmem:[#allocation3 + $0x698] sm:$0xf]
    %v548 = vld [vmem:[#allocation3 + $0x69c] sm:$0xf]
    %v549 = vld [vmem:[#allocation3 + $0x6a0] sm:$0xf]
    %v550 = vld [vmem:[#allocation3 + $0x6a4] sm:$0xf]
    %v551 = vld [vmem:[#allocation3 + $0x6a8] sm:$0xf]
    %v552 = vld [vmem:[#allocation3 + $0x6ac] sm:$0xf]
    %v553 = vld [vmem:[#allocation3 + $0x6b0] sm:$0xf]
    %v554 = vld [vmem:[#allocation3 + $0x6b4] sm:$0xf]
    %v555 = vld [vmem:[#allocation3 + $0x6b8] sm:$0xf]
    %v556 = vld [vmem:[#allocation3 + $0x6bc] sm:$0xf]
    %v557 = vld [vmem:[#allocation3 + $0x6c0] sm:$0xf]
    %v558 = vld [vmem:[#allocation3 + $0x6c4] sm:$0xf]
    %v559 = vld [vmem:[#allocation3 + $0x6c8] sm:$0xf]
    %v560 = vld [vmem:[#allocation3 + $0x6cc] sm:$0xf]
    %v561 = vld [vmem:[#allocation3 + $0x6d0] sm:$0xf]
    %v562 = vld [vmem:[#allocation3 + $0x6d4] sm:$0xf]
    %v563 = vld [vmem:[#allocation3 + $0x6d8] sm:$0xf]
    %v564 = vld [vmem:[#allocation3 + $0x6dc] sm:$0xf]
    %v565 = vld [vmem:[#allocation3 + $0x6e0] sm:$0xf]
    %v566 = vld [vmem:[#allocation3 + $0x6e4] sm:$0xf]
    %v567 = vld [vmem:[#allocation3 + $0x6e8] sm:$0xf]
    %v568 = vld [vmem:[#allocation3 + $0x6ec] sm:$0xf]
    %v569 = vld [vmem:[#allocation3 + $0x6f0] sm:$0xf]
    %v570 = vld [vmem:[#allocation3 + $0x6f4] sm:$0xf]
    %v571 = vld [vmem:[#allocation3 + $0x6f8] sm:$0xf]
    %v572 = vld [vmem:[#allocation3 + $0x6fc] sm:$0xf]
    %v573 = vld [vmem:[#allocation3 + $0x700] sm:$0xf]
    %v574 = vld [vmem:[#allocation3 + $0x704] sm:$0xf]
    %v575 = vld [vmem:[#allocation3 + $0x708] sm:$0xf]
    %v576 = vld [vmem:[#allocation3 + $0x70c] sm:$0xf]
    %v577 = vld [vmem:[#allocation3 + $0x710] sm:$0xf]
    %v578 = vld [vmem:[#allocation3 + $0x714] sm:$0xf]
    %v579 = vld [vmem:[#allocation3 + $0x718] sm:$0xf]
    %v580 = vld [vmem:[#allocation3 + $0x71c] sm:$0xf]
    %v581 = vld [vmem:[#allocation3 + $0x720] sm:$0xf]
    %v582 = vld [vmem:[#allocation3 + $0x724] sm:$0xf]
    %v583 = vld [vmem:[#allocation3 + $0x728] sm:$0xf]
    %v584 = vld [vmem:[#allocation3 + $0x72c] sm:$0xf]
    %v585 = vld [vmem:[#allocation3 + $0x730] sm:$0xf]
    %v586 = vld [vmem:[#allocation3 + $0x734] sm:$0xf]
    %v587 = vld [vmem:[#allocation3 + $0x738] sm:$0xf]
    %v588 = vld [vmem:[#allocation3 + $0x73c] sm:$0xf]
    %v589 = vld [vmem:[#allocation3 + $0x740] sm:$0xf]
    %v590 = vld [vmem:[#allocation3 + $0x744] sm:$0xf]
    %v591 = vld [vmem:[#allocation3 + $0x748] sm:$0xf]
    %v592 = vld [vmem:[#allocation3 + $0x74c] sm:$0xf]
    %v593 = vld [vmem:[#allocation3 + $0x750] sm:$0xf]
    %v594 = vld [vmem:[#allocation3 + $0x754] sm:$0xf]
    %v595 = vld [vmem:[#allocation3 + $0x758] sm:$0xf]
    %v596 = vld [vmem:[#allocation3 + $0x75c] sm:$0xf]
    %v597 = vld [vmem:[#allocation3 + $0x760] sm:$0xf]
    %v598 = vld [vmem:[#allocation3 + $0x764] sm:$0xf]
    %v599 = vld [vmem:[#allocation3 + $0x768] sm:$0xf]
    %v600 = vld [vmem:[#allocation3 + $0x76c] sm:$0xf]
    %v601 = vld [vmem:[#allocation3 + $0x770] sm:$0xf]
    %v602 = vld [vmem:[#allocation3 + $0x774] sm:$0xf]
    %v603 = vld [vmem:[#allocation3 + $0x778] sm:$0xf]
    %v604 = vld [vmem:[#allocation3 + $0x77c] sm:$0xf]
    %v605 = vld [vmem:[#allocation3 + $0x780] sm:$0xf]
    %v606 = vld [vmem:[#allocation3 + $0x784] sm:$0xf]
    %v607 = vld [vmem:[#allocation3 + $0x788] sm:$0xf]
    %v608 = vld [vmem:[#allocation3 + $0x78c] sm:$0xf]
    %v609 = vld [vmem:[#allocation3 + $0x790] sm:$0xf]
    %v610 = vld [vmem:[#allocation3 + $0x794] sm:$0xf]
    %v611 = vld [vmem:[#allocation3 + $0x798] sm:$0xf]
    %v612 = vld [vmem:[#allocation3 + $0x79c] sm:$0xf]
    %v613 = vld [vmem:[#allocation3 + $0x7a0] sm:$0xf]
    %v614 = vld [vmem:[#allocation3 + $0x7a4] sm:$0xf]
    %v615 = vld [vmem:[#allocation3 + $0x7a8] sm:$0xf]
    %v616 = vld [vmem:[#allocation3 + $0x7ac] sm:$0xf]
    %v617 = vld [vmem:[#allocation3 + $0x7b0] sm:$0xf]
    %v618 = vld [vmem:[#allocation3 + $0x7b4] sm:$0xf]
    %v619 = vld [vmem:[#allocation3 + $0x7b8] sm:$0xf]
    %v620 = vld [vmem:[#allocation3 + $0x7bc] sm:$0xf]
    %v621 = vld [vmem:[#allocation3 + $0x7c0] sm:$0xf]
    %v622 = vld [vmem:[#allocation3 + $0x7c4] sm:$0xf]
    %v623 = vld [vmem:[#allocation3 + $0x7c8] sm:$0xf]
    %v624 = vld [vmem:[#allocation3 + $0x7cc] sm:$0xf]
    %v625 = vld [vmem:[#allocation3 + $0x7d0] sm:$0xf]
    %v626 = vld [vmem:[#allocation3 + $0x7d4] sm:$0xf]
    %v627 = vld [vmem:[#allocation3 + $0x7d8] sm:$0xf]
    %v628 = vld [vmem:[#allocation3 + $0x7dc] sm:$0xf]
    %v629 = vld [vmem:[#allocation3 + $0x7e0] sm:$0xf]
    %v630 = vld [vmem:[#allocation3 + $0x7e4] sm:$0xf]
    %v631 = vld [vmem:[#allocation3 + $0x7e8] sm:$0xf]
    %v632 = vld [vmem:[#allocation3 + $0x7ec] sm:$0xf]
    %v633 = vld [vmem:[#allocation3 + $0x7f0] sm:$0xf]
    %v634 = vld [vmem:[#allocation3 + $0x7f4] sm:$0xf]
    %v635 = vld [vmem:[#allocation3 + $0x7f8] sm:$0xf]
    %v636 = vld [vmem:[#allocation3 + $0x7fc] sm:$0xf]
    %v637 = vld [vmem:[#allocation3 + $0x800] sm:$0xf]
    %v638 = vld [vmem:[#allocation3 + $0x804] sm:$0xf]
    %v639 = vld [vmem:[#allocation3 + $0x808] sm:$0xf]
    %v640 = vld [vmem:[#allocation3 + $0x80c] sm:$0xf]
    %v641 = vld [vmem:[#allocation3 + $0x810] sm:$0xf]
    %v642 = vld [vmem:[#allocation3 + $0x814] sm:$0xf]
    %v643 = vld [vmem:[#allocation3 + $0x818] sm:$0xf]
    %v644 = vld [vmem:[#allocation3 + $0x81c] sm:$0xf]
    %v645 = vld [vmem:[#allocation3 + $0x820] sm:$0xf]
    %v646 = vld [vmem:[#allocation3 + $0x824] sm:$0xf]
    %v647 = vld [vmem:[#allocation3 + $0x828] sm:$0xf]
    %v648 = vld [vmem:[#allocation3 + $0x82c] sm:$0xf]
    %v649 = vld [vmem:[#allocation3 + $0x830] sm:$0xf]
    %v650 = vld [vmem:[#allocation3 + $0x834] sm:$0xf]
    %v651 = vld [vmem:[#allocation3 + $0x838] sm:$0xf]
    %v652 = vld [vmem:[#allocation3 + $0x83c] sm:$0xf]
    %v653 = vld [vmem:[#allocation3 + $0x840] sm:$0xf]
    %v654 = vld [vmem:[#allocation3 + $0x844] sm:$0xf]
    %v655 = vld [vmem:[#allocation3 + $0x848] sm:$0xf]
    %v656 = vld [vmem:[#allocation3 + $0x84c] sm:$0xf]
    %v657 = vld [vmem:[#allocation3 + $0x850] sm:$0xf]
    %v658 = vld [vmem:[#allocation3 + $0x854] sm:$0xf]
    %v659 = vld [vmem:[#allocation3 + $0x858] sm:$0xf]
    %v660 = vld [vmem:[#allocation3 + $0x85c] sm:$0xf]
    %v661 = vld [vmem:[#allocation3 + $0x860] sm:$0xf]
    %v662 = vld [vmem:[#allocation3 + $0x864] sm:$0xf]
    %v663 = vld [vmem:[#allocation3 + $0x868] sm:$0xf]
    %v664 = vld [vmem:[#allocation3 + $0x86c] sm:$0xf]
    %v665 = vld [vmem:[#allocation3 + $0x870] sm:$0xf]
    %v666 = vld [vmem:[#allocation3 + $0x874] sm:$0xf]
    %v667 = vld [vmem:[#allocation3 + $0x878] sm:$0xf]
    %v668 = vld [vmem:[#allocation3 + $0x87c] sm:$0xf]
    %v669 = vld [vmem:[#allocation3 + $0x880] sm:$0xf]
    %v670 = vld [vmem:[#allocation3 + $0x884] sm:$0xf]
    %v671 = vld [vmem:[#allocation3 + $0x888] sm:$0xf]
    %v672 = vld [vmem:[#allocation3 + $0x88c] sm:$0xf]
    %v673 = vld [vmem:[#allocation3 + $0x890] sm:$0xf]
    %v674 = vld [vmem:[#allocation3 + $0x894] sm:$0xf]
    %v675 = vld [vmem:[#allocation3 + $0x898] sm:$0xf]
    %v676 = vld [vmem:[#allocation3 + $0x89c] sm:$0xf]
    %v677 = vld [vmem:[#allocation3 + $0x8a0] sm:$0xf]
    %v678 = vld [vmem:[#allocation3 + $0x8a4] sm:$0xf]
    %v679 = vld [vmem:[#allocation3 + $0x8a8] sm:$0xf]
    %v680 = vld [vmem:[#allocation3 + $0x8ac] sm:$0xf]
    %v681 = vld [vmem:[#allocation3 + $0x8b0] sm:$0xf]
    %v682 = vld [vmem:[#allocation3 + $0x8b4] sm:$0xf]
    %v683 = vld [vmem:[#allocation3 + $0x8b8] sm:$0xf]
    %v684 = vld [vmem:[#allocation3 + $0x8bc] sm:$0xf]
    %v685 = vld [vmem:[#allocation3 + $0x8c0] sm:$0xf]
    %v686 = vld [vmem:[#allocation3 + $0x8c4] sm:$0xf]
    %v687 = vld [vmem:[#allocation3 + $0x8c8] sm:$0xf]
    %v688 = vld [vmem:[#allocation3 + $0x8cc] sm:$0xf]
    %v689 = vld [vmem:[#allocation3 + $0x8d0] sm:$0xf]
    %v690 = vld [vmem:[#allocation3 + $0x8d4] sm:$0xf]
    %v691 = vld [vmem:[#allocation3 + $0x8d8] sm:$0xf]
    %v692 = vld [vmem:[#allocation3 + $0x8dc] sm:$0xf]
    %v693 = vld [vmem:[#allocation3 + $0x8e0] sm:$0xf]
    %v694 = vld [vmem:[#allocation3 + $0x8e4] sm:$0xf]
    %v695 = vld [vmem:[#allocation3 + $0x8e8] sm:$0xf]
    %v696 = vld [vmem:[#allocation3 + $0x8ec] sm:$0xf]
    %v697 = vld [vmem:[#allocation3 + $0x8f0] sm:$0xf]
    %v698 = vld [vmem:[#allocation3 + $0x8f4] sm:$0xf]
    %v699 = vld [vmem:[#allocation3 + $0x8f8] sm:$0xf]
    %v700 = vld [vmem:[#allocation3 + $0x8fc] sm:$0xf]
    %v701 = vld [vmem:[#allocation3 + $0x900] sm:$0xf]
    %v702 = vld [vmem:[#allocation3 + $0x904] sm:$0xf]
    %v703 = vld [vmem:[#allocation3 + $0x908] sm:$0xf]
    %v704 = vld [vmem:[#allocation3 + $0x90c] sm:$0xf]
    %v705 = vld [vmem:[#allocation3 + $0x910] sm:$0xf]
    %v706 = vld [vmem:[#allocation3 + $0x914] sm:$0xf]
    %v707 = vld [vmem:[#allocation3 + $0x918] sm:$0xf]
    %v708 = vld [vmem:[#allocation3 + $0x91c] sm:$0xf]
    %v709 = vld [vmem:[#allocation3 + $0x920] sm:$0xf]
    %v710 = vld [vmem:[#allocation3 + $0x924] sm:$0xf]
    %v711 = vld [vmem:[#allocation3 + $0x928] sm:$0xf]
    %v712 = vld [vmem:[#allocation3 + $0x92c] sm:$0xf]
    %v713 = vld [vmem:[#allocation3 + $0x930] sm:$0xf]
    %v714 = vld [vmem:[#allocation3 + $0x934] sm:$0xf]
    %v715 = vld [vmem:[#allocation3 + $0x938] sm:$0xf]
    %v716 = vld [vmem:[#allocation3 + $0x93c] sm:$0xf]
    %v717 = vld [vmem:[#allocation3 + $0x940] sm:$0xf]
    %v718 = vld [vmem:[#allocation3 + $0x944] sm:$0xf]
    %v719 = vld [vmem:[#allocation3 + $0x948] sm:$0xf]
    %v720 = vld [vmem:[#allocation3 + $0x94c] sm:$0xf]
    %v721 = vld [vmem:[#allocation3 + $0x950] sm:$0xf]
    %v722 = vld [vmem:[#allocation3 + $0x954] sm:$0xf]
    %v723 = vld [vmem:[#allocation3 + $0x958] sm:$0xf]
    %v724 = vld [vmem:[#allocation3 + $0x95c] sm:$0xf]
    %v725 = vld [vmem:[#allocation3 + $0x960] sm:$0xf]
    %v726 = vld [vmem:[#allocation3 + $0x964] sm:$0xf]
    %v727 = vld [vmem:[#allocation3 + $0x968] sm:$0xf]
    %v728 = vld [vmem:[#allocation3 + $0x96c] sm:$0xf]
    %v729 = vld [vmem:[#allocation3 + $0x970] sm:$0xf]
    %v730 = vld [vmem:[#allocation3 + $0x974] sm:$0xf]
    %v731 = vld [vmem:[#allocation3 + $0x978] sm:$0xf]
    %v732 = vld [vmem:[#allocation3 + $0x97c] sm:$0xf]
    %v733 = vld [vmem:[#allocation3 + $0x980] sm:$0xf]
    %v734 = vld [vmem:[#allocation3 + $0x984] sm:$0xf]
    %v735 = vld [vmem:[#allocation3 + $0x988] sm:$0xf]
    %v736 = vld [vmem:[#allocation3 + $0x98c] sm:$0xf]
    %v737 = vld [vmem:[#allocation3 + $0x990] sm:$0xf]
    %v738 = vld [vmem:[#allocation3 + $0x994] sm:$0xf]
    %v739 = vld [vmem:[#allocation3 + $0x998] sm:$0xf]
    %v740 = vld [vmem:[#allocation3 + $0x99c] sm:$0xf]
    %v741 = vld [vmem:[#allocation3 + $0x9a0] sm:$0xf]
    %v742 = vld [vmem:[#allocation3 + $0x9a4] sm:$0xf]
    %v743 = vld [vmem:[#allocation3 + $0x9a8] sm:$0xf]
    %v744 = vld [vmem:[#allocation3 + $0x9ac] sm:$0xf]
    %v745 = vld [vmem:[#allocation3 + $0x9b0] sm:$0xf]
    %v746 = vld [vmem:[#allocation3 + $0x9b4] sm:$0xf]
    %v747 = vld [vmem:[#allocation3 + $0x9b8] sm:$0xf]
    %v748 = vld [vmem:[#allocation3 + $0x9bc] sm:$0xf]
    %v749 = vld [vmem:[#allocation3 + $0x9c0] sm:$0xf]
    %v750 = vld [vmem:[#allocation3 + $0x9c4] sm:$0xf]
    %v751 = vld [vmem:[#allocation3 + $0x9c8] sm:$0xf]
    %v752 = vld [vmem:[#allocation3 + $0x9cc] sm:$0xf]
    %v753 = vld [vmem:[#allocation3 + $0x9d0] sm:$0xf]
    %v754 = vld [vmem:[#allocation3 + $0x9d4] sm:$0xf]
    %v755 = vld [vmem:[#allocation3 + $0x9d8] sm:$0xf]
    %v756 = vld [vmem:[#allocation3 + $0x9dc] sm:$0xf]
    %v757 = vld [vmem:[#allocation3 + $0x9e0] sm:$0xf]
    %v758 = vld [vmem:[#allocation3 + $0x9e4] sm:$0xf]
    %v759 = vld [vmem:[#allocation3 + $0x9e8] sm:$0xf]
    %v760 = vld [vmem:[#allocation3 + $0x9ec] sm:$0xf]
    %v761 = vld [vmem:[#allocation3 + $0x9f0] sm:$0xf]
    %v762 = vld [vmem:[#allocation3 + $0x9f4] sm:$0xf]
    %v763 = vld [vmem:[#allocation3 + $0x9f8] sm:$0xf]
    %v764 = vld [vmem:[#allocation3 + $0x9fc] sm:$0xf]
    %v765 = vld [vmem:[#allocation3 + $0xa00] sm:$0xf]
    %v766 = vld [vmem:[#allocation3 + $0xa04] sm:$0xf]
    %v767 = vld [vmem:[#allocation3 + $0xa08] sm:$0xf]
    %v768 = vld [vmem:[#allocation3 + $0xa0c] sm:$0xf]
    %v769 = vld [vmem:[#allocation3 + $0xa10] sm:$0xf]
    %v770 = vld [vmem:[#allocation3 + $0xa14] sm:$0xf]
    %v771 = vld [vmem:[#allocation3 + $0xa18] sm:$0xf]
    %v772 = vld [vmem:[#allocation3 + $0xa1c] sm:$0xf]
    %v773 = vld [vmem:[#allocation3 + $0xa20] sm:$0xf]
    %v774 = vld [vmem:[#allocation3 + $0xa24] sm:$0xf]
    %v775 = vld [vmem:[#allocation3 + $0xa28] sm:$0xf]
    %v776 = vld [vmem:[#allocation3 + $0xa2c] sm:$0xf]
    %v777 = vld [vmem:[#allocation3 + $0xa30] sm:$0xf]
    %v778 = vld [vmem:[#allocation3 + $0xa34] sm:$0xf]
    %v779 = vld [vmem:[#allocation3 + $0xa38] sm:$0xf]
    %v780 = vld [vmem:[#allocation3 + $0xa3c] sm:$0xf]
    %v781 = vld [vmem:[#allocation3 + $0xa40] sm:$0xf]
    %v782 = vld [vmem:[#allocation3 + $0xa44] sm:$0xf]
    %v783 = vld [vmem:[#allocation3 + $0xa48] sm:$0xf]
    %v784 = vld [vmem:[#allocation3 + $0xa4c] sm:$0xf]
    %v785 = vld [vmem:[#allocation3 + $0xa50] sm:$0xf]
    %v786 = vld [vmem:[#allocation3 + $0xa54] sm:$0xf]
    %v787 = vld [vmem:[#allocation3 + $0xa58] sm:$0xf]
    %v788 = vld [vmem:[#allocation3 + $0xa5c] sm:$0xf]
    %v789 = vld [vmem:[#allocation3 + $0xa60] sm:$0xf]
    %v790 = vld [vmem:[#allocation3 + $0xa64] sm:$0xf]
    %v791 = vld [vmem:[#allocation3 + $0xa68] sm:$0xf]
    %v792 = vld [vmem:[#allocation3 + $0xa6c] sm:$0xf]
    %v793 = vld [vmem:[#allocation3 + $0xa70] sm:$0xf]
    %v794 = vld [vmem:[#allocation3 + $0xa74] sm:$0xf]
    %v795 = vld [vmem:[#allocation3 + $0xa78] sm:$0xf]
    %v796 = vld [vmem:[#allocation3 + $0xa7c] sm:$0xf]
    %v797 = vld [vmem:[#allocation3 + $0xa80] sm:$0xf]
    %v798 = vld [vmem:[#allocation3 + $0xa84] sm:$0xf]
    %v799 = vld [vmem:[#allocation3 + $0xa88] sm:$0xf]
    %v800 = vld [vmem:[#allocation3 + $0xa8c] sm:$0xf]
    %v801 = vld [vmem:[#allocation3 + $0xa90] sm:$0xf]
    %v802 = vld [vmem:[#allocation3 + $0xa94] sm:$0xf]
    %v803 = vld [vmem:[#allocation3 + $0xa98] sm:$0xf]
    %v804 = vld [vmem:[#allocation3 + $0xa9c] sm:$0xf]
    %v805 = vld [vmem:[#allocation3 + $0xaa0] sm:$0xf]
    %v806 = vld [vmem:[#allocation3 + $0xaa4] sm:$0xf]
    %v807 = vld [vmem:[#allocation3 + $0xaa8] sm:$0xf]
    %v808 = vld [vmem:[#allocation3 + $0xaac] sm:$0xf]
    %v809 = vld [vmem:[#allocation3 + $0xab0] sm:$0xf]
    %v810 = vld [vmem:[#allocation3 + $0xab4] sm:$0xf]
    %v811 = vld [vmem:[#allocation3 + $0xab8] sm:$0xf]
    %v812 = vld [vmem:[#allocation3 + $0xabc] sm:$0xf]
    %v813 = vld [vmem:[#allocation3 + $0xac0] sm:$0xf]
    %v814 = vld [vmem:[#allocation3 + $0xac4] sm:$0xf]
    %v815 = vld [vmem:[#allocation3 + $0xac8] sm:$0xf]
    %v816 = vld [vmem:[#allocation3 + $0xacc] sm:$0xf]
    %v817 = vld [vmem:[#allocation3 + $0xad0] sm:$0xf]
    %v818 = vld [vmem:[#allocation3 + $0xad4] sm:$0xf]
    %v819 = vld [vmem:[#allocation3 + $0xad8] sm:$0xf]
    %v820 = vld [vmem:[#allocation3 + $0xadc] sm:$0xf]
    %v821 = vld [vmem:[#allocation3 + $0xae0] sm:$0xf]
    %v822 = vld [vmem:[#allocation3 + $0xae4] sm:$0xf]
    %v823 = vld [vmem:[#allocation3 + $0xae8] sm:$0xf]
    %v824 = vld [vmem:[#allocation3 + $0xaec] sm:$0xf]
    %v825 = vld [vmem:[#allocation3 + $0xaf0] sm:$0xf]
    %v826 = vld [vmem:[#allocation3 + $0xaf4] sm:$0xf]
    %v827 = vld [vmem:[#allocation3 + $0xaf8] sm:$0xf]
    %v828 = vld [vmem:[#allocation3 + $0xafc] sm:$0xf]
    %v829 = vld [vmem:[#allocation3 + $0xb00] sm:$0xf]
    %v830 = vld [vmem:[#allocation3 + $0xb04] sm:$0xf]
    %v831 = vld [vmem:[#allocation3 + $0xb08] sm:$0xf]
    %v832 = vld [vmem:[#allocation3 + $0xb0c] sm:$0xf]
    %v833 = vld [vmem:[#allocation3 + $0xb10] sm:$0xf]
    %v834 = vld [vmem:[#allocation3 + $0xb14] sm:$0xf]
    %v835 = vld [vmem:[#allocation3 + $0xb18] sm:$0xf]
    %v836 = vld [vmem:[#allocation3 + $0xb1c] sm:$0xf]
    %v837 = vld [vmem:[#allocation3 + $0xb20] sm:$0xf]
    %v838 = vld [vmem:[#allocation3 + $0xb24] sm:$0xf]
    %v839 = vld [vmem:[#allocation3 + $0xb28] sm:$0xf]
    %v840 = vld [vmem:[#allocation3 + $0xb2c] sm:$0xf]
    %v841 = vld [vmem:[#allocation3 + $0xb30] sm:$0xf]
    %v842 = vld [vmem:[#allocation3 + $0xb34] sm:$0xf]
    %v843 = vld [vmem:[#allocation3 + $0xb38] sm:$0xf]
    %v844 = vld [vmem:[#allocation3 + $0xb3c] sm:$0xf]
    %v845 = vld [vmem:[#allocation3 + $0xb40] sm:$0xf]
    %v846 = vld [vmem:[#allocation3 + $0xb44] sm:$0xf]
    %v847 = vld [vmem:[#allocation3 + $0xb48] sm:$0xf]
    %v848 = vld [vmem:[#allocation3 + $0xb4c] sm:$0xf]
    %v849 = vld [vmem:[#allocation3 + $0xb50] sm:$0xf]
    %v850 = vld [vmem:[#allocation3 + $0xb54] sm:$0xf]
    %v851 = vld [vmem:[#allocation3 + $0xb58] sm:$0xf]
    %v852 = vld [vmem:[#allocation3 + $0xb5c] sm:$0xf]
    %v853 = vld [vmem:[#allocation3 + $0xb60] sm:$0xf]
    %v854 = vld [vmem:[#allocation3 + $0xb64] sm:$0xf]
    %v855 = vld [vmem:[#allocation3 + $0xb68] sm:$0xf]
    %v856 = vld [vmem:[#allocation3 + $0xb6c] sm:$0xf]
    %v857 = vld [vmem:[#allocation3 + $0xb70] sm:$0xf]
    %v858 = vld [vmem:[#allocation3 + $0xb74] sm:$0xf]
    %v859 = vld [vmem:[#allocation3 + $0xb78] sm:$0xf]
    %v860 = vld [vmem:[#allocation3 + $0xb7c] sm:$0xf]
    %v861 = vld [vmem:[#allocation3 + $0xb80] sm:$0xf]
    %v862 = vld [vmem:[#allocation3 + $0xb84] sm:$0xf]
    %v863 = vld [vmem:[#allocation3 + $0xb88] sm:$0xf]
    %v864 = vld [vmem:[#allocation3 + $0xb8c] sm:$0xf]
    %v865 = vld [vmem:[#allocation3 + $0xb90] sm:$0xf]
    %v866 = vld [vmem:[#allocation3 + $0xb94] sm:$0xf]
    %v867 = vld [vmem:[#allocation3 + $0xb98] sm:$0xf]
    %v868 = vld [vmem:[#allocation3 + $0xb9c] sm:$0xf]
    %v869 = vld [vmem:[#allocation3 + $0xba0] sm:$0xf]
    %v870 = vld [vmem:[#allocation3 + $0xba4] sm:$0xf]
    %v871 = vld [vmem:[#allocation3 + $0xba8] sm:$0xf]
    %v872 = vld [vmem:[#allocation3 + $0xbac] sm:$0xf]
    %v873 = vld [vmem:[#allocation3 + $0xbb0] sm:$0xf]
    %v874 = vld [vmem:[#allocation3 + $0xbb4] sm:$0xf]
    %v875 = vld [vmem:[#allocation3 + $0xbb8] sm:$0xf]
    %v876 = vld [vmem:[#allocation3 + $0xbbc] sm:$0xf]
    %v877 = vld [vmem:[#allocation3 + $0xbc0] sm:$0xf]
    %v878 = vld [vmem:[#allocation3 + $0xbc4] sm:$0xf]
    %v879 = vld [vmem:[#allocation3 + $0xbc8] sm:$0xf]
    %v880 = vld [vmem:[#allocation3 + $0xbcc] sm:$0xf]
    %v881 = vld [vmem:[#allocation3 + $0xbd0] sm:$0xf]
    %v882 = vld [vmem:[#allocation3 + $0xbd4] sm:$0xf]
    %v883 = vld [vmem:[#allocation3 + $0xbd8] sm:$0xf]
    %v884 = vld [vmem:[#allocation3 + $0xbdc] sm:$0xf]
    %v885 = vld [vmem:[#allocation3 + $0xbe0] sm:$0xf]
    %v886 = vld [vmem:[#allocation3 + $0xbe4] sm:$0xf]
    %v887 = vld [vmem:[#allocation3 + $0xbe8] sm:$0xf]
    %v888 = vld [vmem:[#allocation3 + $0xbec] sm:$0xf]
    %v889 = vld [vmem:[#allocation3 + $0xbf0] sm:$0xf]
    %v890 = vld [vmem:[#allocation3 + $0xbf4] sm:$0xf]
    %v891 = vld [vmem:[#allocation3 + $0xbf8] sm:$0xf]
    %v892 = vld [vmem:[#allocation3 + $0xbfc] sm:$0xf]
    %v893 = vld [vmem:[#allocation3 + $0xc00] sm:$0xf]
    %v894 = vld [vmem:[#allocation3 + $0xc04] sm:$0xf]
    %v895 = vld [vmem:[#allocation3 + $0xc08] sm:$0xf]
    %v896 = vld [vmem:[#allocation3 + $0xc0c] sm:$0xf]
    %v897 = vld [vmem:[#allocation3 + $0xc10] sm:$0xf]
    %v898 = vld [vmem:[#allocation3 + $0xc14] sm:$0xf]
    %v899 = vld [vmem:[#allocation3 + $0xc18] sm:$0xf]
    %v900 = vld [vmem:[#allocation3 + $0xc1c] sm:$0xf]
    %v901 = vld [vmem:[#allocation3 + $0xc20] sm:$0xf]
    %v902 = vld [vmem:[#allocation3 + $0xc24] sm:$0xf]
    %v903 = vld [vmem:[#allocation3 + $0xc28] sm:$0xf]
    %v904 = vld [vmem:[#allocation3 + $0xc2c] sm:$0xf]
    %v905 = vld [vmem:[#allocation3 + $0xc30] sm:$0xf]
    %v906 = vld [vmem:[#allocation3 + $0xc34] sm:$0xf]
    %v907 = vld [vmem:[#allocation3 + $0xc38] sm:$0xf]
    %v908 = vld [vmem:[#allocation3 + $0xc3c] sm:$0xf]
    %v909 = vld [vmem:[#allocation3 + $0xc40] sm:$0xf]
    %v910 = vld [vmem:[#allocation3 + $0xc44] sm:$0xf]
    %v911 = vld [vmem:[#allocation3 + $0xc48] sm:$0xf]
    %v912 = vld [vmem:[#allocation3 + $0xc4c] sm:$0xf]
    %v913 = vld [vmem:[#allocation3 + $0xc50] sm:$0xf]
    %v914 = vld [vmem:[#allocation3 + $0xc54] sm:$0xf]
    %v915 = vld [vmem:[#allocation3 + $0xc58] sm:$0xf]
    %v916 = vld [vmem:[#allocation3 + $0xc5c] sm:$0xf]
    %v917 = vld [vmem:[#allocation3 + $0xc60] sm:$0xf]
    %v918 = vld [vmem:[#allocation3 + $0xc64] sm:$0xf]
    %v919 = vld [vmem:[#allocation3 + $0xc68] sm:$0xf]
    %v920 = vld [vmem:[#allocation3 + $0xc6c] sm:$0xf]
    %v921 = vld [vmem:[#allocation3 + $0xc70] sm:$0xf]
    %v922 = vld [vmem:[#allocation3 + $0xc74] sm:$0xf]
    %v923 = vld [vmem:[#allocation3 + $0xc78] sm:$0xf]
    %v924 = vld [vmem:[#allocation3 + $0xc7c] sm:$0xf]
    %v925 = vld [vmem:[#allocation3 + $0xc80] sm:$0xf]
    %v926 = vld [vmem:[#allocation3 + $0xc84] sm:$0xf]
    %v927 = vld [vmem:[#allocation3 + $0xc88] sm:$0xf]
    %v928 = vld [vmem:[#allocation3 + $0xc8c] sm:$0xf]
    %v929 = vld [vmem:[#allocation3 + $0xc90] sm:$0xf]
    %v930 = vld [vmem:[#allocation3 + $0xc94] sm:$0xf]
    %v931 = vld [vmem:[#allocation3 + $0xc98] sm:$0xf]
    %v932 = vld [vmem:[#allocation3 + $0xc9c] sm:$0xf]
    %v933 = vld [vmem:[#allocation3 + $0xca0] sm:$0xf]
    %v934 = vld [vmem:[#allocation3 + $0xca4] sm:$0xf]
    %v935 = vld [vmem:[#allocation3 + $0xca8] sm:$0xf]
    %v936 = vld [vmem:[#allocation3 + $0xcac] sm:$0xf]
    %v937 = vld [vmem:[#allocation3 + $0xcb0] sm:$0xf]
    %v938 = vld [vmem:[#allocation3 + $0xcb4] sm:$0xf]
    %v939 = vld [vmem:[#allocation3 + $0xcb8] sm:$0xf]
    %v940 = vld [vmem:[#allocation3 + $0xcbc] sm:$0xf]
    %v941 = vld [vmem:[#allocation3 + $0xcc0] sm:$0xf]
    %v942 = vld [vmem:[#allocation3 + $0xcc4] sm:$0xf]
    %v943 = vld [vmem:[#allocation3 + $0xcc8] sm:$0xf]
    %v944 = vld [vmem:[#allocation3 + $0xccc] sm:$0xf]
    %v945 = vld [vmem:[#allocation3 + $0xcd0] sm:$0xf]
    %v946 = vld [vmem:[#allocation3 + $0xcd4] sm:$0xf]
    %v947 = vld [vmem:[#allocation3 + $0xcd8] sm:$0xf]
    %v948 = vld [vmem:[#allocation3 + $0xcdc] sm:$0xf]
    %v949 = vld [vmem:[#allocation3 + $0xce0] sm:$0xf]
    %v950 = vld [vmem:[#allocation3 + $0xce4] sm:$0xf]
    %v951 = vld [vmem:[#allocation3 + $0xce8] sm:$0xf]
    %v952 = vld [vmem:[#allocation3 + $0xcec] sm:$0xf]
    %v953 = vld [vmem:[#allocation3 + $0xcf0] sm:$0xf]
    %v954 = vld [vmem:[#allocation3 + $0xcf4] sm:$0xf]
    %v955 = vld [vmem:[#allocation3 + $0xcf8] sm:$0xf]
    %v956 = vld [vmem:[#allocation3 + $0xcfc] sm:$0xf]
    %v957 = vld [vmem:[#allocation3 + $0xd00] sm:$0xf]
    %v958 = vld [vmem:[#allocation3 + $0xd04] sm:$0xf]
    %v959 = vld [vmem:[#allocation3 + $0xd08] sm:$0xf]
    %v960 = vld [vmem:[#allocation3 + $0xd0c] sm:$0xf]
    %v961 = vld [vmem:[#allocation3 + $0xd10] sm:$0xf]
    %v962 = vld [vmem:[#allocation3 + $0xd14] sm:$0xf]
    %v963 = vld [vmem:[#allocation3 + $0xd18] sm:$0xf]
    %v964 = vld [vmem:[#allocation3 + $0xd1c] sm:$0xf]
    %v965 = vld [vmem:[#allocation3 + $0xd20] sm:$0xf]
    %v966 = vld [vmem:[#allocation3 + $0xd24] sm:$0xf]
    %v967 = vld [vmem:[#allocation3 + $0xd28] sm:$0xf]
    %v968 = vld [vmem:[#allocation3 + $0xd2c] sm:$0xf]
    %v969 = vld [vmem:[#allocation3 + $0xd30] sm:$0xf]
    %v970 = vld [vmem:[#allocation3 + $0xd34] sm:$0xf]
    %v971 = vld [vmem:[#allocation3 + $0xd38] sm:$0xf]
    %v972 = vld [vmem:[#allocation3 + $0xd3c] sm:$0xf]
    %v973 = vld [vmem:[#allocation3 + $0xd40] sm:$0xf]
    %v974 = vld [vmem:[#allocation3 + $0xd44] sm:$0xf]
    %v975 = vld [vmem:[#allocation3 + $0xd48] sm:$0xf]
    %v976 = vld [vmem:[#allocation3 + $0xd4c] sm:$0xf]
    %v977 = vld [vmem:[#allocation3 + $0xd50] sm:$0xf]
    %v978 = vld [vmem:[#allocation3 + $0xd54] sm:$0xf]
    %v979 = vld [vmem:[#allocation3 + $0xd58] sm:$0xf]
    %v980 = vld [vmem:[#allocation3 + $0xd5c] sm:$0xf]
    %v981 = vld [vmem:[#allocation3 + $0xd60] sm:$0xf]
    %v982 = vld [vmem:[#allocation3 + $0xd64] sm:$0xf]
    %v983 = vld [vmem:[#allocation3 + $0xd68] sm:$0xf]
    %v984 = vld [vmem:[#allocation3 + $0xd6c] sm:$0xf]
    %v985 = vld [vmem:[#allocation3 + $0xd70] sm:$0xf]
    %v986 = vld [vmem:[#allocation3 + $0xd74] sm:$0xf]
    %v987 = vld [vmem:[#allocation3 + $0xd78] sm:$0xf]
    %v988 = vld [vmem:[#allocation3 + $0xd7c] sm:$0xf]
    %v989 = vld [vmem:[#allocation3 + $0xd80] sm:$0xf]
    %v990 = vld [vmem:[#allocation3 + $0xd84] sm:$0xf]
    %v991 = vld [vmem:[#allocation3 + $0xd88] sm:$0xf]
    %v992 = vld [vmem:[#allocation3 + $0xd8c] sm:$0xf]
    %v993 = vld [vmem:[#allocation3 + $0xd90] sm:$0xf]
    %v994 = vld [vmem:[#allocation3 + $0xd94] sm:$0xf]
    %v995 = vld [vmem:[#allocation3 + $0xd98] sm:$0xf]
    %v996 = vld [vmem:[#allocation3 + $0xd9c] sm:$0xf]
    %v997 = vld [vmem:[#allocation3 + $0xda0] sm:$0xf]
    %v998 = vld [vmem:[#allocation3 + $0xda4] sm:$0xf]
    %v999 = vld [vmem:[#allocation3 + $0xda8] sm:$0xf]
    %v1000 = vld [vmem:[#allocation3 + $0xdac] sm:$0xf]
    %v1001 = vld [vmem:[#allocation3 + $0xdb0] sm:$0xf]
    %v1002 = vld [vmem:[#allocation3 + $0xdb4] sm:$0xf]
    %v1003 = vld [vmem:[#allocation3 + $0xdb8] sm:$0xf]
    %v1004 = vld [vmem:[#allocation3 + $0xdbc] sm:$0xf]
    %v1005 = vld [vmem:[#allocation3 + $0xdc0] sm:$0xf]
    %v1006 = vld [vmem:[#allocation3 + $0xdc4] sm:$0xf]
    %v1007 = vld [vmem:[#allocation3 + $0xdc8] sm:$0xf]
    %v1008 = vld [vmem:[#allocation3 + $0xdcc] sm:$0xf]
    %v1009 = vld [vmem:[#allocation3 + $0xdd0] sm:$0xf]
    %v1010 = vld [vmem:[#allocation3 + $0xdd4] sm:$0xf]
    %v1011 = vld [vmem:[#allocation3 + $0xdd8] sm:$0xf]
    %v1012 = vld [vmem:[#allocation3 + $0xddc] sm:$0xf]
    %v1013 = vld [vmem:[#allocation3 + $0xde0] sm:$0xf]
    %v1014 = vld [vmem:[#allocation3 + $0xde4] sm:$0xf]
    %v1015 = vld [vmem:[#allocation3 + $0xde8] sm:$0xf]
    %v1016 = vld [vmem:[#allocation3 + $0xdec] sm:$0xf]
    %v1017 = vld [vmem:[#allocation3 + $0xdf0] sm:$0xf]
    %v1018 = vld [vmem:[#allocation3 + $0xdf4] sm:$0xf]
    %v1019 = vld [vmem:[#allocation3 + $0xdf8] sm:$0xf]
    %v1020 = vld [vmem:[#allocation3 + $0xdfc] sm:$0xf]
    %v1021 = vld [vmem:[#allocation3 + $0xe00] sm:$0xf]
    %v1022 = vld [vmem:[#allocation3 + $0xe04] sm:$0xf]
    %v1023 = vld [vmem:[#allocation3 + $0xe08] sm:$0xf]
    %v1024 = vld [vmem:[#allocation3 + $0xe0c] sm:$0xf]
    %v1025 = vld [vmem:[#allocation3 + $0xe10] sm:$0xf]
    %v1026 = vld [vmem:[#allocation3 + $0xe14] sm:$0xf]
    %v1027 = vld [vmem:[#allocation3 + $0xe18] sm:$0xf]
    %v1028 = vld [vmem:[#allocation3 + $0xe1c] sm:$0xf]
    %v1029 = vld [vmem:[#allocation3 + $0xe20] sm:$0xf]
    %v1030 = vld [vmem:[#allocation3 + $0xe24] sm:$0xf]
    %v1031 = vld [vmem:[#allocation3 + $0xe28] sm:$0xf]
    %v1032 = vld [vmem:[#allocation3 + $0xe2c] sm:$0xf]
    %v1033 = vld [vmem:[#allocation3 + $0xe30] sm:$0xf]
    %v1034 = vld [vmem:[#allocation3 + $0xe34] sm:$0xf]
    %v1035 = vld [vmem:[#allocation3 + $0xe38] sm:$0xf]
    %v1036 = vld [vmem:[#allocation3 + $0xe3c] sm:$0xf]
    %v1037 = vld [vmem:[#allocation3 + $0xe40] sm:$0xf]
    %v1038 = vld [vmem:[#allocation3 + $0xe44] sm:$0xf]
    %v1039 = vld [vmem:[#allocation3 + $0xe48] sm:$0xf]
    %v1040 = vld [vmem:[#allocation3 + $0xe4c] sm:$0xf]
    %v1041 = vld [vmem:[#allocation3 + $0xe50] sm:$0xf]
    %v1042 = vld [vmem:[#allocation3 + $0xe54] sm:$0xf]
    %v1043 = vld [vmem:[#allocation3 + $0xe58] sm:$0xf]
    %v1044 = vld [vmem:[#allocation3 + $0xe5c] sm:$0xf]
    %v1045 = vld [vmem:[#allocation3 + $0xe60] sm:$0xf]
    %v1046 = vld [vmem:[#allocation3 + $0xe64] sm:$0xf]
    %v1047 = vld [vmem:[#allocation3 + $0xe68] sm:$0xf]
    %v1048 = vld [vmem:[#allocation3 + $0xe6c] sm:$0xf]
    %v1049 = vld [vmem:[#allocation3 + $0xe70] sm:$0xf]
    %v1050 = vld [vmem:[#allocation3 + $0xe74] sm:$0xf]
    %v1051 = vld [vmem:[#allocation3 + $0xe78] sm:$0xf]
    %v1052 = vld [vmem:[#allocation3 + $0xe7c] sm:$0xf]
    %v1053 = vld [vmem:[#allocation3 + $0xe80] sm:$0xf]
    %v1054 = vld [vmem:[#allocation3 + $0xe84] sm:$0xf]
    %v1055 = vld [vmem:[#allocation3 + $0xe88] sm:$0xf]
    %v1056 = vld [vmem:[#allocation3 + $0xe8c] sm:$0xf]
    %v1057 = vld [vmem:[#allocation3 + $0xe90] sm:$0xf]
    %v1058 = vld [vmem:[#allocation3 + $0xe94] sm:$0xf]
    %v1059 = vld [vmem:[#allocation3 + $0xe98] sm:$0xf]
    %v1060 = vld [vmem:[#allocation3 + $0xe9c] sm:$0xf]
    %v1061 = vld [vmem:[#allocation3 + $0xea0] sm:$0xf]
    %v1062 = vld [vmem:[#allocation3 + $0xea4] sm:$0xf]
    %v1063 = vld [vmem:[#allocation3 + $0xea8] sm:$0xf]
    %v1064 = vld [vmem:[#allocation3 + $0xeac] sm:$0xf]
    %v1065 = vld [vmem:[#allocation3 + $0xeb0] sm:$0xf]
    %v1066 = vld [vmem:[#allocation3 + $0xeb4] sm:$0xf]
    %v1067 = vld [vmem:[#allocation3 + $0xeb8] sm:$0xf]
    %v1068 = vld [vmem:[#allocation3 + $0xebc] sm:$0xf]
    %v1069 = vld [vmem:[#allocation3 + $0xec0] sm:$0xf]
    %v1070 = vld [vmem:[#allocation3 + $0xec4] sm:$0xf]
    %v1071 = vld [vmem:[#allocation3 + $0xec8] sm:$0xf]
    %v1072 = vld [vmem:[#allocation3 + $0xecc] sm:$0xf]
    %v1073 = vld [vmem:[#allocation3 + $0xed0] sm:$0xf]
    %v1074 = vld [vmem:[#allocation3 + $0xed4] sm:$0xf]
    %v1075 = vld [vmem:[#allocation3 + $0xed8] sm:$0xf]
    %v1076 = vld [vmem:[#allocation3 + $0xedc] sm:$0xf]
    %v1077 = vld [vmem:[#allocation3 + $0xee0] sm:$0xf]
    %v1078 = vld [vmem:[#allocation3 + $0xee4] sm:$0xf]
    %v1079 = vld [vmem:[#allocation3 + $0xee8] sm:$0xf]
    %v1080 = vld [vmem:[#allocation3 + $0xeec] sm:$0xf]
    %v1081 = vld [vmem:[#allocation3 + $0xef0] sm:$0xf]
    %v1082 = vld [vmem:[#allocation3 + $0xef4] sm:$0xf]
    %v1083 = vld [vmem:[#allocation3 + $0xef8] sm:$0xf]
    %v1084 = vld [vmem:[#allocation3 + $0xefc] sm:$0xf]
    %v1085 = vld [vmem:[#allocation3 + $0xf00] sm:$0xf]
    %v1086 = vld [vmem:[#allocation3 + $0xf04] sm:$0xf]
    %v1087 = vld [vmem:[#allocation3 + $0xf08] sm:$0xf]
    %v1088 = vld [vmem:[#allocation3 + $0xf0c] sm:$0xf]
    %v1089 = vld [vmem:[#allocation3 + $0xf10] sm:$0xf]
    %v1090 = vld [vmem:[#allocation3 + $0xf14] sm:$0xf]
    %v1091 = vld [vmem:[#allocation3 + $0xf18] sm:$0xf]
    %v1092 = vld [vmem:[#allocation3 + $0xf1c] sm:$0xf]
    %v1093 = vld [vmem:[#allocation3 + $0xf20] sm:$0xf]
    %v1094 = vld [vmem:[#allocation3 + $0xf24] sm:$0xf]
    %v1095 = vld [vmem:[#allocation3 + $0xf28] sm:$0xf]
    %v1096 = vld [vmem:[#allocation3 + $0xf2c] sm:$0xf]
    %v1097 = vld [vmem:[#allocation3 + $0xf30] sm:$0xf]
    %v1098 = vld [vmem:[#allocation3 + $0xf34] sm:$0xf]
    %v1099 = vld [vmem:[#allocation3 + $0xf38] sm:$0xf]
    %v1100 = vld [vmem:[#allocation3 + $0xf3c] sm:$0xf]
    %v1101 = vld [vmem:[#allocation3 + $0xf40] sm:$0xf]
    %v1102 = vld [vmem:[#allocation3 + $0xf44] sm:$0xf]
    %v1103 = vld [vmem:[#allocation3 + $0xf48] sm:$0xf]
    %v1104 = vld [vmem:[#allocation3 + $0xf4c] sm:$0xf]
    %v1105 = vld [vmem:[#allocation3 + $0xf50] sm:$0xf]
    %v1106 = vld [vmem:[#allocation3 + $0xf54] sm:$0xf]
    %v1107 = vld [vmem:[#allocation3 + $0xf58] sm:$0xf]
    %v1108 = vld [vmem:[#allocation3 + $0xf5c] sm:$0xf]
    %v1109 = vld [vmem:[#allocation3 + $0xf60] sm:$0xf]
    %v1110 = vld [vmem:[#allocation3 + $0xf64] sm:$0xf]
    %v1111 = vld [vmem:[#allocation3 + $0xf68] sm:$0xf]
    %v1112 = vld [vmem:[#allocation3 + $0xf6c] sm:$0xf]
    %v1113 = vld [vmem:[#allocation3 + $0xf70] sm:$0xf]
    %v1114 = vld [vmem:[#allocation3 + $0xf74] sm:$0xf]
    %v1115 = vld [vmem:[#allocation3 + $0xf78] sm:$0xf]
    %v1116 = vld [vmem:[#allocation3 + $0xf7c] sm:$0xf]
    %v1117 = vld [vmem:[#allocation3 + $0xf80] sm:$0xf]
    %v1118 = vld [vmem:[#allocation3 + $0xf84] sm:$0xf]
    %v1119 = vld [vmem:[#allocation3 + $0xf88] sm:$0xf]
    %v1120 = vld [vmem:[#allocation3 + $0xf8c] sm:$0xf]
    %v1121 = vld [vmem:[#allocation3 + $0xf90] sm:$0xf]
    %v1122 = vld [vmem:[#allocation3 + $0xf94] sm:$0xf]
    %v1123 = vld [vmem:[#allocation3 + $0xf98] sm:$0xf]
    %v1124 = vld [vmem:[#allocation3 + $0xf9c] sm:$0xf]
    %v1125 = vld [vmem:[#allocation3 + $0xfa0] sm:$0xf]
    %v1126 = vld [vmem:[#allocation3 + $0xfa4] sm:$0xf]
    %v1127 = vld [vmem:[#allocation3 + $0xfa8] sm:$0xf]
    %v1128 = vld [vmem:[#allocation3 + $0xfac] sm:$0xf]
    %v1129 = vld [vmem:[#allocation3 + $0xfb0] sm:$0xf]
    %v1130 = vld [vmem:[#allocation3 + $0xfb4] sm:$0xf]
    %v1131 = vld [vmem:[#allocation3 + $0xfb8] sm:$0xf]
    %v1132 = vld [vmem:[#allocation3 + $0xfbc] sm:$0xf]
    %v1133 = vld [vmem:[#allocation3 + $0xfc0] sm:$0xf]
    %v1134 = vld [vmem:[#allocation3 + $0xfc4] sm:$0xf]
    %v1135 = vld [vmem:[#allocation3 + $0xfc8] sm:$0xf]
    %v1136 = vld [vmem:[#allocation3 + $0xfcc] sm:$0xf]
    %v1137 = vld [vmem:[#allocation3 + $0xfd0] sm:$0xf]
    %v1138 = vld [vmem:[#allocation3 + $0xfd4] sm:$0xf]
    %v1139 = vld [vmem:[#allocation3 + $0xfd8] sm:$0xf]
    %v1140 = vld [vmem:[#allocation3 + $0xfdc] sm:$0xf]
    %v1141 = vld [vmem:[#allocation3 + $0xfe0] sm:$0xf]
    %v1142 = vld [vmem:[#allocation3 + $0xfe4] sm:$0xf]
    %v1143 = vld [vmem:[#allocation3 + $0xfe8] sm:$0xf]
    %v1144 = vld [vmem:[#allocation3 + $0xfec] sm:$0xf]
    %v1145 = vld [vmem:[#allocation3 + $0xff0] sm:$0xf]
    %v1146 = vld [vmem:[#allocation3 + $0xff4] sm:$0xf]
    %v1147 = vld [vmem:[#allocation3 + $0xff8] sm:$0xf]
    %v1148 = vld [vmem:[#allocation3 + $0xffc] sm:$0xf]
    %v1149 = vld [vmem:[#allocation3 + $0x1000] sm:$0xf]
    %v1150 = vld [vmem:[#allocation3 + $0x1004] sm:$0xf]
    %v1151 = vld [vmem:[#allocation3 + $0x1008] sm:$0xf]
    %v1152 = vld [vmem:[#allocation3 + $0x100c] sm:$0xf]
    %v1153 = vld [vmem:[#allocation3 + $0x1010] sm:$0xf]
    %v1154 = vld [vmem:[#allocation3 + $0x1014] sm:$0xf]
    %v1155 = vld [vmem:[#allocation3 + $0x1018] sm:$0xf]
    %v1156 = vld [vmem:[#allocation3 + $0x101c] sm:$0xf]
    %v1157 = vld [vmem:[#allocation3 + $0x1020] sm:$0xf]
    %v1158 = vld [vmem:[#allocation3 + $0x1024] sm:$0xf]
    %v1159 = vld [vmem:[#allocation3 + $0x1028] sm:$0xf]
    %v1160 = vld [vmem:[#allocation3 + $0x102c] sm:$0xf]
    %v1161 = vld [vmem:[#allocation3 + $0x1030] sm:$0xf]
    %v1162 = vld [vmem:[#allocation3 + $0x1034] sm:$0xf]
    %v1163 = vld [vmem:[#allocation3 + $0x1038] sm:$0xf]
    %v1164 = vld [vmem:[#allocation3 + $0x103c] sm:$0xf]
    %v1165 = vld [vmem:[#allocation3 + $0x1040] sm:$0xf]
    %v1166 = vld [vmem:[#allocation3 + $0x1044] sm:$0xf]
    %v1167 = vld [vmem:[#allocation3 + $0x1048] sm:$0xf]
    %v1168 = vld [vmem:[#allocation3 + $0x104c] sm:$0xf]
    %v1169 = vld [vmem:[#allocation3 + $0x1050] sm:$0xf]
    %v1170 = vld [vmem:[#allocation3 + $0x1054] sm:$0xf]
    %v1171 = vld [vmem:[#allocation3 + $0x1058] sm:$0xf]
    %v1172 = vld [vmem:[#allocation3 + $0x105c] sm:$0xf]
    %v1173 = vld [vmem:[#allocation3 + $0x1060] sm:$0xf]
    %v1174 = vld [vmem:[#allocation3 + $0x1064] sm:$0xf]
    %v1175 = vld [vmem:[#allocation3 + $0x1068] sm:$0xf]
    %v1176 = vld [vmem:[#allocation3 + $0x106c] sm:$0xf]
    %v1177 = vld [vmem:[#allocation3 + $0x1070] sm:$0xf]
    %v1178 = vld [vmem:[#allocation3 + $0x1074] sm:$0xf]
    %v1179 = vld [vmem:[#allocation3 + $0x1078] sm:$0xf]
    %v1180 = vld [vmem:[#allocation3 + $0x107c] sm:$0xf]
    %v1181 = vld [vmem:[#allocation3 + $0x1080] sm:$0xf]
    %v1182 = vld [vmem:[#allocation3 + $0x1084] sm:$0xf]
    %v1183 = vld [vmem:[#allocation3 + $0x1088] sm:$0xf]
    %v1184 = vld [vmem:[#allocation3 + $0x108c] sm:$0xf]
    %v1185 = vld [vmem:[#allocation3 + $0x1090] sm:$0xf]
    %v1186 = vld [vmem:[#allocation3 + $0x1094] sm:$0xf]
    %v1187 = vld [vmem:[#allocation3 + $0x1098] sm:$0xf]
    %v1188 = vld [vmem:[#allocation3 + $0x109c] sm:$0xf]
    %v1189 = vld [vmem:[#allocation3 + $0x10a0] sm:$0xf]
    %v1190 = vld [vmem:[#allocation3 + $0x10a4] sm:$0xf]
    %v1191 = vld [vmem:[#allocation3 + $0x10a8] sm:$0xf]
    %v1192 = vld [vmem:[#allocation3 + $0x10ac] sm:$0xf]
    %v1193 = vld [vmem:[#allocation3 + $0x10b0] sm:$0xf]
    %v1194 = vld [vmem:[#allocation3 + $0x10b4] sm:$0xf]
    %v1195 = vld [vmem:[#allocation3 + $0x10b8] sm:$0xf]
    %v1196 = vld [vmem:[#allocation3 + $0x10bc] sm:$0xf]
    %v1197 = vld [vmem:[#allocation3 + $0x10c0] sm:$0xf]
    %v1198 = vld [vmem:[#allocation3 + $0x10c4] sm:$0xf]
    %v1199 = vld [vmem:[#allocation3 + $0x10c8] sm:$0xf]
    %v1200 = vld [vmem:[#allocation3 + $0x10cc] sm:$0xf]
    %v1201 = vld [vmem:[#allocation3 + $0x10d0] sm:$0xf]
    %v1202 = vld [vmem:[#allocation3 + $0x10d4] sm:$0xf]
    %v1203 = vld [vmem:[#allocation3 + $0x10d8] sm:$0xf]
    %v1204 = vld [vmem:[#allocation3 + $0x10dc] sm:$0xf]
    %v1205 = vld [vmem:[#allocation3 + $0x10e0] sm:$0xf]
    %v1206 = vld [vmem:[#allocation3 + $0x10e4] sm:$0xf]
    %v1207 = vld [vmem:[#allocation3 + $0x10e8] sm:$0xf]
    %v1208 = vld [vmem:[#allocation3 + $0x10ec] sm:$0xf]
    %v1209 = vld [vmem:[#allocation3 + $0x10f0] sm:$0xf]
    %v1210 = vld [vmem:[#allocation3 + $0x10f4] sm:$0xf]
    %v1211 = vld [vmem:[#allocation3 + $0x10f8] sm:$0xf]
    %v1212 = vld [vmem:[#allocation3 + $0x10fc] sm:$0xf]
    %v1213 = vld [vmem:[#allocation3 + $0x1100] sm:$0xf]
    %v1214 = vld [vmem:[#allocation3 + $0x1104] sm:$0xf]
    %v1215 = vld [vmem:[#allocation3 + $0x1108] sm:$0xf]
    %v1216 = vld [vmem:[#allocation3 + $0x110c] sm:$0xf]
    %v1217 = vld [vmem:[#allocation3 + $0x1110] sm:$0xf]
    %v1218 = vld [vmem:[#allocation3 + $0x1114] sm:$0xf]
    %v1219 = vld [vmem:[#allocation3 + $0x1118] sm:$0xf]
    %v1220 = vld [vmem:[#allocation3 + $0x111c] sm:$0xf]
    %v1221 = vld [vmem:[#allocation3 + $0x1120] sm:$0xf]
    %v1222 = vld [vmem:[#allocation3 + $0x1124] sm:$0xf]
    %v1223 = vld [vmem:[#allocation3 + $0x1128] sm:$0xf]
    %v1224 = vld [vmem:[#allocation3 + $0x112c] sm:$0xf]
    %v1225 = vld [vmem:[#allocation3 + $0x1130] sm:$0xf]
    %v1226 = vld [vmem:[#allocation3 + $0x1134] sm:$0xf]
    %v1227 = vld [vmem:[#allocation3 + $0x1138] sm:$0xf]
    %v1228 = vld [vmem:[#allocation3 + $0x113c] sm:$0xf]
    %v1229 = vld [vmem:[#allocation3 + $0x1140] sm:$0xf]
    %v1230 = vld [vmem:[#allocation3 + $0x1144] sm:$0xf]
    %v1231 = vld [vmem:[#allocation3 + $0x1148] sm:$0xf]
    %v1232 = vld [vmem:[#allocation3 + $0x114c] sm:$0xf]
    %v1233 = vld [vmem:[#allocation3 + $0x1150] sm:$0xf]
    %v1234 = vld [vmem:[#allocation3 + $0x1154] sm:$0xf]
    %v1235 = vld [vmem:[#allocation3 + $0x1158] sm:$0xf]
    %v1236 = vld [vmem:[#allocation3 + $0x115c] sm:$0xf]
    %v1237 = vld [vmem:[#allocation3 + $0x1160] sm:$0xf]
    %v1238 = vld [vmem:[#allocation3 + $0x1164] sm:$0xf]
    %v1239 = vld [vmem:[#allocation3 + $0x1168] sm:$0xf]
    %v1240 = vld [vmem:[#allocation3 + $0x116c] sm:$0xf]
    %v1241 = vld [vmem:[#allocation3 + $0x1170] sm:$0xf]
    %v1242 = vld [vmem:[#allocation3 + $0x1174] sm:$0xf]
    %v1243 = vld [vmem:[#allocation3 + $0x1178] sm:$0xf]
    %v1244 = vld [vmem:[#allocation3 + $0x117c] sm:$0xf]
    %v1245 = vld [vmem:[#allocation3 + $0x1180] sm:$0xf]
    %v1246 = vld [vmem:[#allocation3 + $0x1184] sm:$0xf]
    %v1247 = vld [vmem:[#allocation3 + $0x1188] sm:$0xf]
    %v1248 = vld [vmem:[#allocation3 + $0x118c] sm:$0xf]
    %v1249 = vld [vmem:[#allocation3 + $0x1190] sm:$0xf]
    %v1250 = vld [vmem:[#allocation3 + $0x1194] sm:$0xf]
    %v1251 = vld [vmem:[#allocation3 + $0x1198] sm:$0xf]
    %v1252 = vld [vmem:[#allocation3 + $0x119c] sm:$0xf]
    %v1253 = vld [vmem:[#allocation3 + $0x11a0] sm:$0xf]
    %v1254 = vld [vmem:[#allocation3 + $0x11a4] sm:$0xf]
    %v1255 = vld [vmem:[#allocation3 + $0x11a8] sm:$0xf]
    %v1256 = vld [vmem:[#allocation3 + $0x11ac] sm:$0xf]
    %v1257 = vld [vmem:[#allocation3 + $0x11b0] sm:$0xf]
    %v1258 = vld [vmem:[#allocation3 + $0x11b4] sm:$0xf]
    %v1259 = vld [vmem:[#allocation3 + $0x11b8] sm:$0xf]
    %v1260 = vld [vmem:[#allocation3 + $0x11bc] sm:$0xf]
    %v1261 = vld [vmem:[#allocation3 + $0x11c0] sm:$0xf]
    %v1262 = vld [vmem:[#allocation3 + $0x11c4] sm:$0xf]
    %v1263 = vld [vmem:[#allocation3 + $0x11c8] sm:$0xf]
    %v1264 = vld [vmem:[#allocation3 + $0x11cc] sm:$0xf]
    %v1265 = vld [vmem:[#allocation3 + $0x11d0] sm:$0xf]
    %v1266 = vld [vmem:[#allocation3 + $0x11d4] sm:$0xf]
    %v1267 = vld [vmem:[#allocation3 + $0x11d8] sm:$0xf]
    %v1268 = vld [vmem:[#allocation3 + $0x11dc] sm:$0xf]
    %v1269 = vld [vmem:[#allocation3 + $0x11e0] sm:$0xf]
    %v1270 = vld [vmem:[#allocation3 + $0x11e4] sm:$0xf]
    %v1271 = vld [vmem:[#allocation3 + $0x11e8] sm:$0xf]
    %v1272 = vld [vmem:[#allocation3 + $0x11ec] sm:$0xf]
    %v1273 = vld [vmem:[#allocation3 + $0x11f0] sm:$0xf]
    %v1274 = vld [vmem:[#allocation3 + $0x11f4] sm:$0xf]
    %v1275 = vld [vmem:[#allocation3 + $0x11f8] sm:$0xf]
    %v1276 = vld [vmem:[#allocation3 + $0x11fc] sm:$0xf]
    %v1277 = vld [vmem:[#allocation3 + $0x1200] sm:$0xf]
    %v1278 = vld [vmem:[#allocation3 + $0x1204] sm:$0xf]
    %v1279 = vld [vmem:[#allocation3 + $0x1208] sm:$0xf]
    %v1280 = vld [vmem:[#allocation3 + $0x120c] sm:$0xf]
    %v1281 = vld [vmem:[#allocation3 + $0x1210] sm:$0xf]
    %v1282 = vld [vmem:[#allocation3 + $0x1214] sm:$0xf]
    %v1283 = vld [vmem:[#allocation3 + $0x1218] sm:$0xf]
    %v1284 = vld [vmem:[#allocation3 + $0x121c] sm:$0xf]
    %v1285 = vld [vmem:[#allocation3 + $0x1220] sm:$0xf]
    %v1286 = vld [vmem:[#allocation3 + $0x1224] sm:$0xf]
    %v1287 = vld [vmem:[#allocation3 + $0x1228] sm:$0xf]
    %v1288 = vld [vmem:[#allocation3 + $0x122c] sm:$0xf]
    %v1289 = vld [vmem:[#allocation3 + $0x1230] sm:$0xf]
    %v1290 = vld [vmem:[#allocation3 + $0x1234] sm:$0xf]
    %v1291 = vld [vmem:[#allocation3 + $0x1238] sm:$0xf]
    %v1292 = vld [vmem:[#allocation3 + $0x123c] sm:$0xf]
    %v1293 = vld [vmem:[#allocation3 + $0x1240] sm:$0xf]
    %v1294 = vld [vmem:[#allocation3 + $0x1244] sm:$0xf]
    %v1295 = vld [vmem:[#allocation3 + $0x1248] sm:$0xf]
    %v1296 = vld [vmem:[#allocation3 + $0x124c] sm:$0xf]
    %v1297 = vld [vmem:[#allocation3 + $0x1250] sm:$0xf]
    %v1298 = vld [vmem:[#allocation3 + $0x1254] sm:$0xf]
    %v1299 = vld [vmem:[#allocation3 + $0x1258] sm:$0xf]
    %v1300 = vld [vmem:[#allocation3 + $0x125c] sm:$0xf]
    %v1301 = vld [vmem:[#allocation3 + $0x1260] sm:$0xf]
    %v1302 = vld [vmem:[#allocation3 + $0x1264] sm:$0xf]
    %v1303 = vld [vmem:[#allocation3 + $0x1268] sm:$0xf]
    %v1304 = vld [vmem:[#allocation3 + $0x126c] sm:$0xf]
    %v1305 = vld [vmem:[#allocation3 + $0x1270] sm:$0xf]
    %v1306 = vld [vmem:[#allocation3 + $0x1274] sm:$0xf]
    %v1307 = vld [vmem:[#allocation3 + $0x1278] sm:$0xf]
    %v1308 = vld [vmem:[#allocation3 + $0x127c] sm:$0xf]
    %v1309 = vld [vmem:[#allocation3 + $0x1280] sm:$0xf]
    %v1310 = vld [vmem:[#allocation3 + $0x1284] sm:$0xf]
    %v1311 = vld [vmem:[#allocation3 + $0x1288] sm:$0xf]
    %v1312 = vld [vmem:[#allocation3 + $0x128c] sm:$0xf]
    %v1313 = vld [vmem:[#allocation3 + $0x1290] sm:$0xf]
    %v1314 = vld [vmem:[#allocation3 + $0x1294] sm:$0xf]
    %v1315 = vld [vmem:[#allocation3 + $0x1298] sm:$0xf]
    %v1316 = vld [vmem:[#allocation3 + $0x129c] sm:$0xf]
    %v1317 = vld [vmem:[#allocation3 + $0x12a0] sm:$0xf]
    %v1318 = vld [vmem:[#allocation3 + $0x12a4] sm:$0xf]
    %v1319 = vld [vmem:[#allocation3 + $0x12a8] sm:$0xf]
    %v1320 = vld [vmem:[#allocation3 + $0x12ac] sm:$0xf]
    %v1321 = vld [vmem:[#allocation3 + $0x12b0] sm:$0xf]
    %v1322 = vld [vmem:[#allocation3 + $0x12b4] sm:$0xf]
    %v1323 = vld [vmem:[#allocation3 + $0x12b8] sm:$0xf]
    %v1324 = vld [vmem:[#allocation3 + $0x12bc] sm:$0xf]
    %v1325 = vld [vmem:[#allocation3 + $0x12c0] sm:$0xf]
    %v1326 = vld [vmem:[#allocation3 + $0x12c4] sm:$0xf]
    %v1327 = vld [vmem:[#allocation3 + $0x12c8] sm:$0xf]
    %v1328 = vld [vmem:[#allocation3 + $0x12cc] sm:$0xf]
    %v1329 = vld [vmem:[#allocation3 + $0x12d0] sm:$0xf]
    %v1330 = vld [vmem:[#allocation3 + $0x12d4] sm:$0xf]
    %v1331 = vld [vmem:[#allocation3 + $0x12d8] sm:$0xf]
    %v1332 = vld [vmem:[#allocation3 + $0x12dc] sm:$0xf]
    %v1333 = vld [vmem:[#allocation3 + $0x12e0] sm:$0xf]
    %v1334 = vld [vmem:[#allocation3 + $0x12e4] sm:$0xf]
    %v1335 = vld [vmem:[#allocation3 + $0x12e8] sm:$0xf]
    %v1336 = vld [vmem:[#allocation3 + $0x12ec] sm:$0xf]
    %v1337 = vld [vmem:[#allocation3 + $0x12f0] sm:$0xf]
    %v1338 = vld [vmem:[#allocation3 + $0x12f4] sm:$0xf]
    %v1339 = vld [vmem:[#allocation3 + $0x12f8] sm:$0xf]
    %v1340 = vld [vmem:[#allocation3 + $0x12fc] sm:$0xf]
    %v1341 = vld [vmem:[#allocation3 + $0x1300] sm:$0xf]
    %v1342 = vld [vmem:[#allocation3 + $0x1304] sm:$0xf]
    %v1343 = vld [vmem:[#allocation3 + $0x1308] sm:$0xf]
    %v1344 = vld [vmem:[#allocation3 + $0x130c] sm:$0xf]
    %v1345 = vld [vmem:[#allocation3 + $0x1310] sm:$0xf]
    %v1346 = vld [vmem:[#allocation3 + $0x1314] sm:$0xf]
    %v1347 = vld [vmem:[#allocation3 + $0x1318] sm:$0xf]
    %v1348 = vld [vmem:[#allocation3 + $0x131c] sm:$0xf]
    %v1349 = vld [vmem:[#allocation3 + $0x1320] sm:$0xf]
    %v1350 = vld [vmem:[#allocation3 + $0x1324] sm:$0xf]
    %v1351 = vld [vmem:[#allocation3 + $0x1328] sm:$0xf]
    %v1352 = vld [vmem:[#allocation3 + $0x132c] sm:$0xf]
    %v1353 = vld [vmem:[#allocation3 + $0x1330] sm:$0xf]
    %v1354 = vld [vmem:[#allocation3 + $0x1334] sm:$0xf]
    %v1355 = vld [vmem:[#allocation3 + $0x1338] sm:$0xf]
    %v1356 = vld [vmem:[#allocation3 + $0x133c] sm:$0xf]
    %v1357 = vld [vmem:[#allocation3 + $0x1340] sm:$0xf]
    %v1358 = vld [vmem:[#allocation3 + $0x1344] sm:$0xf]
    %v1359 = vld [vmem:[#allocation3 + $0x1348] sm:$0xf]
    %v1360 = vld [vmem:[#allocation3 + $0x134c] sm:$0xf]
    %v1361 = vld [vmem:[#allocation3 + $0x1350] sm:$0xf]
    %v1362 = vld [vmem:[#allocation3 + $0x1354] sm:$0xf]
    %v1363 = vld [vmem:[#allocation3 + $0x1358] sm:$0xf]
    %v1364 = vld [vmem:[#allocation3 + $0x135c] sm:$0xf]
    %v1365 = vld [vmem:[#allocation3 + $0x1360] sm:$0xf]
    %v1366 = vld [vmem:[#allocation3 + $0x1364] sm:$0xf]
    %v1367 = vld [vmem:[#allocation3 + $0x1368] sm:$0xf]
    %v1368 = vld [vmem:[#allocation3 + $0x136c] sm:$0xf]
    %v1369 = vld [vmem:[#allocation3 + $0x1370] sm:$0xf]
    %v1370 = vld [vmem:[#allocation3 + $0x1374] sm:$0xf]
    %v1371 = vld [vmem:[#allocation3 + $0x1378] sm:$0xf]
    %v1372 = vld [vmem:[#allocation3 + $0x137c] sm:$0xf]
    %v1373 = vld [vmem:[#allocation3 + $0x1380] sm:$0xf]
    %v1374 = vld [vmem:[#allocation3 + $0x1384] sm:$0xf]
    %v1375 = vld [vmem:[#allocation3 + $0x1388] sm:$0xf]
    %v1376 = vld [vmem:[#allocation3 + $0x138c] sm:$0xf]
    %v1377 = vld [vmem:[#allocation3 + $0x1390] sm:$0xf]
    %v1378 = vld [vmem:[#allocation3 + $0x1394] sm:$0xf]
    %v1379 = vld [vmem:[#allocation3 + $0x1398] sm:$0xf]
    %v1380 = vld [vmem:[#allocation3 + $0x139c] sm:$0xf]
    %v1381 = vld [vmem:[#allocation3 + $0x13a0] sm:$0xf]
    %v1382 = vld [vmem:[#allocation3 + $0x13a4] sm:$0xf]
    %v1383 = vld [vmem:[#allocation3 + $0x13a8] sm:$0xf]
    %v1384 = vld [vmem:[#allocation3 + $0x13ac] sm:$0xf]
    %v1385 = vld [vmem:[#allocation3 + $0x13b0] sm:$0xf]
    %v1386 = vld [vmem:[#allocation3 + $0x13b4] sm:$0xf]
    %v1387 = vld [vmem:[#allocation3 + $0x13b8] sm:$0xf]
    %v1388 = vld [vmem:[#allocation3 + $0x13bc] sm:$0xf]
    %v1389 = vld [vmem:[#allocation3 + $0x13c0] sm:$0xf]
    %v1390 = vld [vmem:[#allocation3 + $0x13c4] sm:$0xf]
    %v1391 = vld [vmem:[#allocation3 + $0x13c8] sm:$0xf]
    %v1392 = vld [vmem:[#allocation3 + $0x13cc] sm:$0xf]
    %v1393 = vld [vmem:[#allocation3 + $0x13d0] sm:$0xf]
    %v1394 = vld [vmem:[#allocation3 + $0x13d4] sm:$0xf]
    %v1395 = vld [vmem:[#allocation3 + $0x13d8] sm:$0xf]
    %v1396 = vld [vmem:[#allocation3 + $0x13dc] sm:$0xf]
    %v1397 = vld [vmem:[#allocation3 + $0x13e0] sm:$0xf]
    %v1398 = vld [vmem:[#allocation3 + $0x13e4] sm:$0xf]
    %v1399 = vld [vmem:[#allocation3 + $0x13e8] sm:$0xf]
    %v1400 = vld [vmem:[#allocation3 + $0x13ec] sm:$0xf]
    %v1401 = vld [vmem:[#allocation3 + $0x13f0] sm:$0xf]
    %v1402 = vld [vmem:[#allocation3 + $0x13f4] sm:$0xf]
    %v1403 = vld [vmem:[#allocation3 + $0x13f8] sm:$0xf]
    %v1404 = vld [vmem:[#allocation3 + $0x13fc] sm:$0xf]
    %v1485 = vunpack.c.l.b16 %v45
    %v1486 = vunpack.c.h.b16 %v45
    %v1487 = vunpack.c.l.b16 %v46
    %v1488 = vunpack.c.h.b16 %v46
    %v1489 = vunpack.c.l.b16 %v47
    %v1490 = vunpack.c.h.b16 %v47
    %v1491 = vunpack.c.l.b16 %v48
    %v1492 = vunpack.c.h.b16 %v48
    %v1493 = vunpack.c.l.b16 %v49
    %v1494 = vunpack.c.h.b16 %v49
    %v1495 = vunpack.c.l.b16 %v50
    %v1496 = vunpack.c.h.b16 %v50
    %v1497 = vunpack.c.l.b16 %v51
    %v1498 = vunpack.c.h.b16 %v51
    %v1499 = vunpack.c.l.b16 %v52
    %v1500 = vunpack.c.h.b16 %v52
    %v1501 = vunpack.c.l.b16 %v53
    %v1502 = vunpack.c.h.b16 %v53
    %v1503 = vunpack.c.l.b16 %v54
    %v1504 = vunpack.c.h.b16 %v54
    %v1505 = vunpack.c.l.b16 %v55
    %v1506 = vunpack.c.h.b16 %v55
    %v1507 = vunpack.c.l.b16 %v56
    %v1508 = vunpack.c.h.b16 %v56
    %v1509 = vunpack.c.l.b16 %v57
    %v1510 = vunpack.c.h.b16 %v57
    %v1511 = vunpack.c.l.b16 %v58
    %v1512 = vunpack.c.h.b16 %v58
    %v1513 = vunpack.c.l.b16 %v59
    %v1514 = vunpack.c.h.b16 %v59
    %v1515 = vunpack.c.l.b16 %v60
    %v1516 = vunpack.c.h.b16 %v60
    %v1517 = vunpack.c.l.b16 %v61
    %v1518 = vunpack.c.h.b16 %v61
    %v1519 = vunpack.c.l.b16 %v62
    %v1520 = vunpack.c.h.b16 %v62
    %v1521 = vunpack.c.l.b16 %v63
    %v1522 = vunpack.c.h.b16 %v63
    %v1523 = vunpack.c.l.b16 %v64
    %v1524 = vunpack.c.h.b16 %v64
    %v1525 = vunpack.c.l.b16 %v65
    %v1526 = vunpack.c.h.b16 %v65
    %v1527 = vunpack.c.l.b16 %v66
    %v1528 = vunpack.c.h.b16 %v66
    %v1529 = vunpack.c.l.b16 %v67
    %v1530 = vunpack.c.h.b16 %v67
    %v1531 = vunpack.c.l.b16 %v68
    %v1532 = vunpack.c.h.b16 %v68
    %v1533 = vunpack.c.l.b16 %v69
    %v1534 = vunpack.c.h.b16 %v69
    %v1535 = vunpack.c.l.b16 %v70
    %v1536 = vunpack.c.h.b16 %v70
    %v1537 = vunpack.c.l.b16 %v71
    %v1538 = vunpack.c.h.b16 %v71
    %v1539 = vunpack.c.l.b16 %v72
    %v1540 = vunpack.c.h.b16 %v72
    %v1541 = vunpack.c.l.b16 %v73
    %v1542 = vunpack.c.h.b16 %v73
    %v1543 = vunpack.c.l.b16 %v74
    %v1544 = vunpack.c.h.b16 %v74
    %v1545 = vunpack.c.l.b16 %v75
    %v1546 = vunpack.c.h.b16 %v75
    %v1547 = vunpack.c.l.b16 %v76
    %v1548 = vunpack.c.h.b16 %v76
    %v1549 = vunpack.c.l.b16 %v77
    %v1550 = vunpack.c.h.b16 %v77
    %v1551 = vunpack.c.l.b16 %v78
    %v1552 = vunpack.c.h.b16 %v78
    %v1553 = vunpack.c.l.b16 %v79
    %v1554 = vunpack.c.h.b16 %v79
    %v1555 = vunpack.c.l.b16 %v80
    %v1556 = vunpack.c.h.b16 %v80
    %v1557 = vunpack.c.l.b16 %v81
    %v1558 = vunpack.c.h.b16 %v81
    %v1559 = vunpack.c.l.b16 %v82
    %v1560 = vunpack.c.h.b16 %v82
    %v1561 = vunpack.c.l.b16 %v83
    %v1562 = vunpack.c.h.b16 %v83
    %v1563 = vunpack.c.l.b16 %v84
    %v1564 = vunpack.c.h.b16 %v84
    %v1565 = vunpack.c.l.b16 %v85
    %v1566 = vunpack.c.h.b16 %v85
    %v1567 = vunpack.c.l.b16 %v86
    %v1568 = vunpack.c.h.b16 %v86
    %v1569 = vunpack.c.l.b16 %v87
    %v1570 = vunpack.c.h.b16 %v87
    %v1571 = vunpack.c.l.b16 %v88
    %v1572 = vunpack.c.h.b16 %v88
    %v1573 = vunpack.c.l.b16 %v89
    %v1574 = vunpack.c.h.b16 %v89
    %v1575 = vunpack.c.l.b16 %v90
    %v1576 = vunpack.c.h.b16 %v90
    %v1577 = vunpack.c.l.b16 %v91
    %v1578 = vunpack.c.h.b16 %v91
    %v1579 = vunpack.c.l.b16 %v92
    %v1580 = vunpack.c.h.b16 %v92
    %v1581 = vunpack.c.l.b16 %v93
    %v1582 = vunpack.c.h.b16 %v93
    %v1583 = vunpack.c.l.b16 %v94
    %v1584 = vunpack.c.h.b16 %v94
    %v1585 = vunpack.c.l.b16 %v95
    %v1586 = vunpack.c.h.b16 %v95
    %v1587 = vunpack.c.l.b16 %v96
    %v1588 = vunpack.c.h.b16 %v96
    %v1589 = vunpack.c.l.b16 %v97
    %v1590 = vunpack.c.h.b16 %v97
    %v1591 = vunpack.c.l.b16 %v98
    %v1592 = vunpack.c.h.b16 %v98
    %v1593 = vunpack.c.l.b16 %v99
    %v1594 = vunpack.c.h.b16 %v99
    %v1595 = vunpack.c.l.b16 %v100
    %v1596 = vunpack.c.h.b16 %v100
    %v1597 = vunpack.c.l.b16 %v101
    %v1598 = vunpack.c.h.b16 %v101
    %v1599 = vunpack.c.l.b16 %v102
    %v1600 = vunpack.c.h.b16 %v102
    %v1601 = vunpack.c.l.b16 %v103
    %v1602 = vunpack.c.h.b16 %v103
    %v1603 = vunpack.c.l.b16 %v104
    %v1604 = vunpack.c.h.b16 %v104
    %v1605 = vunpack.c.l.b16 %v105
    %v1606 = vunpack.c.h.b16 %v105
    %v1607 = vunpack.c.l.b16 %v106
    %v1608 = vunpack.c.h.b16 %v106
    %v1609 = vunpack.c.l.b16 %v107
    %v1610 = vunpack.c.h.b16 %v107
    %v1611 = vunpack.c.l.b16 %v108
    %v1612 = vunpack.c.h.b16 %v108
    %v1613 = vunpack.c.l.b16 %v109
    %v1614 = vunpack.c.h.b16 %v109
    %v1615 = vunpack.c.l.b16 %v110
    %v1616 = vunpack.c.h.b16 %v110
    %v1617 = vunpack.c.l.b16 %v111
    %v1618 = vunpack.c.h.b16 %v111
    %v1619 = vunpack.c.l.b16 %v112
    %v1620 = vunpack.c.h.b16 %v112
    %v1621 = vunpack.c.l.b16 %v113
    %v1622 = vunpack.c.h.b16 %v113
    %v1623 = vunpack.c.l.b16 %v114
    %v1624 = vunpack.c.h.b16 %v114
    %v1625 = vunpack.c.l.b16 %v115
    %v1626 = vunpack.c.h.b16 %v115
    %v1627 = vunpack.c.l.b16 %v116
    %v1628 = vunpack.c.h.b16 %v116
    %v1629 = vunpack.c.l.b16 %v117
    %v1630 = vunpack.c.h.b16 %v117
    %v1631 = vunpack.c.l.b16 %v118
    %v1632 = vunpack.c.h.b16 %v118
    %v1633 = vunpack.c.l.b16 %v119
    %v1634 = vunpack.c.h.b16 %v119
    %v1635 = vunpack.c.l.b16 %v120
    %v1636 = vunpack.c.h.b16 %v120
    %v1637 = vunpack.c.l.b16 %v121
    %v1638 = vunpack.c.h.b16 %v121
    %v1639 = vunpack.c.l.b16 %v122
    %v1640 = vunpack.c.h.b16 %v122
    %v1641 = vunpack.c.l.b16 %v123
    %v1642 = vunpack.c.h.b16 %v123
    %v1643 = vunpack.c.l.b16 %v124
    %v1644 = vunpack.c.h.b16 %v124
    %v1645 = vpack.c.b16 %v1565, %v1485
    %v1646 = vpack.c.b16 %v1566, %v1486
    %v1647 = vpack.c.b16 %v1567, %v1487
    %v1648 = vpack.c.b16 %v1568, %v1488
    %v1649 = vpack.c.b16 %v1569, %v1489
    %v1650 = vpack.c.b16 %v1570, %v1490
    %v1651 = vpack.c.b16 %v1571, %v1491
    %v1652 = vpack.c.b16 %v1572, %v1492
    %v1653 = vpack.c.b16 %v1573, %v1493
    %v1654 = vpack.c.b16 %v1574, %v1494
    %v1655 = vpack.c.b16 %v1575, %v1495
    %v1656 = vpack.c.b16 %v1576, %v1496
    %v1657 = vpack.c.b16 %v1577, %v1497
    %v1658 = vpack.c.b16 %v1578, %v1498
    %v1659 = vpack.c.b16 %v1579, %v1499
    %v1660 = vpack.c.b16 %v1580, %v1500
    %v1661 = vpack.c.b16 %v1581, %v1501
    %v1662 = vpack.c.b16 %v1582, %v1502
    %v1663 = vpack.c.b16 %v1583, %v1503
    %v1664 = vpack.c.b16 %v1584, %v1504
    %v1665 = vpack.c.b16 %v1585, %v1505
    %v1666 = vpack.c.b16 %v1586, %v1506
    %v1667 = vpack.c.b16 %v1587, %v1507
    %v1668 = vpack.c.b16 %v1588, %v1508
    %v1669 = vpack.c.b16 %v1589, %v1509
    %v1670 = vpack.c.b16 %v1590, %v1510
    %v1671 = vpack.c.b16 %v1591, %v1511
    %v1672 = vpack.c.b16 %v1592, %v1512
    %v1673 = vpack.c.b16 %v1593, %v1513
    %v1674 = vpack.c.b16 %v1594, %v1514
    %v1675 = vpack.c.b16 %v1595, %v1515
    %v1676 = vpack.c.b16 %v1596, %v1516
    %v1677 = vpack.c.b16 %v1597, %v1517
    %v1678 = vpack.c.b16 %v1598, %v1518
    %v1679 = vpack.c.b16 %v1599, %v1519
    %v1680 = vpack.c.b16 %v1600, %v1520
    %v1681 = vpack.c.b16 %v1601, %v1521
    %v1682 = vpack.c.b16 %v1602, %v1522
    %v1683 = vpack.c.b16 %v1603, %v1523
    %v1684 = vpack.c.b16 %v1604, %v1524
    %v1685 = vpack.c.b16 %v1605, %v1525
    %v1686 = vpack.c.b16 %v1606, %v1526
    %v1687 = vpack.c.b16 %v1607, %v1527
    %v1688 = vpack.c.b16 %v1608, %v1528
    %v1689 = vpack.c.b16 %v1609, %v1529
    %v1690 = vpack.c.b16 %v1610, %v1530
    %v1691 = vpack.c.b16 %v1611, %v1531
    %v1692 = vpack.c.b16 %v1612, %v1532
    %v1693 = vpack.c.b16 %v1613, %v1533
    %v1694 = vpack.c.b16 %v1614, %v1534
    %v1695 = vpack.c.b16 %v1615, %v1535
    %v1696 = vpack.c.b16 %v1616, %v1536
    %v1697 = vpack.c.b16 %v1617, %v1537
    %v1698 = vpack.c.b16 %v1618, %v1538
    %v1699 = vpack.c.b16 %v1619, %v1539
    %v1700 = vpack.c.b16 %v1620, %v1540
    %v1701 = vpack.c.b16 %v1621, %v1541
    %v1702 = vpack.c.b16 %v1622, %v1542
    %v1703 = vpack.c.b16 %v1623, %v1543
    %v1704 = vpack.c.b16 %v1624, %v1544
    %v1705 = vpack.c.b16 %v1625, %v1545
    %v1706 = vpack.c.b16 %v1626, %v1546
    %v1707 = vpack.c.b16 %v1627, %v1547
    %v1708 = vpack.c.b16 %v1628, %v1548
    %v1709 = vpack.c.b16 %v1629, %v1549
    %v1710 = vpack.c.b16 %v1630, %v1550
    %v1711 = vpack.c.b16 %v1631, %v1551
    %v1712 = vpack.c.b16 %v1632, %v1552
    %v1713 = vpack.c.b16 %v1633, %v1553
    %v1714 = vpack.c.b16 %v1634, %v1554
    %v1715 = vpack.c.b16 %v1635, %v1555
    %v1716 = vpack.c.b16 %v1636, %v1556
    %v1717 = vpack.c.b16 %v1637, %v1557
    %v1718 = vpack.c.b16 %v1638, %v1558
    %v1719 = vpack.c.b16 %v1639, %v1559
    %v1720 = vpack.c.b16 %v1640, %v1560
    %v1721 = vpack.c.b16 %v1641, %v1561
    %v1722 = vpack.c.b16 %v1642, %v1562
    %v1723 = vpack.c.b16 %v1643, %v1563
    %v1724 = vpack.c.b16 %v1644, %v1564
    %v3085 = vunpack.c.l.b16 %v125
    %v3086 = vunpack.c.l.b16 %v126
    %v3087 = vunpack.c.l.b16 %v127
    %v3088 = vunpack.c.l.b16 %v128
    %v3089 = vunpack.c.l.b16 %v129
    %v3090 = vunpack.c.l.b16 %v130
    %v3091 = vunpack.c.l.b16 %v131
    %v3092 = vunpack.c.l.b16 %v132
    %v3093 = vunpack.c.l.b16 %v133
    %v3094 = vunpack.c.l.b16 %v134
    %v3095 = vunpack.c.l.b16 %v135
    %v3096 = vunpack.c.l.b16 %v136
    %v3097 = vunpack.c.l.b16 %v137
    %v3098 = vunpack.c.l.b16 %v138
    %v3099 = vunpack.c.l.b16 %v139
    %v3100 = vunpack.c.l.b16 %v140
    %v3101 = vunpack.c.l.b16 %v141
    %v3102 = vunpack.c.l.b16 %v142
    %v3103 = vunpack.c.l.b16 %v143
    %v3104 = vunpack.c.l.b16 %v144
    %v3105 = vunpack.c.l.b16 %v145
    %v3106 = vunpack.c.l.b16 %v146
    %v3107 = vunpack.c.l.b16 %v147
    %v3108 = vunpack.c.l.b16 %v148
    %v3109 = vunpack.c.l.b16 %v149
    %v3110 = vunpack.c.l.b16 %v150
    %v3111 = vunpack.c.l.b16 %v151
    %v3112 = vunpack.c.l.b16 %v152
    %v3113 = vunpack.c.l.b16 %v153
    %v3114 = vunpack.c.l.b16 %v154
    %v3115 = vunpack.c.l.b16 %v155
    %v3116 = vunpack.c.l.b16 %v156
    %v3117 = vunpack.c.l.b16 %v157
    %v3118 = vunpack.c.l.b16 %v158
    %v3119 = vunpack.c.l.b16 %v159
    %v3120 = vunpack.c.l.b16 %v160
    %v3121 = vunpack.c.l.b16 %v161
    %v3122 = vunpack.c.l.b16 %v162
    %v3123 = vunpack.c.l.b16 %v163
    %v3124 = vunpack.c.l.b16 %v164
    %v3125 = vunpack.c.l.b16 %v165
    %v3126 = vunpack.c.l.b16 %v166
    %v3127 = vunpack.c.l.b16 %v167
    %v3128 = vunpack.c.l.b16 %v168
    %v3129 = vunpack.c.l.b16 %v169
    %v3130 = vunpack.c.l.b16 %v170
    %v3131 = vunpack.c.l.b16 %v171
    %v3132 = vunpack.c.l.b16 %v172
    %v3133 = vunpack.c.l.b16 %v173
    %v3134 = vunpack.c.l.b16 %v174
    %v3135 = vunpack.c.l.b16 %v175
    %v3136 = vunpack.c.l.b16 %v176
    %v3137 = vunpack.c.l.b16 %v177
    %v3138 = vunpack.c.l.b16 %v178
    %v3139 = vunpack.c.l.b16 %v179
    %v3140 = vunpack.c.l.b16 %v180
    %v3141 = vunpack.c.l.b16 %v181
    %v3142 = vunpack.c.l.b16 %v182
    %v3143 = vunpack.c.l.b16 %v183
    %v3144 = vunpack.c.l.b16 %v184
    %v3145 = vunpack.c.l.b16 %v185
    %v3146 = vunpack.c.l.b16 %v186
    %v3147 = vunpack.c.l.b16 %v187
    %v3148 = vunpack.c.l.b16 %v188
    %v3149 = vunpack.c.l.b16 %v189
    %v3150 = vunpack.c.l.b16 %v190
    %v3151 = vunpack.c.l.b16 %v191
    %v3152 = vunpack.c.l.b16 %v192
    %v3153 = vunpack.c.l.b16 %v193
    %v3154 = vunpack.c.l.b16 %v194
    %v3155 = vunpack.c.l.b16 %v195
    %v3156 = vunpack.c.l.b16 %v196
    %v3157 = vunpack.c.l.b16 %v197
    %v3158 = vunpack.c.l.b16 %v198
    %v3159 = vunpack.c.l.b16 %v199
    %v3160 = vunpack.c.l.b16 %v200
    %v3161 = vunpack.c.l.b16 %v201
    %v3162 = vunpack.c.l.b16 %v202
    %v3163 = vunpack.c.l.b16 %v203
    %v3164 = vunpack.c.l.b16 %v204
    %v3165 = vunpack.c.l.b16 %v205
    %v3166 = vunpack.c.l.b16 %v206
    %v3167 = vunpack.c.l.b16 %v207
    %v3168 = vunpack.c.l.b16 %v208
    %v3169 = vunpack.c.l.b16 %v209
    %v3170 = vunpack.c.l.b16 %v210
    %v3171 = vunpack.c.l.b16 %v211
    %v3172 = vunpack.c.l.b16 %v212
    %v3173 = vunpack.c.l.b16 %v213
    %v3174 = vunpack.c.l.b16 %v214
    %v3175 = vunpack.c.l.b16 %v215
    %v3176 = vunpack.c.l.b16 %v216
    %v3177 = vunpack.c.l.b16 %v217
    %v3178 = vunpack.c.l.b16 %v218
    %v3179 = vunpack.c.l.b16 %v219
    %v3180 = vunpack.c.l.b16 %v220
    %v3181 = vunpack.c.l.b16 %v221
    %v3182 = vunpack.c.l.b16 %v222
    %v3183 = vunpack.c.l.b16 %v223
    %v3184 = vunpack.c.l.b16 %v224
    %v3185 = vunpack.c.l.b16 %v225
    %v3186 = vunpack.c.l.b16 %v226
    %v3187 = vunpack.c.l.b16 %v227
    %v3188 = vunpack.c.l.b16 %v228
    %v3189 = vunpack.c.l.b16 %v229
    %v3190 = vunpack.c.l.b16 %v230
    %v3191 = vunpack.c.l.b16 %v231
    %v3192 = vunpack.c.l.b16 %v232
    %v3193 = vunpack.c.l.b16 %v233
    %v3194 = vunpack.c.l.b16 %v234
    %v3195 = vunpack.c.l.b16 %v235
    %v3196 = vunpack.c.l.b16 %v236
    %v3197 = vunpack.c.l.b16 %v237
    %v3198 = vunpack.c.l.b16 %v238
    %v3199 = vunpack.c.l.b16 %v239
    %v3200 = vunpack.c.l.b16 %v240
    %v3201 = vunpack.c.l.b16 %v241
    %v3202 = vunpack.c.l.b16 %v242
    %v3203 = vunpack.c.l.b16 %v243
    %v3204 = vunpack.c.l.b16 %v244
    %v3205 = vunpack.c.l.b16 %v245
    %v3206 = vunpack.c.l.b16 %v246
    %v3207 = vunpack.c.l.b16 %v247
    %v3208 = vunpack.c.l.b16 %v248
    %v3209 = vunpack.c.l.b16 %v249
    %v3210 = vunpack.c.l.b16 %v250
    %v3211 = vunpack.c.l.b16 %v251
    %v3212 = vunpack.c.l.b16 %v252
    %v3213 = vunpack.c.l.b16 %v253
    %v3214 = vunpack.c.l.b16 %v254
    %v3215 = vunpack.c.l.b16 %v255
    %v3216 = vunpack.c.l.b16 %v256
    %v3217 = vunpack.c.l.b16 %v257
    %v3218 = vunpack.c.l.b16 %v258
    %v3219 = vunpack.c.l.b16 %v259
    %v3220 = vunpack.c.l.b16 %v260
    %v3221 = vunpack.c.l.b16 %v261
    %v3222 = vunpack.c.l.b16 %v262
    %v3223 = vunpack.c.l.b16 %v263
    %v3224 = vunpack.c.l.b16 %v264
    %v3225 = vunpack.c.l.b16 %v265
    %v3226 = vunpack.c.l.b16 %v266
    %v3227 = vunpack.c.l.b16 %v267
    %v3228 = vunpack.c.l.b16 %v268
    %v3229 = vunpack.c.l.b16 %v269
    %v3230 = vunpack.c.l.b16 %v270
    %v3231 = vunpack.c.l.b16 %v271
    %v3232 = vunpack.c.l.b16 %v272
    %v3233 = vunpack.c.l.b16 %v273
    %v3234 = vunpack.c.l.b16 %v274
    %v3235 = vunpack.c.l.b16 %v275
    %v3236 = vunpack.c.l.b16 %v276
    %v3237 = vunpack.c.l.b16 %v277
    %v3238 = vunpack.c.l.b16 %v278
    %v3239 = vunpack.c.l.b16 %v279
    %v3240 = vunpack.c.l.b16 %v280
    %v3241 = vunpack.c.l.b16 %v281
    %v3242 = vunpack.c.l.b16 %v282
    %v3243 = vunpack.c.l.b16 %v283
    %v3244 = vunpack.c.l.b16 %v284
    %v3245 = vunpack.c.l.b16 %v285
    %v3246 = vunpack.c.l.b16 %v286
    %v3247 = vunpack.c.l.b16 %v287
    %v3248 = vunpack.c.l.b16 %v288
    %v3249 = vunpack.c.l.b16 %v289
    %v3250 = vunpack.c.l.b16 %v290
    %v3251 = vunpack.c.l.b16 %v291
    %v3252 = vunpack.c.l.b16 %v292
    %v3253 = vunpack.c.l.b16 %v293
    %v3254 = vunpack.c.l.b16 %v294
    %v3255 = vunpack.c.l.b16 %v295
    %v3256 = vunpack.c.l.b16 %v296
    %v3257 = vunpack.c.l.b16 %v297
    %v3258 = vunpack.c.l.b16 %v298
    %v3259 = vunpack.c.l.b16 %v299
    %v3260 = vunpack.c.l.b16 %v300
    %v3261 = vunpack.c.l.b16 %v301
    %v3262 = vunpack.c.l.b16 %v302
    %v3263 = vunpack.c.l.b16 %v303
    %v3264 = vunpack.c.l.b16 %v304
    %v3265 = vunpack.c.l.b16 %v305
    %v3266 = vunpack.c.l.b16 %v306
    %v3267 = vunpack.c.l.b16 %v307
    %v3268 = vunpack.c.l.b16 %v308
    %v3269 = vunpack.c.l.b16 %v309
    %v3270 = vunpack.c.l.b16 %v310
    %v3271 = vunpack.c.l.b16 %v311
    %v3272 = vunpack.c.l.b16 %v312
    %v3273 = vunpack.c.l.b16 %v313
    %v3274 = vunpack.c.l.b16 %v314
    %v3275 = vunpack.c.l.b16 %v315
    %v3276 = vunpack.c.l.b16 %v316
    %v3277 = vunpack.c.l.b16 %v317
    %v3278 = vunpack.c.l.b16 %v318
    %v3279 = vunpack.c.l.b16 %v319
    %v3280 = vunpack.c.l.b16 %v320
    %v3281 = vunpack.c.l.b16 %v321
    %v3282 = vunpack.c.l.b16 %v322
    %v3283 = vunpack.c.l.b16 %v323
    %v3284 = vunpack.c.l.b16 %v324
    %v3285 = vunpack.c.l.b16 %v325
    %v3286 = vunpack.c.l.b16 %v326
    %v3287 = vunpack.c.l.b16 %v327
    %v3288 = vunpack.c.l.b16 %v328
    %v3289 = vunpack.c.l.b16 %v329
    %v3290 = vunpack.c.l.b16 %v330
    %v3291 = vunpack.c.l.b16 %v331
    %v3292 = vunpack.c.l.b16 %v332
    %v3293 = vunpack.c.l.b16 %v333
    %v3294 = vunpack.c.l.b16 %v334
    %v3295 = vunpack.c.l.b16 %v335
    %v3296 = vunpack.c.l.b16 %v336
    %v3297 = vunpack.c.l.b16 %v337
    %v3298 = vunpack.c.l.b16 %v338
    %v3299 = vunpack.c.l.b16 %v339
    %v3300 = vunpack.c.l.b16 %v340
    %v3301 = vunpack.c.l.b16 %v341
    %v3302 = vunpack.c.l.b16 %v342
    %v3303 = vunpack.c.l.b16 %v343
    %v3304 = vunpack.c.l.b16 %v344
    %v3305 = vunpack.c.l.b16 %v345
    %v3306 = vunpack.c.l.b16 %v346
    %v3307 = vunpack.c.l.b16 %v347
    %v3308 = vunpack.c.l.b16 %v348
    %v3309 = vunpack.c.l.b16 %v349
    %v3310 = vunpack.c.l.b16 %v350
    %v3311 = vunpack.c.l.b16 %v351
    %v3312 = vunpack.c.l.b16 %v352
    %v3313 = vunpack.c.l.b16 %v353
    %v3314 = vunpack.c.l.b16 %v354
    %v3315 = vunpack.c.l.b16 %v355
    %v3316 = vunpack.c.l.b16 %v356
    %v3317 = vunpack.c.l.b16 %v357
    %v3318 = vunpack.c.l.b16 %v358
    %v3319 = vunpack.c.l.b16 %v359
    %v3320 = vunpack.c.l.b16 %v360
    %v3321 = vunpack.c.l.b16 %v361
    %v3322 = vunpack.c.l.b16 %v362
    %v3323 = vunpack.c.l.b16 %v363
    %v3324 = vunpack.c.l.b16 %v364
    %v3325 = vunpack.c.l.b16 %v365
    %v3326 = vunpack.c.l.b16 %v366
    %v3327 = vunpack.c.l.b16 %v367
    %v3328 = vunpack.c.l.b16 %v368
    %v3329 = vunpack.c.l.b16 %v369
    %v3330 = vunpack.c.l.b16 %v370
    %v3331 = vunpack.c.l.b16 %v371
    %v3332 = vunpack.c.l.b16 %v372
    %v3333 = vunpack.c.l.b16 %v373
    %v3334 = vunpack.c.l.b16 %v374
    %v3335 = vunpack.c.l.b16 %v375
    %v3336 = vunpack.c.l.b16 %v376
    %v3337 = vunpack.c.l.b16 %v377
    %v3338 = vunpack.c.l.b16 %v378
    %v3339 = vunpack.c.l.b16 %v379
    %v3340 = vunpack.c.l.b16 %v380
    %v3341 = vunpack.c.l.b16 %v381
    %v3342 = vunpack.c.l.b16 %v382
    %v3343 = vunpack.c.l.b16 %v383
    %v3344 = vunpack.c.l.b16 %v384
    %v3345 = vunpack.c.l.b16 %v385
    %v3346 = vunpack.c.l.b16 %v386
    %v3347 = vunpack.c.l.b16 %v387
    %v3348 = vunpack.c.l.b16 %v388
    %v3349 = vunpack.c.l.b16 %v389
    %v3350 = vunpack.c.l.b16 %v390
    %v3351 = vunpack.c.l.b16 %v391
    %v3352 = vunpack.c.l.b16 %v392
    %v3353 = vunpack.c.l.b16 %v393
    %v3354 = vunpack.c.l.b16 %v394
    %v3355 = vunpack.c.l.b16 %v395
    %v3356 = vunpack.c.l.b16 %v396
    %v3357 = vunpack.c.l.b16 %v397
    %v3358 = vunpack.c.l.b16 %v398
    %v3359 = vunpack.c.l.b16 %v399
    %v3360 = vunpack.c.l.b16 %v400
    %v3361 = vunpack.c.l.b16 %v401
    %v3362 = vunpack.c.l.b16 %v402
    %v3363 = vunpack.c.l.b16 %v403
    %v3364 = vunpack.c.l.b16 %v404
    %v3365 = vunpack.c.l.b16 %v405
    %v3366 = vunpack.c.l.b16 %v406
    %v3367 = vunpack.c.l.b16 %v407
    %v3368 = vunpack.c.l.b16 %v408
    %v3369 = vunpack.c.l.b16 %v409
    %v3370 = vunpack.c.l.b16 %v410
    %v3371 = vunpack.c.l.b16 %v411
    %v3372 = vunpack.c.l.b16 %v412
    %v3373 = vunpack.c.l.b16 %v413
    %v3374 = vunpack.c.l.b16 %v414
    %v3375 = vunpack.c.l.b16 %v415
    %v3376 = vunpack.c.l.b16 %v416
    %v3377 = vunpack.c.l.b16 %v417
    %v3378 = vunpack.c.l.b16 %v418
    %v3379 = vunpack.c.l.b16 %v419
    %v3380 = vunpack.c.l.b16 %v420
    %v3381 = vunpack.c.l.b16 %v421
    %v3382 = vunpack.c.l.b16 %v422
    %v3383 = vunpack.c.l.b16 %v423
    %v3384 = vunpack.c.l.b16 %v424
    %v3385 = vunpack.c.l.b16 %v425
    %v3386 = vunpack.c.l.b16 %v426
    %v3387 = vunpack.c.l.b16 %v427
    %v3388 = vunpack.c.l.b16 %v428
    %v3389 = vunpack.c.l.b16 %v429
    %v3390 = vunpack.c.l.b16 %v430
    %v3391 = vunpack.c.l.b16 %v431
    %v3392 = vunpack.c.l.b16 %v432
    %v3393 = vunpack.c.l.b16 %v433
    %v3394 = vunpack.c.l.b16 %v434
    %v3395 = vunpack.c.l.b16 %v435
    %v3396 = vunpack.c.l.b16 %v436
    %v3397 = vunpack.c.l.b16 %v437
    %v3398 = vunpack.c.l.b16 %v438
    %v3399 = vunpack.c.l.b16 %v439
    %v3400 = vunpack.c.l.b16 %v440
    %v3401 = vunpack.c.l.b16 %v441
    %v3402 = vunpack.c.l.b16 %v442
    %v3403 = vunpack.c.l.b16 %v443
    %v3404 = vunpack.c.l.b16 %v444
    %v3405 = vunpack.c.l.b16 %v445
    %v3406 = vunpack.c.l.b16 %v446
    %v3407 = vunpack.c.l.b16 %v447
    %v3408 = vunpack.c.l.b16 %v448
    %v3409 = vunpack.c.l.b16 %v449
    %v3410 = vunpack.c.l.b16 %v450
    %v3411 = vunpack.c.l.b16 %v451
    %v3412 = vunpack.c.l.b16 %v452
    %v3413 = vunpack.c.l.b16 %v453
    %v3414 = vunpack.c.l.b16 %v454
    %v3415 = vunpack.c.l.b16 %v455
    %v3416 = vunpack.c.l.b16 %v456
    %v3417 = vunpack.c.l.b16 %v457
    %v3418 = vunpack.c.l.b16 %v458
    %v3419 = vunpack.c.l.b16 %v459
    %v3420 = vunpack.c.l.b16 %v460
    %v3421 = vunpack.c.l.b16 %v461
    %v3422 = vunpack.c.l.b16 %v462
    %v3423 = vunpack.c.l.b16 %v463
    %v3424 = vunpack.c.l.b16 %v464
    %v3425 = vunpack.c.l.b16 %v465
    %v3426 = vunpack.c.l.b16 %v466
    %v3427 = vunpack.c.l.b16 %v467
    %v3428 = vunpack.c.l.b16 %v468
    %v3429 = vunpack.c.l.b16 %v469
    %v3430 = vunpack.c.l.b16 %v470
    %v3431 = vunpack.c.l.b16 %v471
    %v3432 = vunpack.c.l.b16 %v472
    %v3433 = vunpack.c.l.b16 %v473
    %v3434 = vunpack.c.l.b16 %v474
    %v3435 = vunpack.c.l.b16 %v475
    %v3436 = vunpack.c.l.b16 %v476
    %v3437 = vunpack.c.l.b16 %v477
    %v3438 = vunpack.c.l.b16 %v478
    %v3439 = vunpack.c.l.b16 %v479
    %v3440 = vunpack.c.l.b16 %v480
    %v3441 = vunpack.c.l.b16 %v481
    %v3442 = vunpack.c.l.b16 %v482
    %v3443 = vunpack.c.l.b16 %v483
    %v3444 = vunpack.c.l.b16 %v484
    %v3445 = vunpack.c.l.b16 %v485
    %v3446 = vunpack.c.l.b16 %v486
    %v3447 = vunpack.c.l.b16 %v487
    %v3448 = vunpack.c.l.b16 %v488
    %v3449 = vunpack.c.l.b16 %v489
    %v3450 = vunpack.c.l.b16 %v490
    %v3451 = vunpack.c.l.b16 %v491
    %v3452 = vunpack.c.l.b16 %v492
    %v3453 = vunpack.c.l.b16 %v493
    %v3454 = vunpack.c.l.b16 %v494
    %v3455 = vunpack.c.l.b16 %v495
    %v3456 = vunpack.c.l.b16 %v496
    %v3457 = vunpack.c.l.b16 %v497
    %v3458 = vunpack.c.l.b16 %v498
    %v3459 = vunpack.c.l.b16 %v499
    %v3460 = vunpack.c.l.b16 %v500
    %v3461 = vunpack.c.l.b16 %v501
    %v3462 = vunpack.c.l.b16 %v502
    %v3463 = vunpack.c.l.b16 %v503
    %v3464 = vunpack.c.l.b16 %v504
    %v3465 = vunpack.c.l.b16 %v505
    %v3466 = vunpack.c.l.b16 %v506
    %v3467 = vunpack.c.l.b16 %v507
    %v3468 = vunpack.c.l.b16 %v508
    %v3469 = vunpack.c.l.b16 %v509
    %v3470 = vunpack.c.l.b16 %v510
    %v3471 = vunpack.c.l.b16 %v511
    %v3472 = vunpack.c.l.b16 %v512
    %v3473 = vunpack.c.l.b16 %v513
    %v3474 = vunpack.c.l.b16 %v514
    %v3475 = vunpack.c.l.b16 %v515
    %v3476 = vunpack.c.l.b16 %v516
    %v3477 = vunpack.c.l.b16 %v517
    %v3478 = vunpack.c.l.b16 %v518
    %v3479 = vunpack.c.l.b16 %v519
    %v3480 = vunpack.c.l.b16 %v520
    %v3481 = vunpack.c.l.b16 %v521
    %v3482 = vunpack.c.l.b16 %v522
    %v3483 = vunpack.c.l.b16 %v523
    %v3484 = vunpack.c.l.b16 %v524
    %v3485 = vunpack.c.l.b16 %v525
    %v3486 = vunpack.c.l.b16 %v526
    %v3487 = vunpack.c.l.b16 %v527
    %v3488 = vunpack.c.l.b16 %v528
    %v3489 = vunpack.c.l.b16 %v529
    %v3490 = vunpack.c.l.b16 %v530
    %v3491 = vunpack.c.l.b16 %v531
    %v3492 = vunpack.c.l.b16 %v532
    %v3493 = vunpack.c.l.b16 %v533
    %v3494 = vunpack.c.l.b16 %v534
    %v3495 = vunpack.c.l.b16 %v535
    %v3496 = vunpack.c.l.b16 %v536
    %v3497 = vunpack.c.l.b16 %v537
    %v3498 = vunpack.c.l.b16 %v538
    %v3499 = vunpack.c.l.b16 %v539
    %v3500 = vunpack.c.l.b16 %v540
    %v3501 = vunpack.c.l.b16 %v541
    %v3502 = vunpack.c.l.b16 %v542
    %v3503 = vunpack.c.l.b16 %v543
    %v3504 = vunpack.c.l.b16 %v544
    %v3505 = vunpack.c.l.b16 %v545
    %v3506 = vunpack.c.l.b16 %v546
    %v3507 = vunpack.c.l.b16 %v547
    %v3508 = vunpack.c.l.b16 %v548
    %v3509 = vunpack.c.l.b16 %v549
    %v3510 = vunpack.c.l.b16 %v550
    %v3511 = vunpack.c.l.b16 %v551
    %v3512 = vunpack.c.l.b16 %v552
    %v3513 = vunpack.c.l.b16 %v553
    %v3514 = vunpack.c.l.b16 %v554
    %v3515 = vunpack.c.l.b16 %v555
    %v3516 = vunpack.c.l.b16 %v556
    %v3517 = vunpack.c.l.b16 %v557
    %v3518 = vunpack.c.l.b16 %v558
    %v3519 = vunpack.c.l.b16 %v559
    %v3520 = vunpack.c.l.b16 %v560
    %v3521 = vunpack.c.l.b16 %v561
    %v3522 = vunpack.c.l.b16 %v562
    %v3523 = vunpack.c.l.b16 %v563
    %v3524 = vunpack.c.l.b16 %v564
    %v3525 = vunpack.c.l.b16 %v565
    %v3526 = vunpack.c.l.b16 %v566
    %v3527 = vunpack.c.l.b16 %v567
    %v3528 = vunpack.c.l.b16 %v568
    %v3529 = vunpack.c.l.b16 %v569
    %v3530 = vunpack.c.l.b16 %v570
    %v3531 = vunpack.c.l.b16 %v571
    %v3532 = vunpack.c.l.b16 %v572
    %v3533 = vunpack.c.l.b16 %v573
    %v3534 = vunpack.c.l.b16 %v574
    %v3535 = vunpack.c.l.b16 %v575
    %v3536 = vunpack.c.l.b16 %v576
    %v3537 = vunpack.c.l.b16 %v577
    %v3538 = vunpack.c.l.b16 %v578
    %v3539 = vunpack.c.l.b16 %v579
    %v3540 = vunpack.c.l.b16 %v580
    %v3541 = vunpack.c.l.b16 %v581
    %v3542 = vunpack.c.l.b16 %v582
    %v3543 = vunpack.c.l.b16 %v583
    %v3544 = vunpack.c.l.b16 %v584
    %v3545 = vunpack.c.l.b16 %v585
    %v3546 = vunpack.c.l.b16 %v586
    %v3547 = vunpack.c.l.b16 %v587
    %v3548 = vunpack.c.l.b16 %v588
    %v3549 = vunpack.c.l.b16 %v589
    %v3550 = vunpack.c.l.b16 %v590
    %v3551 = vunpack.c.l.b16 %v591
    %v3552 = vunpack.c.l.b16 %v592
    %v3553 = vunpack.c.l.b16 %v593
    %v3554 = vunpack.c.l.b16 %v594
    %v3555 = vunpack.c.l.b16 %v595
    %v3556 = vunpack.c.l.b16 %v596
    %v3557 = vunpack.c.l.b16 %v597
    %v3558 = vunpack.c.l.b16 %v598
    %v3559 = vunpack.c.l.b16 %v599
    %v3560 = vunpack.c.l.b16 %v600
    %v3561 = vunpack.c.l.b16 %v601
    %v3562 = vunpack.c.l.b16 %v602
    %v3563 = vunpack.c.l.b16 %v603
    %v3564 = vunpack.c.l.b16 %v604
    %v3565 = vunpack.c.l.b16 %v605
    %v3566 = vunpack.c.l.b16 %v606
    %v3567 = vunpack.c.l.b16 %v607
    %v3568 = vunpack.c.l.b16 %v608
    %v3569 = vunpack.c.l.b16 %v609
    %v3570 = vunpack.c.l.b16 %v610
    %v3571 = vunpack.c.l.b16 %v611
    %v3572 = vunpack.c.l.b16 %v612
    %v3573 = vunpack.c.l.b16 %v613
    %v3574 = vunpack.c.l.b16 %v614
    %v3575 = vunpack.c.l.b16 %v615
    %v3576 = vunpack.c.l.b16 %v616
    %v3577 = vunpack.c.l.b16 %v617
    %v3578 = vunpack.c.l.b16 %v618
    %v3579 = vunpack.c.l.b16 %v619
    %v3580 = vunpack.c.l.b16 %v620
    %v3581 = vunpack.c.l.b16 %v621
    %v3582 = vunpack.c.l.b16 %v622
    %v3583 = vunpack.c.l.b16 %v623
    %v3584 = vunpack.c.l.b16 %v624
    %v3585 = vunpack.c.l.b16 %v625
    %v3586 = vunpack.c.l.b16 %v626
    %v3587 = vunpack.c.l.b16 %v627
    %v3588 = vunpack.c.l.b16 %v628
    %v3589 = vunpack.c.l.b16 %v629
    %v3590 = vunpack.c.l.b16 %v630
    %v3591 = vunpack.c.l.b16 %v631
    %v3592 = vunpack.c.l.b16 %v632
    %v3593 = vunpack.c.l.b16 %v633
    %v3594 = vunpack.c.l.b16 %v634
    %v3595 = vunpack.c.l.b16 %v635
    %v3596 = vunpack.c.l.b16 %v636
    %v3597 = vunpack.c.l.b16 %v637
    %v3598 = vunpack.c.l.b16 %v638
    %v3599 = vunpack.c.l.b16 %v639
    %v3600 = vunpack.c.l.b16 %v640
    %v3601 = vunpack.c.l.b16 %v641
    %v3602 = vunpack.c.l.b16 %v642
    %v3603 = vunpack.c.l.b16 %v643
    %v3604 = vunpack.c.l.b16 %v644
    %v3605 = vunpack.c.l.b16 %v645
    %v3606 = vunpack.c.l.b16 %v646
    %v3607 = vunpack.c.l.b16 %v647
    %v3608 = vunpack.c.l.b16 %v648
    %v3609 = vunpack.c.l.b16 %v649
    %v3610 = vunpack.c.l.b16 %v650
    %v3611 = vunpack.c.l.b16 %v651
    %v3612 = vunpack.c.l.b16 %v652
    %v3613 = vunpack.c.l.b16 %v653
    %v3614 = vunpack.c.l.b16 %v654
    %v3615 = vunpack.c.l.b16 %v655
    %v3616 = vunpack.c.l.b16 %v656
    %v3617 = vunpack.c.l.b16 %v657
    %v3618 = vunpack.c.l.b16 %v658
    %v3619 = vunpack.c.l.b16 %v659
    %v3620 = vunpack.c.l.b16 %v660
    %v3621 = vunpack.c.l.b16 %v661
    %v3622 = vunpack.c.l.b16 %v662
    %v3623 = vunpack.c.l.b16 %v663
    %v3624 = vunpack.c.l.b16 %v664
    %v3625 = vunpack.c.l.b16 %v665
    %v3626 = vunpack.c.l.b16 %v666
    %v3627 = vunpack.c.l.b16 %v667
    %v3628 = vunpack.c.l.b16 %v668
    %v3629 = vunpack.c.l.b16 %v669
    %v3630 = vunpack.c.l.b16 %v670
    %v3631 = vunpack.c.l.b16 %v671
    %v3632 = vunpack.c.l.b16 %v672
    %v3633 = vunpack.c.l.b16 %v673
    %v3634 = vunpack.c.l.b16 %v674
    %v3635 = vunpack.c.l.b16 %v675
    %v3636 = vunpack.c.l.b16 %v676
    %v3637 = vunpack.c.l.b16 %v677
    %v3638 = vunpack.c.l.b16 %v678
    %v3639 = vunpack.c.l.b16 %v679
    %v3640 = vunpack.c.l.b16 %v680
    %v3641 = vunpack.c.l.b16 %v681
    %v3642 = vunpack.c.l.b16 %v682
    %v3643 = vunpack.c.l.b16 %v683
    %v3644 = vunpack.c.l.b16 %v684
    %v3645 = vunpack.c.l.b16 %v685
    %v3646 = vunpack.c.l.b16 %v686
    %v3647 = vunpack.c.l.b16 %v687
    %v3648 = vunpack.c.l.b16 %v688
    %v3649 = vunpack.c.l.b16 %v689
    %v3650 = vunpack.c.l.b16 %v690
    %v3651 = vunpack.c.l.b16 %v691
    %v3652 = vunpack.c.l.b16 %v692
    %v3653 = vunpack.c.l.b16 %v693
    %v3654 = vunpack.c.l.b16 %v694
    %v3655 = vunpack.c.l.b16 %v695
    %v3656 = vunpack.c.l.b16 %v696
    %v3657 = vunpack.c.l.b16 %v697
    %v3658 = vunpack.c.l.b16 %v698
    %v3659 = vunpack.c.l.b16 %v699
    %v3660 = vunpack.c.l.b16 %v700
    %v3661 = vunpack.c.l.b16 %v701
    %v3662 = vunpack.c.l.b16 %v702
    %v3663 = vunpack.c.l.b16 %v703
    %v3664 = vunpack.c.l.b16 %v704
    %v3665 = vunpack.c.l.b16 %v705
    %v3666 = vunpack.c.l.b16 %v706
    %v3667 = vunpack.c.l.b16 %v707
    %v3668 = vunpack.c.l.b16 %v708
    %v3669 = vunpack.c.l.b16 %v709
    %v3670 = vunpack.c.l.b16 %v710
    %v3671 = vunpack.c.l.b16 %v711
    %v3672 = vunpack.c.l.b16 %v712
    %v3673 = vunpack.c.l.b16 %v713
    %v3674 = vunpack.c.l.b16 %v714
    %v3675 = vunpack.c.l.b16 %v715
    %v3676 = vunpack.c.l.b16 %v716
    %v3677 = vunpack.c.l.b16 %v717
    %v3678 = vunpack.c.l.b16 %v718
    %v3679 = vunpack.c.l.b16 %v719
    %v3680 = vunpack.c.l.b16 %v720
    %v3681 = vunpack.c.l.b16 %v721
    %v3682 = vunpack.c.l.b16 %v722
    %v3683 = vunpack.c.l.b16 %v723
    %v3684 = vunpack.c.l.b16 %v724
    %v3685 = vunpack.c.l.b16 %v725
    %v3686 = vunpack.c.l.b16 %v726
    %v3687 = vunpack.c.l.b16 %v727
    %v3688 = vunpack.c.l.b16 %v728
    %v3689 = vunpack.c.l.b16 %v729
    %v3690 = vunpack.c.l.b16 %v730
    %v3691 = vunpack.c.l.b16 %v731
    %v3692 = vunpack.c.l.b16 %v732
    %v3693 = vunpack.c.l.b16 %v733
    %v3694 = vunpack.c.l.b16 %v734
    %v3695 = vunpack.c.l.b16 %v735
    %v3696 = vunpack.c.l.b16 %v736
    %v3697 = vunpack.c.l.b16 %v737
    %v3698 = vunpack.c.l.b16 %v738
    %v3699 = vunpack.c.l.b16 %v739
    %v3700 = vunpack.c.l.b16 %v740
    %v3701 = vunpack.c.l.b16 %v741
    %v3702 = vunpack.c.l.b16 %v742
    %v3703 = vunpack.c.l.b16 %v743
    %v3704 = vunpack.c.l.b16 %v744
    %v3705 = vunpack.c.l.b16 %v745
    %v3706 = vunpack.c.l.b16 %v746
    %v3707 = vunpack.c.l.b16 %v747
    %v3708 = vunpack.c.l.b16 %v748
    %v3709 = vunpack.c.l.b16 %v749
    %v3710 = vunpack.c.l.b16 %v750
    %v3711 = vunpack.c.l.b16 %v751
    %v3712 = vunpack.c.l.b16 %v752
    %v3713 = vunpack.c.l.b16 %v753
    %v3714 = vunpack.c.l.b16 %v754
    %v3715 = vunpack.c.l.b16 %v755
    %v3716 = vunpack.c.l.b16 %v756
    %v3717 = vunpack.c.l.b16 %v757
    %v3718 = vunpack.c.l.b16 %v758
    %v3719 = vunpack.c.l.b16 %v759
    %v3720 = vunpack.c.l.b16 %v760
    %v3721 = vunpack.c.l.b16 %v761
    %v3722 = vunpack.c.l.b16 %v762
    %v3723 = vunpack.c.l.b16 %v763
    %v3724 = vunpack.c.l.b16 %v764
    %v3725 = vunpack.c.l.b16 %v765
    %v3726 = vunpack.c.l.b16 %v766
    %v3727 = vunpack.c.l.b16 %v767
    %v3728 = vunpack.c.l.b16 %v768
    %v3729 = vunpack.c.l.b16 %v769
    %v3730 = vunpack.c.l.b16 %v770
    %v3731 = vunpack.c.l.b16 %v771
    %v3732 = vunpack.c.l.b16 %v772
    %v3733 = vunpack.c.l.b16 %v773
    %v3734 = vunpack.c.l.b16 %v774
    %v3735 = vunpack.c.l.b16 %v775
    %v3736 = vunpack.c.l.b16 %v776
    %v3737 = vunpack.c.l.b16 %v777
    %v3738 = vunpack.c.l.b16 %v778
    %v3739 = vunpack.c.l.b16 %v779
    %v3740 = vunpack.c.l.b16 %v780
    %v3741 = vunpack.c.l.b16 %v781
    %v3742 = vunpack.c.l.b16 %v782
    %v3743 = vunpack.c.l.b16 %v783
    %v3744 = vunpack.c.l.b16 %v784
    %v3745 = vunpack.c.l.b16 %v785
    %v3746 = vunpack.c.l.b16 %v786
    %v3747 = vunpack.c.l.b16 %v787
    %v3748 = vunpack.c.l.b16 %v788
    %v3749 = vunpack.c.l.b16 %v789
    %v3750 = vunpack.c.l.b16 %v790
    %v3751 = vunpack.c.l.b16 %v791
    %v3752 = vunpack.c.l.b16 %v792
    %v3753 = vunpack.c.l.b16 %v793
    %v3754 = vunpack.c.l.b16 %v794
    %v3755 = vunpack.c.l.b16 %v795
    %v3756 = vunpack.c.l.b16 %v796
    %v3757 = vunpack.c.l.b16 %v797
    %v3758 = vunpack.c.l.b16 %v798
    %v3759 = vunpack.c.l.b16 %v799
    %v3760 = vunpack.c.l.b16 %v800
    %v3761 = vunpack.c.l.b16 %v801
    %v3762 = vunpack.c.l.b16 %v802
    %v3763 = vunpack.c.l.b16 %v803
    %v3764 = vunpack.c.l.b16 %v804
    %v3765 = vunpack.c.l.b16 %v805
    %v3766 = vunpack.c.l.b16 %v806
    %v3767 = vunpack.c.l.b16 %v807
    %v3768 = vunpack.c.l.b16 %v808
    %v3769 = vunpack.c.l.b16 %v809
    %v3770 = vunpack.c.l.b16 %v810
    %v3771 = vunpack.c.l.b16 %v811
    %v3772 = vunpack.c.l.b16 %v812
    %v3773 = vunpack.c.l.b16 %v813
    %v3774 = vunpack.c.l.b16 %v814
    %v3775 = vunpack.c.l.b16 %v815
    %v3776 = vunpack.c.l.b16 %v816
    %v3777 = vunpack.c.l.b16 %v817
    %v3778 = vunpack.c.l.b16 %v818
    %v3779 = vunpack.c.l.b16 %v819
    %v3780 = vunpack.c.l.b16 %v820
    %v3781 = vunpack.c.l.b16 %v821
    %v3782 = vunpack.c.l.b16 %v822
    %v3783 = vunpack.c.l.b16 %v823
    %v3784 = vunpack.c.l.b16 %v824
    %v3785 = vunpack.c.l.b16 %v825
    %v3786 = vunpack.c.l.b16 %v826
    %v3787 = vunpack.c.l.b16 %v827
    %v3788 = vunpack.c.l.b16 %v828
    %v3789 = vunpack.c.l.b16 %v829
    %v3790 = vunpack.c.l.b16 %v830
    %v3791 = vunpack.c.l.b16 %v831
    %v3792 = vunpack.c.l.b16 %v832
    %v3793 = vunpack.c.l.b16 %v833
    %v3794 = vunpack.c.l.b16 %v834
    %v3795 = vunpack.c.l.b16 %v835
    %v3796 = vunpack.c.l.b16 %v836
    %v3797 = vunpack.c.l.b16 %v837
    %v3798 = vunpack.c.l.b16 %v838
    %v3799 = vunpack.c.l.b16 %v839
    %v3800 = vunpack.c.l.b16 %v840
    %v3801 = vunpack.c.l.b16 %v841
    %v3802 = vunpack.c.l.b16 %v842
    %v3803 = vunpack.c.l.b16 %v843
    %v3804 = vunpack.c.l.b16 %v844
    %v3805 = vunpack.c.l.b16 %v845
    %v3806 = vunpack.c.l.b16 %v846
    %v3807 = vunpack.c.l.b16 %v847
    %v3808 = vunpack.c.l.b16 %v848
    %v3809 = vunpack.c.l.b16 %v849
    %v3810 = vunpack.c.l.b16 %v850
    %v3811 = vunpack.c.l.b16 %v851
    %v3812 = vunpack.c.l.b16 %v852
    %v3813 = vunpack.c.l.b16 %v853
    %v3814 = vunpack.c.l.b16 %v854
    %v3815 = vunpack.c.l.b16 %v855
    %v3816 = vunpack.c.l.b16 %v856
    %v3817 = vunpack.c.l.b16 %v857
    %v3818 = vunpack.c.l.b16 %v858
    %v3819 = vunpack.c.l.b16 %v859
    %v3820 = vunpack.c.l.b16 %v860
    %v3821 = vunpack.c.l.b16 %v861
    %v3822 = vunpack.c.l.b16 %v862
    %v3823 = vunpack.c.l.b16 %v863
    %v3824 = vunpack.c.l.b16 %v864
    %v3825 = vunpack.c.l.b16 %v865
    %v3826 = vunpack.c.l.b16 %v866
    %v3827 = vunpack.c.l.b16 %v867
    %v3828 = vunpack.c.l.b16 %v868
    %v3829 = vunpack.c.l.b16 %v869
    %v3830 = vunpack.c.l.b16 %v870
    %v3831 = vunpack.c.l.b16 %v871
    %v3832 = vunpack.c.l.b16 %v872
    %v3833 = vunpack.c.l.b16 %v873
    %v3834 = vunpack.c.l.b16 %v874
    %v3835 = vunpack.c.l.b16 %v875
    %v3836 = vunpack.c.l.b16 %v876
    %v3837 = vunpack.c.l.b16 %v877
    %v3838 = vunpack.c.l.b16 %v878
    %v3839 = vunpack.c.l.b16 %v879
    %v3840 = vunpack.c.l.b16 %v880
    %v3841 = vunpack.c.l.b16 %v881
    %v3842 = vunpack.c.l.b16 %v882
    %v3843 = vunpack.c.l.b16 %v883
    %v3844 = vunpack.c.l.b16 %v884
    %v3845 = vunpack.c.l.b16 %v885
    %v3846 = vunpack.c.l.b16 %v886
    %v3847 = vunpack.c.l.b16 %v887
    %v3848 = vunpack.c.l.b16 %v888
    %v3849 = vunpack.c.l.b16 %v889
    %v3850 = vunpack.c.l.b16 %v890
    %v3851 = vunpack.c.l.b16 %v891
    %v3852 = vunpack.c.l.b16 %v892
    %v3853 = vunpack.c.l.b16 %v893
    %v3854 = vunpack.c.l.b16 %v894
    %v3855 = vunpack.c.l.b16 %v895
    %v3856 = vunpack.c.l.b16 %v896
    %v3857 = vunpack.c.l.b16 %v897
    %v3858 = vunpack.c.l.b16 %v898
    %v3859 = vunpack.c.l.b16 %v899
    %v3860 = vunpack.c.l.b16 %v900
    %v3861 = vunpack.c.l.b16 %v901
    %v3862 = vunpack.c.l.b16 %v902
    %v3863 = vunpack.c.l.b16 %v903
    %v3864 = vunpack.c.l.b16 %v904
    %v3865 = vunpack.c.l.b16 %v905
    %v3866 = vunpack.c.l.b16 %v906
    %v3867 = vunpack.c.l.b16 %v907
    %v3868 = vunpack.c.l.b16 %v908
    %v3869 = vunpack.c.l.b16 %v909
    %v3870 = vunpack.c.l.b16 %v910
    %v3871 = vunpack.c.l.b16 %v911
    %v3872 = vunpack.c.l.b16 %v912
    %v3873 = vunpack.c.l.b16 %v913
    %v3874 = vunpack.c.l.b16 %v914
    %v3875 = vunpack.c.l.b16 %v915
    %v3876 = vunpack.c.l.b16 %v916
    %v3877 = vunpack.c.l.b16 %v917
    %v3878 = vunpack.c.l.b16 %v918
    %v3879 = vunpack.c.l.b16 %v919
    %v3880 = vunpack.c.l.b16 %v920
    %v3881 = vunpack.c.l.b16 %v921
    %v3882 = vunpack.c.l.b16 %v922
    %v3883 = vunpack.c.l.b16 %v923
    %v3884 = vunpack.c.l.b16 %v924
    %v3885 = vunpack.c.l.b16 %v925
    %v3886 = vunpack.c.l.b16 %v926
    %v3887 = vunpack.c.l.b16 %v927
    %v3888 = vunpack.c.l.b16 %v928
    %v3889 = vunpack.c.l.b16 %v929
    %v3890 = vunpack.c.l.b16 %v930
    %v3891 = vunpack.c.l.b16 %v931
    %v3892 = vunpack.c.l.b16 %v932
    %v3893 = vunpack.c.l.b16 %v933
    %v3894 = vunpack.c.l.b16 %v934
    %v3895 = vunpack.c.l.b16 %v935
    %v3896 = vunpack.c.l.b16 %v936
    %v3897 = vunpack.c.l.b16 %v937
    %v3898 = vunpack.c.l.b16 %v938
    %v3899 = vunpack.c.l.b16 %v939
    %v3900 = vunpack.c.l.b16 %v940
    %v3901 = vunpack.c.l.b16 %v941
    %v3902 = vunpack.c.l.b16 %v942
    %v3903 = vunpack.c.l.b16 %v943
    %v3904 = vunpack.c.l.b16 %v944
    %v3905 = vunpack.c.l.b16 %v945
    %v3906 = vunpack.c.l.b16 %v946
    %v3907 = vunpack.c.l.b16 %v947
    %v3908 = vunpack.c.l.b16 %v948
    %v3909 = vunpack.c.l.b16 %v949
    %v3910 = vunpack.c.l.b16 %v950
    %v3911 = vunpack.c.l.b16 %v951
    %v3912 = vunpack.c.l.b16 %v952
    %v3913 = vunpack.c.l.b16 %v953
    %v3914 = vunpack.c.l.b16 %v954
    %v3915 = vunpack.c.l.b16 %v955
    %v3916 = vunpack.c.l.b16 %v956
    %v3917 = vunpack.c.l.b16 %v957
    %v3918 = vunpack.c.l.b16 %v958
    %v3919 = vunpack.c.l.b16 %v959
    %v3920 = vunpack.c.l.b16 %v960
    %v3921 = vunpack.c.l.b16 %v961
    %v3922 = vunpack.c.l.b16 %v962
    %v3923 = vunpack.c.l.b16 %v963
    %v3924 = vunpack.c.l.b16 %v964
    %v3925 = vunpack.c.l.b16 %v965
    %v3926 = vunpack.c.l.b16 %v966
    %v3927 = vunpack.c.l.b16 %v967
    %v3928 = vunpack.c.l.b16 %v968
    %v3929 = vunpack.c.l.b16 %v969
    %v3930 = vunpack.c.l.b16 %v970
    %v3931 = vunpack.c.l.b16 %v971
    %v3932 = vunpack.c.l.b16 %v972
    %v3933 = vunpack.c.l.b16 %v973
    %v3934 = vunpack.c.l.b16 %v974
    %v3935 = vunpack.c.l.b16 %v975
    %v3936 = vunpack.c.l.b16 %v976
    %v3937 = vunpack.c.l.b16 %v977
    %v3938 = vunpack.c.l.b16 %v978
    %v3939 = vunpack.c.l.b16 %v979
    %v3940 = vunpack.c.l.b16 %v980
    %v3941 = vunpack.c.l.b16 %v981
    %v3942 = vunpack.c.l.b16 %v982
    %v3943 = vunpack.c.l.b16 %v983
    %v3944 = vunpack.c.l.b16 %v984
    %v3945 = vunpack.c.l.b16 %v985
    %v3946 = vunpack.c.l.b16 %v986
    %v3947 = vunpack.c.l.b16 %v987
    %v3948 = vunpack.c.l.b16 %v988
    %v3949 = vunpack.c.l.b16 %v989
    %v3950 = vunpack.c.l.b16 %v990
    %v3951 = vunpack.c.l.b16 %v991
    %v3952 = vunpack.c.l.b16 %v992
    %v3953 = vunpack.c.l.b16 %v993
    %v3954 = vunpack.c.l.b16 %v994
    %v3955 = vunpack.c.l.b16 %v995
    %v3956 = vunpack.c.l.b16 %v996
    %v3957 = vunpack.c.l.b16 %v997
    %v3958 = vunpack.c.l.b16 %v998
    %v3959 = vunpack.c.l.b16 %v999
    %v3960 = vunpack.c.l.b16 %v1000
    %v3961 = vunpack.c.l.b16 %v1001
    %v3962 = vunpack.c.l.b16 %v1002
    %v3963 = vunpack.c.l.b16 %v1003
    %v3964 = vunpack.c.l.b16 %v1004
    %v3965 = vunpack.c.l.b16 %v1005
    %v3966 = vunpack.c.l.b16 %v1006
    %v3967 = vunpack.c.l.b16 %v1007
    %v3968 = vunpack.c.l.b16 %v1008
    %v3969 = vunpack.c.l.b16 %v1009
    %v3970 = vunpack.c.l.b16 %v1010
    %v3971 = vunpack.c.l.b16 %v1011
    %v3972 = vunpack.c.l.b16 %v1012
    %v3973 = vunpack.c.l.b16 %v1013
    %v3974 = vunpack.c.l.b16 %v1014
    %v3975 = vunpack.c.l.b16 %v1015
    %v3976 = vunpack.c.l.b16 %v1016
    %v3977 = vunpack.c.l.b16 %v1017
    %v3978 = vunpack.c.l.b16 %v1018
    %v3979 = vunpack.c.l.b16 %v1019
    %v3980 = vunpack.c.l.b16 %v1020
    %v3981 = vunpack.c.l.b16 %v1021
    %v3982 = vunpack.c.l.b16 %v1022
    %v3983 = vunpack.c.l.b16 %v1023
    %v3984 = vunpack.c.l.b16 %v1024
    %v3985 = vunpack.c.l.b16 %v1025
    %v3986 = vunpack.c.l.b16 %v1026
    %v3987 = vunpack.c.l.b16 %v1027
    %v3988 = vunpack.c.l.b16 %v1028
    %v3989 = vunpack.c.l.b16 %v1029
    %v3990 = vunpack.c.l.b16 %v1030
    %v3991 = vunpack.c.l.b16 %v1031
    %v3992 = vunpack.c.l.b16 %v1032
    %v3993 = vunpack.c.l.b16 %v1033
    %v3994 = vunpack.c.l.b16 %v1034
    %v3995 = vunpack.c.l.b16 %v1035
    %v3996 = vunpack.c.l.b16 %v1036
    %v3997 = vunpack.c.l.b16 %v1037
    %v3998 = vunpack.c.l.b16 %v1038
    %v3999 = vunpack.c.l.b16 %v1039
    %v4000 = vunpack.c.l.b16 %v1040
    %v4001 = vunpack.c.l.b16 %v1041
    %v4002 = vunpack.c.l.b16 %v1042
    %v4003 = vunpack.c.l.b16 %v1043
    %v4004 = vunpack.c.l.b16 %v1044
    %v4005 = vunpack.c.l.b16 %v1045
    %v4006 = vunpack.c.l.b16 %v1046
    %v4007 = vunpack.c.l.b16 %v1047
    %v4008 = vunpack.c.l.b16 %v1048
    %v4009 = vunpack.c.l.b16 %v1049
    %v4010 = vunpack.c.l.b16 %v1050
    %v4011 = vunpack.c.l.b16 %v1051
    %v4012 = vunpack.c.l.b16 %v1052
    %v4013 = vunpack.c.l.b16 %v1053
    %v4014 = vunpack.c.l.b16 %v1054
    %v4015 = vunpack.c.l.b16 %v1055
    %v4016 = vunpack.c.l.b16 %v1056
    %v4017 = vunpack.c.l.b16 %v1057
    %v4018 = vunpack.c.l.b16 %v1058
    %v4019 = vunpack.c.l.b16 %v1059
    %v4020 = vunpack.c.l.b16 %v1060
    %v4021 = vunpack.c.l.b16 %v1061
    %v4022 = vunpack.c.l.b16 %v1062
    %v4023 = vunpack.c.l.b16 %v1063
    %v4024 = vunpack.c.l.b16 %v1064
    %v4025 = vunpack.c.l.b16 %v1065
    %v4026 = vunpack.c.l.b16 %v1066
    %v4027 = vunpack.c.l.b16 %v1067
    %v4028 = vunpack.c.l.b16 %v1068
    %v4029 = vunpack.c.l.b16 %v1069
    %v4030 = vunpack.c.l.b16 %v1070
    %v4031 = vunpack.c.l.b16 %v1071
    %v4032 = vunpack.c.l.b16 %v1072
    %v4033 = vunpack.c.l.b16 %v1073
    %v4034 = vunpack.c.l.b16 %v1074
    %v4035 = vunpack.c.l.b16 %v1075
    %v4036 = vunpack.c.l.b16 %v1076
    %v4037 = vunpack.c.l.b16 %v1077
    %v4038 = vunpack.c.l.b16 %v1078
    %v4039 = vunpack.c.l.b16 %v1079
    %v4040 = vunpack.c.l.b16 %v1080
    %v4041 = vunpack.c.l.b16 %v1081
    %v4042 = vunpack.c.l.b16 %v1082
    %v4043 = vunpack.c.l.b16 %v1083
    %v4044 = vunpack.c.l.b16 %v1084
    %v4045 = vunpack.c.l.b16 %v1085
    %v4046 = vunpack.c.l.b16 %v1086
    %v4047 = vunpack.c.l.b16 %v1087
    %v4048 = vunpack.c.l.b16 %v1088
    %v4049 = vunpack.c.l.b16 %v1089
    %v4050 = vunpack.c.l.b16 %v1090
    %v4051 = vunpack.c.l.b16 %v1091
    %v4052 = vunpack.c.l.b16 %v1092
    %v4053 = vunpack.c.l.b16 %v1093
    %v4054 = vunpack.c.l.b16 %v1094
    %v4055 = vunpack.c.l.b16 %v1095
    %v4056 = vunpack.c.l.b16 %v1096
    %v4057 = vunpack.c.l.b16 %v1097
    %v4058 = vunpack.c.l.b16 %v1098
    %v4059 = vunpack.c.l.b16 %v1099
    %v4060 = vunpack.c.l.b16 %v1100
    %v4061 = vunpack.c.l.b16 %v1101
    %v4062 = vunpack.c.l.b16 %v1102
    %v4063 = vunpack.c.l.b16 %v1103
    %v4064 = vunpack.c.l.b16 %v1104
    %v4065 = vunpack.c.l.b16 %v1105
    %v4066 = vunpack.c.l.b16 %v1106
    %v4067 = vunpack.c.l.b16 %v1107
    %v4068 = vunpack.c.l.b16 %v1108
    %v4069 = vunpack.c.l.b16 %v1109
    %v4070 = vunpack.c.l.b16 %v1110
    %v4071 = vunpack.c.l.b16 %v1111
    %v4072 = vunpack.c.l.b16 %v1112
    %v4073 = vunpack.c.l.b16 %v1113
    %v4074 = vunpack.c.l.b16 %v1114
    %v4075 = vunpack.c.l.b16 %v1115
    %v4076 = vunpack.c.l.b16 %v1116
    %v4077 = vunpack.c.l.b16 %v1117
    %v4078 = vunpack.c.l.b16 %v1118
    %v4079 = vunpack.c.l.b16 %v1119
    %v4080 = vunpack.c.l.b16 %v1120
    %v4081 = vunpack.c.l.b16 %v1121
    %v4082 = vunpack.c.l.b16 %v1122
    %v4083 = vunpack.c.l.b16 %v1123
    %v4084 = vunpack.c.l.b16 %v1124
    %v4085 = vunpack.c.l.b16 %v1125
    %v4086 = vunpack.c.l.b16 %v1126
    %v4087 = vunpack.c.l.b16 %v1127
    %v4088 = vunpack.c.l.b16 %v1128
    %v4089 = vunpack.c.l.b16 %v1129
    %v4090 = vunpack.c.l.b16 %v1130
    %v4091 = vunpack.c.l.b16 %v1131
    %v4092 = vunpack.c.l.b16 %v1132
    %v4093 = vunpack.c.l.b16 %v1133
    %v4094 = vunpack.c.l.b16 %v1134
    %v4095 = vunpack.c.l.b16 %v1135
    %v4096 = vunpack.c.l.b16 %v1136
    %v4097 = vunpack.c.l.b16 %v1137
    %v4098 = vunpack.c.l.b16 %v1138
    %v4099 = vunpack.c.l.b16 %v1139
    %v4100 = vunpack.c.l.b16 %v1140
    %v4101 = vunpack.c.l.b16 %v1141
    %v4102 = vunpack.c.l.b16 %v1142
    %v4103 = vunpack.c.l.b16 %v1143
    %v4104 = vunpack.c.l.b16 %v1144
    %v4105 = vunpack.c.l.b16 %v1145
    %v4106 = vunpack.c.l.b16 %v1146
    %v4107 = vunpack.c.l.b16 %v1147
    %v4108 = vunpack.c.l.b16 %v1148
    %v4109 = vunpack.c.l.b16 %v1149
    %v4110 = vunpack.c.l.b16 %v1150
    %v4111 = vunpack.c.l.b16 %v1151
    %v4112 = vunpack.c.l.b16 %v1152
    %v4113 = vunpack.c.l.b16 %v1153
    %v4114 = vunpack.c.l.b16 %v1154
    %v4115 = vunpack.c.l.b16 %v1155
    %v4116 = vunpack.c.l.b16 %v1156
    %v4117 = vunpack.c.l.b16 %v1157
    %v4118 = vunpack.c.l.b16 %v1158
    %v4119 = vunpack.c.l.b16 %v1159
    %v4120 = vunpack.c.l.b16 %v1160
    %v4121 = vunpack.c.l.b16 %v1161
    %v4122 = vunpack.c.l.b16 %v1162
    %v4123 = vunpack.c.l.b16 %v1163
    %v4124 = vunpack.c.l.b16 %v1164
    %v4125 = vunpack.c.l.b16 %v1165
    %v4126 = vunpack.c.l.b16 %v1166
    %v4127 = vunpack.c.l.b16 %v1167
    %v4128 = vunpack.c.l.b16 %v1168
    %v4129 = vunpack.c.l.b16 %v1169
    %v4130 = vunpack.c.l.b16 %v1170
    %v4131 = vunpack.c.l.b16 %v1171
    %v4132 = vunpack.c.l.b16 %v1172
    %v4133 = vunpack.c.l.b16 %v1173
    %v4134 = vunpack.c.l.b16 %v1174
    %v4135 = vunpack.c.l.b16 %v1175
    %v4136 = vunpack.c.l.b16 %v1176
    %v4137 = vunpack.c.l.b16 %v1177
    %v4138 = vunpack.c.l.b16 %v1178
    %v4139 = vunpack.c.l.b16 %v1179
    %v4140 = vunpack.c.l.b16 %v1180
    %v4141 = vunpack.c.l.b16 %v1181
    %v4142 = vunpack.c.l.b16 %v1182
    %v4143 = vunpack.c.l.b16 %v1183
    %v4144 = vunpack.c.l.b16 %v1184
    %v4145 = vunpack.c.l.b16 %v1185
    %v4146 = vunpack.c.l.b16 %v1186
    %v4147 = vunpack.c.l.b16 %v1187
    %v4148 = vunpack.c.l.b16 %v1188
    %v4149 = vunpack.c.l.b16 %v1189
    %v4150 = vunpack.c.l.b16 %v1190
    %v4151 = vunpack.c.l.b16 %v1191
    %v4152 = vunpack.c.l.b16 %v1192
    %v4153 = vunpack.c.l.b16 %v1193
    %v4154 = vunpack.c.l.b16 %v1194
    %v4155 = vunpack.c.l.b16 %v1195
    %v4156 = vunpack.c.l.b16 %v1196
    %v4157 = vunpack.c.l.b16 %v1197
    %v4158 = vunpack.c.l.b16 %v1198
    %v4159 = vunpack.c.l.b16 %v1199
    %v4160 = vunpack.c.l.b16 %v1200
    %v4161 = vunpack.c.l.b16 %v1201
    %v4162 = vunpack.c.l.b16 %v1202
    %v4163 = vunpack.c.l.b16 %v1203
    %v4164 = vunpack.c.l.b16 %v1204
    %v4165 = vunpack.c.l.b16 %v1205
    %v4166 = vunpack.c.l.b16 %v1206
    %v4167 = vunpack.c.l.b16 %v1207
    %v4168 = vunpack.c.l.b16 %v1208
    %v4169 = vunpack.c.l.b16 %v1209
    %v4170 = vunpack.c.l.b16 %v1210
    %v4171 = vunpack.c.l.b16 %v1211
    %v4172 = vunpack.c.l.b16 %v1212
    %v4173 = vunpack.c.l.b16 %v1213
    %v4174 = vunpack.c.l.b16 %v1214
    %v4175 = vunpack.c.l.b16 %v1215
    %v4176 = vunpack.c.l.b16 %v1216
    %v4177 = vunpack.c.l.b16 %v1217
    %v4178 = vunpack.c.l.b16 %v1218
    %v4179 = vunpack.c.l.b16 %v1219
    %v4180 = vunpack.c.l.b16 %v1220
    %v4181 = vunpack.c.l.b16 %v1221
    %v4182 = vunpack.c.l.b16 %v1222
    %v4183 = vunpack.c.l.b16 %v1223
    %v4184 = vunpack.c.l.b16 %v1224
    %v4185 = vunpack.c.l.b16 %v1225
    %v4186 = vunpack.c.l.b16 %v1226
    %v4187 = vunpack.c.l.b16 %v1227
    %v4188 = vunpack.c.l.b16 %v1228
    %v4189 = vunpack.c.l.b16 %v1229
    %v4190 = vunpack.c.l.b16 %v1230
    %v4191 = vunpack.c.l.b16 %v1231
    %v4192 = vunpack.c.l.b16 %v1232
    %v4193 = vunpack.c.l.b16 %v1233
    %v4194 = vunpack.c.l.b16 %v1234
    %v4195 = vunpack.c.l.b16 %v1235
    %v4196 = vunpack.c.l.b16 %v1236
    %v4197 = vunpack.c.l.b16 %v1237
    %v4198 = vunpack.c.l.b16 %v1238
    %v4199 = vunpack.c.l.b16 %v1239
    %v4200 = vunpack.c.l.b16 %v1240
    %v4201 = vunpack.c.l.b16 %v1241
    %v4202 = vunpack.c.l.b16 %v1242
    %v4203 = vunpack.c.l.b16 %v1243
    %v4204 = vunpack.c.l.b16 %v1244
    %v4205 = vunpack.c.l.b16 %v1245
    %v4206 = vunpack.c.l.b16 %v1246
    %v4207 = vunpack.c.l.b16 %v1247
    %v4208 = vunpack.c.l.b16 %v1248
    %v4209 = vunpack.c.l.b16 %v1249
    %v4210 = vunpack.c.l.b16 %v1250
    %v4211 = vunpack.c.l.b16 %v1251
    %v4212 = vunpack.c.l.b16 %v1252
    %v4213 = vunpack.c.l.b16 %v1253
    %v4214 = vunpack.c.l.b16 %v1254
    %v4215 = vunpack.c.l.b16 %v1255
    %v4216 = vunpack.c.l.b16 %v1256
    %v4217 = vunpack.c.l.b16 %v1257
    %v4218 = vunpack.c.l.b16 %v1258
    %v4219 = vunpack.c.l.b16 %v1259
    %v4220 = vunpack.c.l.b16 %v1260
    %v4221 = vunpack.c.l.b16 %v1261
    %v4222 = vunpack.c.l.b16 %v1262
    %v4223 = vunpack.c.l.b16 %v1263
    %v4224 = vunpack.c.l.b16 %v1264
    %v4225 = vunpack.c.l.b16 %v1265
    %v4226 = vunpack.c.l.b16 %v1266
    %v4227 = vunpack.c.l.b16 %v1267
    %v4228 = vunpack.c.l.b16 %v1268
    %v4229 = vunpack.c.l.b16 %v1269
    %v4230 = vunpack.c.l.b16 %v1270
    %v4231 = vunpack.c.l.b16 %v1271
    %v4232 = vunpack.c.l.b16 %v1272
    %v4233 = vunpack.c.l.b16 %v1273
    %v4234 = vunpack.c.l.b16 %v1274
    %v4235 = vunpack.c.l.b16 %v1275
    %v4236 = vunpack.c.l.b16 %v1276
    %v4237 = vunpack.c.l.b16 %v1277
    %v4238 = vunpack.c.l.b16 %v1278
    %v4239 = vunpack.c.l.b16 %v1279
    %v4240 = vunpack.c.l.b16 %v1280
    %v4241 = vunpack.c.l.b16 %v1281
    %v4242 = vunpack.c.l.b16 %v1282
    %v4243 = vunpack.c.l.b16 %v1283
    %v4244 = vunpack.c.l.b16 %v1284
    %v4245 = vunpack.c.l.b16 %v1285
    %v4246 = vunpack.c.l.b16 %v1286
    %v4247 = vunpack.c.l.b16 %v1287
    %v4248 = vunpack.c.l.b16 %v1288
    %v4249 = vunpack.c.l.b16 %v1289
    %v4250 = vunpack.c.l.b16 %v1290
    %v4251 = vunpack.c.l.b16 %v1291
    %v4252 = vunpack.c.l.b16 %v1292
    %v4253 = vunpack.c.l.b16 %v1293
    %v4254 = vunpack.c.l.b16 %v1294
    %v4255 = vunpack.c.l.b16 %v1295
    %v4256 = vunpack.c.l.b16 %v1296
    %v4257 = vunpack.c.l.b16 %v1297
    %v4258 = vunpack.c.l.b16 %v1298
    %v4259 = vunpack.c.l.b16 %v1299
    %v4260 = vunpack.c.l.b16 %v1300
    %v4261 = vunpack.c.l.b16 %v1301
    %v4262 = vunpack.c.l.b16 %v1302
    %v4263 = vunpack.c.l.b16 %v1303
    %v4264 = vunpack.c.l.b16 %v1304
    %v4265 = vunpack.c.l.b16 %v1305
    %v4266 = vunpack.c.l.b16 %v1306
    %v4267 = vunpack.c.l.b16 %v1307
    %v4268 = vunpack.c.l.b16 %v1308
    %v4269 = vunpack.c.l.b16 %v1309
    %v4270 = vunpack.c.l.b16 %v1310
    %v4271 = vunpack.c.l.b16 %v1311
    %v4272 = vunpack.c.l.b16 %v1312
    %v4273 = vunpack.c.l.b16 %v1313
    %v4274 = vunpack.c.l.b16 %v1314
    %v4275 = vunpack.c.l.b16 %v1315
    %v4276 = vunpack.c.l.b16 %v1316
    %v4277 = vunpack.c.l.b16 %v1317
    %v4278 = vunpack.c.l.b16 %v1318
    %v4279 = vunpack.c.l.b16 %v1319
    %v4280 = vunpack.c.l.b16 %v1320
    %v4281 = vunpack.c.l.b16 %v1321
    %v4282 = vunpack.c.l.b16 %v1322
    %v4283 = vunpack.c.l.b16 %v1323
    %v4284 = vunpack.c.l.b16 %v1324
    %v4285 = vunpack.c.l.b16 %v1325
    %v4286 = vunpack.c.l.b16 %v1326
    %v4287 = vunpack.c.l.b16 %v1327
    %v4288 = vunpack.c.l.b16 %v1328
    %v4289 = vunpack.c.l.b16 %v1329
    %v4290 = vunpack.c.l.b16 %v1330
    %v4291 = vunpack.c.l.b16 %v1331
    %v4292 = vunpack.c.l.b16 %v1332
    %v4293 = vunpack.c.l.b16 %v1333
    %v4294 = vunpack.c.l.b16 %v1334
    %v4295 = vunpack.c.l.b16 %v1335
    %v4296 = vunpack.c.l.b16 %v1336
    %v4297 = vunpack.c.l.b16 %v1337
    %v4298 = vunpack.c.l.b16 %v1338
    %v4299 = vunpack.c.l.b16 %v1339
    %v4300 = vunpack.c.l.b16 %v1340
    %v4301 = vunpack.c.l.b16 %v1341
    %v4302 = vunpack.c.l.b16 %v1342
    %v4303 = vunpack.c.l.b16 %v1343
    %v4304 = vunpack.c.l.b16 %v1344
    %v4305 = vunpack.c.l.b16 %v1345
    %v4306 = vunpack.c.l.b16 %v1346
    %v4307 = vunpack.c.l.b16 %v1347
    %v4308 = vunpack.c.l.b16 %v1348
    %v4309 = vunpack.c.l.b16 %v1349
    %v4310 = vunpack.c.l.b16 %v1350
    %v4311 = vunpack.c.l.b16 %v1351
    %v4312 = vunpack.c.l.b16 %v1352
    %v4313 = vunpack.c.l.b16 %v1353
    %v4314 = vunpack.c.l.b16 %v1354
    %v4315 = vunpack.c.l.b16 %v1355
    %v4316 = vunpack.c.l.b16 %v1356
    %v4317 = vunpack.c.l.b16 %v1357
    %v4318 = vunpack.c.l.b16 %v1358
    %v4319 = vunpack.c.l.b16 %v1359
    %v4320 = vunpack.c.l.b16 %v1360
    %v4321 = vunpack.c.l.b16 %v1361
    %v4322 = vunpack.c.l.b16 %v1362
    %v4323 = vunpack.c.l.b16 %v1363
    %v4324 = vunpack.c.l.b16 %v1364
    %v4325 = vunpack.c.l.b16 %v1365
    %v4326 = vunpack.c.l.b16 %v1366
    %v4327 = vunpack.c.l.b16 %v1367
    %v4328 = vunpack.c.l.b16 %v1368
    %v4329 = vunpack.c.l.b16 %v1369
    %v4330 = vunpack.c.l.b16 %v1370
    %v4331 = vunpack.c.l.b16 %v1371
    %v4332 = vunpack.c.l.b16 %v1372
    %v4333 = vunpack.c.l.b16 %v1373
    %v4334 = vunpack.c.l.b16 %v1374
    %v4335 = vunpack.c.l.b16 %v1375
    %v4336 = vunpack.c.l.b16 %v1376
    %v4337 = vunpack.c.l.b16 %v1377
    %v4338 = vunpack.c.l.b16 %v1378
    %v4339 = vunpack.c.l.b16 %v1379
    %v4340 = vunpack.c.l.b16 %v1380
    %v4341 = vunpack.c.l.b16 %v1381
    %v4342 = vunpack.c.l.b16 %v1382
    %v4343 = vunpack.c.l.b16 %v1383
    %v4344 = vunpack.c.l.b16 %v1384
    %v4345 = vunpack.c.l.b16 %v1385
    %v4346 = vunpack.c.l.b16 %v1386
    %v4347 = vunpack.c.l.b16 %v1387
    %v4348 = vunpack.c.l.b16 %v1388
    %v4349 = vunpack.c.l.b16 %v1389
    %v4350 = vunpack.c.l.b16 %v1390
    %v4351 = vunpack.c.l.b16 %v1391
    %v4352 = vunpack.c.l.b16 %v1392
    %v4353 = vunpack.c.l.b16 %v1393
    %v4354 = vunpack.c.l.b16 %v1394
    %v4355 = vunpack.c.l.b16 %v1395
    %v4356 = vunpack.c.l.b16 %v1396
    %v4357 = vunpack.c.l.b16 %v1397
    %v4358 = vunpack.c.l.b16 %v1398
    %v4359 = vunpack.c.l.b16 %v1399
    %v4360 = vunpack.c.l.b16 %v1400
    %v4361 = vunpack.c.l.b16 %v1401
    %v4362 = vunpack.c.l.b16 %v1402
    %v4363 = vunpack.c.l.b16 %v1403
    %v4364 = vunpack.c.l.b16 %v1404
    %v4365 = vpack.c.b16 %v3086, %v3085
    %v4366 = vpack.c.b16 %v3088, %v3087
    %v4367 = vpack.c.b16 %v3090, %v3089
    %v4368 = vpack.c.b16 %v3092, %v3091
    %v4369 = vpack.c.b16 %v3094, %v3093
    %v4370 = vpack.c.b16 %v3096, %v3095
    %v4371 = vpack.c.b16 %v3098, %v3097
    %v4372 = vpack.c.b16 %v3100, %v3099
    %v4373 = vpack.c.b16 %v3102, %v3101
    %v4374 = vpack.c.b16 %v3104, %v3103
    %v4375 = vpack.c.b16 %v3106, %v3105
    %v4376 = vpack.c.b16 %v3108, %v3107
    %v4377 = vpack.c.b16 %v3110, %v3109
    %v4378 = vpack.c.b16 %v3112, %v3111
    %v4379 = vpack.c.b16 %v3114, %v3113
    %v4380 = vpack.c.b16 %v3116, %v3115
    %v4381 = vpack.c.b16 %v3118, %v3117
    %v4382 = vpack.c.b16 %v3120, %v3119
    %v4383 = vpack.c.b16 %v3122, %v3121
    %v4384 = vpack.c.b16 %v3124, %v3123
    %v4385 = vpack.c.b16 %v3126, %v3125
    %v4386 = vpack.c.b16 %v3128, %v3127
    %v4387 = vpack.c.b16 %v3130, %v3129
    %v4388 = vpack.c.b16 %v3132, %v3131
    %v4389 = vpack.c.b16 %v3134, %v3133
    %v4390 = vpack.c.b16 %v3136, %v3135
    %v4391 = vpack.c.b16 %v3138, %v3137
    %v4392 = vpack.c.b16 %v3140, %v3139
    %v4393 = vpack.c.b16 %v3142, %v3141
    %v4394 = vpack.c.b16 %v3144, %v3143
    %v4395 = vpack.c.b16 %v3146, %v3145
    %v4396 = vpack.c.b16 %v3148, %v3147
    %v4397 = vpack.c.b16 %v3150, %v3149
    %v4398 = vpack.c.b16 %v3152, %v3151
    %v4399 = vpack.c.b16 %v3154, %v3153
    %v4400 = vpack.c.b16 %v3156, %v3155
    %v4401 = vpack.c.b16 %v3158, %v3157
    %v4402 = vpack.c.b16 %v3160, %v3159
    %v4403 = vpack.c.b16 %v3162, %v3161
    %v4404 = vpack.c.b16 %v3164, %v3163
    %v4405 = vpack.c.b16 %v3166, %v3165
    %v4406 = vpack.c.b16 %v3168, %v3167
    %v4407 = vpack.c.b16 %v3170, %v3169
    %v4408 = vpack.c.b16 %v3172, %v3171
    %v4409 = vpack.c.b16 %v3174, %v3173
    %v4410 = vpack.c.b16 %v3176, %v3175
    %v4411 = vpack.c.b16 %v3178, %v3177
    %v4412 = vpack.c.b16 %v3180, %v3179
    %v4413 = vpack.c.b16 %v3182, %v3181
    %v4414 = vpack.c.b16 %v3184, %v3183
    %v4415 = vpack.c.b16 %v3186, %v3185
    %v4416 = vpack.c.b16 %v3188, %v3187
    %v4417 = vpack.c.b16 %v3190, %v3189
    %v4418 = vpack.c.b16 %v3192, %v3191
    %v4419 = vpack.c.b16 %v3194, %v3193
    %v4420 = vpack.c.b16 %v3196, %v3195
    %v4421 = vpack.c.b16 %v3198, %v3197
    %v4422 = vpack.c.b16 %v3200, %v3199
    %v4423 = vpack.c.b16 %v3202, %v3201
    %v4424 = vpack.c.b16 %v3204, %v3203
    %v4425 = vpack.c.b16 %v3206, %v3205
    %v4426 = vpack.c.b16 %v3208, %v3207
    %v4427 = vpack.c.b16 %v3210, %v3209
    %v4428 = vpack.c.b16 %v3212, %v3211
    %v4429 = vpack.c.b16 %v3214, %v3213
    %v4430 = vpack.c.b16 %v3216, %v3215
    %v4431 = vpack.c.b16 %v3218, %v3217
    %v4432 = vpack.c.b16 %v3220, %v3219
    %v4433 = vpack.c.b16 %v3222, %v3221
    %v4434 = vpack.c.b16 %v3224, %v3223
    %v4435 = vpack.c.b16 %v3226, %v3225
    %v4436 = vpack.c.b16 %v3228, %v3227
    %v4437 = vpack.c.b16 %v3230, %v3229
    %v4438 = vpack.c.b16 %v3232, %v3231
    %v4439 = vpack.c.b16 %v3234, %v3233
    %v4440 = vpack.c.b16 %v3236, %v3235
    %v4441 = vpack.c.b16 %v3238, %v3237
    %v4442 = vpack.c.b16 %v3240, %v3239
    %v4443 = vpack.c.b16 %v3242, %v3241
    %v4444 = vpack.c.b16 %v3244, %v3243
    %v4445 = vpack.c.b16 %v3246, %v3245
    %v4446 = vpack.c.b16 %v3248, %v3247
    %v4447 = vpack.c.b16 %v3250, %v3249
    %v4448 = vpack.c.b16 %v3252, %v3251
    %v4449 = vpack.c.b16 %v3254, %v3253
    %v4450 = vpack.c.b16 %v3256, %v3255
    %v4451 = vpack.c.b16 %v3258, %v3257
    %v4452 = vpack.c.b16 %v3260, %v3259
    %v4453 = vpack.c.b16 %v3262, %v3261
    %v4454 = vpack.c.b16 %v3264, %v3263
    %v4455 = vpack.c.b16 %v3266, %v3265
    %v4456 = vpack.c.b16 %v3268, %v3267
    %v4457 = vpack.c.b16 %v3270, %v3269
    %v4458 = vpack.c.b16 %v3272, %v3271
    %v4459 = vpack.c.b16 %v3274, %v3273
    %v4460 = vpack.c.b16 %v3276, %v3275
    %v4461 = vpack.c.b16 %v3278, %v3277
    %v4462 = vpack.c.b16 %v3280, %v3279
    %v4463 = vpack.c.b16 %v3282, %v3281
    %v4464 = vpack.c.b16 %v3284, %v3283
    %v4465 = vpack.c.b16 %v3286, %v3285
    %v4466 = vpack.c.b16 %v3288, %v3287
    %v4467 = vpack.c.b16 %v3290, %v3289
    %v4468 = vpack.c.b16 %v3292, %v3291
    %v4469 = vpack.c.b16 %v3294, %v3293
    %v4470 = vpack.c.b16 %v3296, %v3295
    %v4471 = vpack.c.b16 %v3298, %v3297
    %v4472 = vpack.c.b16 %v3300, %v3299
    %v4473 = vpack.c.b16 %v3302, %v3301
    %v4474 = vpack.c.b16 %v3304, %v3303
    %v4475 = vpack.c.b16 %v3306, %v3305
    %v4476 = vpack.c.b16 %v3308, %v3307
    %v4477 = vpack.c.b16 %v3310, %v3309
    %v4478 = vpack.c.b16 %v3312, %v3311
    %v4479 = vpack.c.b16 %v3314, %v3313
    %v4480 = vpack.c.b16 %v3316, %v3315
    %v4481 = vpack.c.b16 %v3318, %v3317
    %v4482 = vpack.c.b16 %v3320, %v3319
    %v4483 = vpack.c.b16 %v3322, %v3321
    %v4484 = vpack.c.b16 %v3324, %v3323
    %v4485 = vpack.c.b16 %v3326, %v3325
    %v4486 = vpack.c.b16 %v3328, %v3327
    %v4487 = vpack.c.b16 %v3330, %v3329
    %v4488 = vpack.c.b16 %v3332, %v3331
    %v4489 = vpack.c.b16 %v3334, %v3333
    %v4490 = vpack.c.b16 %v3336, %v3335
    %v4491 = vpack.c.b16 %v3338, %v3337
    %v4492 = vpack.c.b16 %v3340, %v3339
    %v4493 = vpack.c.b16 %v3342, %v3341
    %v4494 = vpack.c.b16 %v3344, %v3343
    %v4495 = vpack.c.b16 %v3346, %v3345
    %v4496 = vpack.c.b16 %v3348, %v3347
    %v4497 = vpack.c.b16 %v3350, %v3349
    %v4498 = vpack.c.b16 %v3352, %v3351
    %v4499 = vpack.c.b16 %v3354, %v3353
    %v4500 = vpack.c.b16 %v3356, %v3355
    %v4501 = vpack.c.b16 %v3358, %v3357
    %v4502 = vpack.c.b16 %v3360, %v3359
    %v4503 = vpack.c.b16 %v3362, %v3361
    %v4504 = vpack.c.b16 %v3364, %v3363
    %v4505 = vpack.c.b16 %v3366, %v3365
    %v4506 = vpack.c.b16 %v3368, %v3367
    %v4507 = vpack.c.b16 %v3370, %v3369
    %v4508 = vpack.c.b16 %v3372, %v3371
    %v4509 = vpack.c.b16 %v3374, %v3373
    %v4510 = vpack.c.b16 %v3376, %v3375
    %v4511 = vpack.c.b16 %v3378, %v3377
    %v4512 = vpack.c.b16 %v3380, %v3379
    %v4513 = vpack.c.b16 %v3382, %v3381
    %v4514 = vpack.c.b16 %v3384, %v3383
    %v4515 = vpack.c.b16 %v3386, %v3385
    %v4516 = vpack.c.b16 %v3388, %v3387
    %v4517 = vpack.c.b16 %v3390, %v3389
    %v4518 = vpack.c.b16 %v3392, %v3391
    %v4519 = vpack.c.b16 %v3394, %v3393
    %v4520 = vpack.c.b16 %v3396, %v3395
    %v4521 = vpack.c.b16 %v3398, %v3397
    %v4522 = vpack.c.b16 %v3400, %v3399
    %v4523 = vpack.c.b16 %v3402, %v3401
    %v4524 = vpack.c.b16 %v3404, %v3403
    %v4525 = vpack.c.b16 %v3406, %v3405
    %v4526 = vpack.c.b16 %v3408, %v3407
    %v4527 = vpack.c.b16 %v3410, %v3409
    %v4528 = vpack.c.b16 %v3412, %v3411
    %v4529 = vpack.c.b16 %v3414, %v3413
    %v4530 = vpack.c.b16 %v3416, %v3415
    %v4531 = vpack.c.b16 %v3418, %v3417
    %v4532 = vpack.c.b16 %v3420, %v3419
    %v4533 = vpack.c.b16 %v3422, %v3421
    %v4534 = vpack.c.b16 %v3424, %v3423
    %v4535 = vpack.c.b16 %v3426, %v3425
    %v4536 = vpack.c.b16 %v3428, %v3427
    %v4537 = vpack.c.b16 %v3430, %v3429
    %v4538 = vpack.c.b16 %v3432, %v3431
    %v4539 = vpack.c.b16 %v3434, %v3433
    %v4540 = vpack.c.b16 %v3436, %v3435
    %v4541 = vpack.c.b16 %v3438, %v3437
    %v4542 = vpack.c.b16 %v3440, %v3439
    %v4543 = vpack.c.b16 %v3442, %v3441
    %v4544 = vpack.c.b16 %v3444, %v3443
    %v4545 = vpack.c.b16 %v3446, %v3445
    %v4546 = vpack.c.b16 %v3448, %v3447
    %v4547 = vpack.c.b16 %v3450, %v3449
    %v4548 = vpack.c.b16 %v3452, %v3451
    %v4549 = vpack.c.b16 %v3454, %v3453
    %v4550 = vpack.c.b16 %v3456, %v3455
    %v4551 = vpack.c.b16 %v3458, %v3457
    %v4552 = vpack.c.b16 %v3460, %v3459
    %v4553 = vpack.c.b16 %v3462, %v3461
    %v4554 = vpack.c.b16 %v3464, %v3463
    %v4555 = vpack.c.b16 %v3466, %v3465
    %v4556 = vpack.c.b16 %v3468, %v3467
    %v4557 = vpack.c.b16 %v3470, %v3469
    %v4558 = vpack.c.b16 %v3472, %v3471
    %v4559 = vpack.c.b16 %v3474, %v3473
    %v4560 = vpack.c.b16 %v3476, %v3475
    %v4561 = vpack.c.b16 %v3478, %v3477
    %v4562 = vpack.c.b16 %v3480, %v3479
    %v4563 = vpack.c.b16 %v3482, %v3481
    %v4564 = vpack.c.b16 %v3484, %v3483
    %v4565 = vpack.c.b16 %v3486, %v3485
    %v4566 = vpack.c.b16 %v3488, %v3487
    %v4567 = vpack.c.b16 %v3490, %v3489
    %v4568 = vpack.c.b16 %v3492, %v3491
    %v4569 = vpack.c.b16 %v3494, %v3493
    %v4570 = vpack.c.b16 %v3496, %v3495
    %v4571 = vpack.c.b16 %v3498, %v3497
    %v4572 = vpack.c.b16 %v3500, %v3499
    %v4573 = vpack.c.b16 %v3502, %v3501
    %v4574 = vpack.c.b16 %v3504, %v3503
    %v4575 = vpack.c.b16 %v3506, %v3505
    %v4576 = vpack.c.b16 %v3508, %v3507
    %v4577 = vpack.c.b16 %v3510, %v3509
    %v4578 = vpack.c.b16 %v3512, %v3511
    %v4579 = vpack.c.b16 %v3514, %v3513
    %v4580 = vpack.c.b16 %v3516, %v3515
    %v4581 = vpack.c.b16 %v3518, %v3517
    %v4582 = vpack.c.b16 %v3520, %v3519
    %v4583 = vpack.c.b16 %v3522, %v3521
    %v4584 = vpack.c.b16 %v3524, %v3523
    %v4585 = vpack.c.b16 %v3526, %v3525
    %v4586 = vpack.c.b16 %v3528, %v3527
    %v4587 = vpack.c.b16 %v3530, %v3529
    %v4588 = vpack.c.b16 %v3532, %v3531
    %v4589 = vpack.c.b16 %v3534, %v3533
    %v4590 = vpack.c.b16 %v3536, %v3535
    %v4591 = vpack.c.b16 %v3538, %v3537
    %v4592 = vpack.c.b16 %v3540, %v3539
    %v4593 = vpack.c.b16 %v3542, %v3541
    %v4594 = vpack.c.b16 %v3544, %v3543
    %v4595 = vpack.c.b16 %v3546, %v3545
    %v4596 = vpack.c.b16 %v3548, %v3547
    %v4597 = vpack.c.b16 %v3550, %v3549
    %v4598 = vpack.c.b16 %v3552, %v3551
    %v4599 = vpack.c.b16 %v3554, %v3553
    %v4600 = vpack.c.b16 %v3556, %v3555
    %v4601 = vpack.c.b16 %v3558, %v3557
    %v4602 = vpack.c.b16 %v3560, %v3559
    %v4603 = vpack.c.b16 %v3562, %v3561
    %v4604 = vpack.c.b16 %v3564, %v3563
    %v4605 = vpack.c.b16 %v3566, %v3565
    %v4606 = vpack.c.b16 %v3568, %v3567
    %v4607 = vpack.c.b16 %v3570, %v3569
    %v4608 = vpack.c.b16 %v3572, %v3571
    %v4609 = vpack.c.b16 %v3574, %v3573
    %v4610 = vpack.c.b16 %v3576, %v3575
    %v4611 = vpack.c.b16 %v3578, %v3577
    %v4612 = vpack.c.b16 %v3580, %v3579
    %v4613 = vpack.c.b16 %v3582, %v3581
    %v4614 = vpack.c.b16 %v3584, %v3583
    %v4615 = vpack.c.b16 %v3586, %v3585
    %v4616 = vpack.c.b16 %v3588, %v3587
    %v4617 = vpack.c.b16 %v3590, %v3589
    %v4618 = vpack.c.b16 %v3592, %v3591
    %v4619 = vpack.c.b16 %v3594, %v3593
    %v4620 = vpack.c.b16 %v3596, %v3595
    %v4621 = vpack.c.b16 %v3598, %v3597
    %v4622 = vpack.c.b16 %v3600, %v3599
    %v4623 = vpack.c.b16 %v3602, %v3601
    %v4624 = vpack.c.b16 %v3604, %v3603
    %v4625 = vpack.c.b16 %v3606, %v3605
    %v4626 = vpack.c.b16 %v3608, %v3607
    %v4627 = vpack.c.b16 %v3610, %v3609
    %v4628 = vpack.c.b16 %v3612, %v3611
    %v4629 = vpack.c.b16 %v3614, %v3613
    %v4630 = vpack.c.b16 %v3616, %v3615
    %v4631 = vpack.c.b16 %v3618, %v3617
    %v4632 = vpack.c.b16 %v3620, %v3619
    %v4633 = vpack.c.b16 %v3622, %v3621
    %v4634 = vpack.c.b16 %v3624, %v3623
    %v4635 = vpack.c.b16 %v3626, %v3625
    %v4636 = vpack.c.b16 %v3628, %v3627
    %v4637 = vpack.c.b16 %v3630, %v3629
    %v4638 = vpack.c.b16 %v3632, %v3631
    %v4639 = vpack.c.b16 %v3634, %v3633
    %v4640 = vpack.c.b16 %v3636, %v3635
    %v4641 = vpack.c.b16 %v3638, %v3637
    %v4642 = vpack.c.b16 %v3640, %v3639
    %v4643 = vpack.c.b16 %v3642, %v3641
    %v4644 = vpack.c.b16 %v3644, %v3643
    %v4645 = vpack.c.b16 %v3646, %v3645
    %v4646 = vpack.c.b16 %v3648, %v3647
    %v4647 = vpack.c.b16 %v3650, %v3649
    %v4648 = vpack.c.b16 %v3652, %v3651
    %v4649 = vpack.c.b16 %v3654, %v3653
    %v4650 = vpack.c.b16 %v3656, %v3655
    %v4651 = vpack.c.b16 %v3658, %v3657
    %v4652 = vpack.c.b16 %v3660, %v3659
    %v4653 = vpack.c.b16 %v3662, %v3661
    %v4654 = vpack.c.b16 %v3664, %v3663
    %v4655 = vpack.c.b16 %v3666, %v3665
    %v4656 = vpack.c.b16 %v3668, %v3667
    %v4657 = vpack.c.b16 %v3670, %v3669
    %v4658 = vpack.c.b16 %v3672, %v3671
    %v4659 = vpack.c.b16 %v3674, %v3673
    %v4660 = vpack.c.b16 %v3676, %v3675
    %v4661 = vpack.c.b16 %v3678, %v3677
    %v4662 = vpack.c.b16 %v3680, %v3679
    %v4663 = vpack.c.b16 %v3682, %v3681
    %v4664 = vpack.c.b16 %v3684, %v3683
    %v4665 = vpack.c.b16 %v3686, %v3685
    %v4666 = vpack.c.b16 %v3688, %v3687
    %v4667 = vpack.c.b16 %v3690, %v3689
    %v4668 = vpack.c.b16 %v3692, %v3691
    %v4669 = vpack.c.b16 %v3694, %v3693
    %v4670 = vpack.c.b16 %v3696, %v3695
    %v4671 = vpack.c.b16 %v3698, %v3697
    %v4672 = vpack.c.b16 %v3700, %v3699
    %v4673 = vpack.c.b16 %v3702, %v3701
    %v4674 = vpack.c.b16 %v3704, %v3703
    %v4675 = vpack.c.b16 %v3706, %v3705
    %v4676 = vpack.c.b16 %v3708, %v3707
    %v4677 = vpack.c.b16 %v3710, %v3709
    %v4678 = vpack.c.b16 %v3712, %v3711
    %v4679 = vpack.c.b16 %v3714, %v3713
    %v4680 = vpack.c.b16 %v3716, %v3715
    %v4681 = vpack.c.b16 %v3718, %v3717
    %v4682 = vpack.c.b16 %v3720, %v3719
    %v4683 = vpack.c.b16 %v3722, %v3721
    %v4684 = vpack.c.b16 %v3724, %v3723
    %v4685 = vpack.c.b16 %v3726, %v3725
    %v4686 = vpack.c.b16 %v3728, %v3727
    %v4687 = vpack.c.b16 %v3730, %v3729
    %v4688 = vpack.c.b16 %v3732, %v3731
    %v4689 = vpack.c.b16 %v3734, %v3733
    %v4690 = vpack.c.b16 %v3736, %v3735
    %v4691 = vpack.c.b16 %v3738, %v3737
    %v4692 = vpack.c.b16 %v3740, %v3739
    %v4693 = vpack.c.b16 %v3742, %v3741
    %v4694 = vpack.c.b16 %v3744, %v3743
    %v4695 = vpack.c.b16 %v3746, %v3745
    %v4696 = vpack.c.b16 %v3748, %v3747
    %v4697 = vpack.c.b16 %v3750, %v3749
    %v4698 = vpack.c.b16 %v3752, %v3751
    %v4699 = vpack.c.b16 %v3754, %v3753
    %v4700 = vpack.c.b16 %v3756, %v3755
    %v4701 = vpack.c.b16 %v3758, %v3757
    %v4702 = vpack.c.b16 %v3760, %v3759
    %v4703 = vpack.c.b16 %v3762, %v3761
    %v4704 = vpack.c.b16 %v3764, %v3763
    %v4705 = vpack.c.b16 %v3766, %v3765
    %v4706 = vpack.c.b16 %v3768, %v3767
    %v4707 = vpack.c.b16 %v3770, %v3769
    %v4708 = vpack.c.b16 %v3772, %v3771
    %v4709 = vpack.c.b16 %v3774, %v3773
    %v4710 = vpack.c.b16 %v3776, %v3775
    %v4711 = vpack.c.b16 %v3778, %v3777
    %v4712 = vpack.c.b16 %v3780, %v3779
    %v4713 = vpack.c.b16 %v3782, %v3781
    %v4714 = vpack.c.b16 %v3784, %v3783
    %v4715 = vpack.c.b16 %v3786, %v3785
    %v4716 = vpack.c.b16 %v3788, %v3787
    %v4717 = vpack.c.b16 %v3790, %v3789
    %v4718 = vpack.c.b16 %v3792, %v3791
    %v4719 = vpack.c.b16 %v3794, %v3793
    %v4720 = vpack.c.b16 %v3796, %v3795
    %v4721 = vpack.c.b16 %v3798, %v3797
    %v4722 = vpack.c.b16 %v3800, %v3799
    %v4723 = vpack.c.b16 %v3802, %v3801
    %v4724 = vpack.c.b16 %v3804, %v3803
    %v4725 = vpack.c.b16 %v3806, %v3805
    %v4726 = vpack.c.b16 %v3808, %v3807
    %v4727 = vpack.c.b16 %v3810, %v3809
    %v4728 = vpack.c.b16 %v3812, %v3811
    %v4729 = vpack.c.b16 %v3814, %v3813
    %v4730 = vpack.c.b16 %v3816, %v3815
    %v4731 = vpack.c.b16 %v3818, %v3817
    %v4732 = vpack.c.b16 %v3820, %v3819
    %v4733 = vpack.c.b16 %v3822, %v3821
    %v4734 = vpack.c.b16 %v3824, %v3823
    %v4735 = vpack.c.b16 %v3826, %v3825
    %v4736 = vpack.c.b16 %v3828, %v3827
    %v4737 = vpack.c.b16 %v3830, %v3829
    %v4738 = vpack.c.b16 %v3832, %v3831
    %v4739 = vpack.c.b16 %v3834, %v3833
    %v4740 = vpack.c.b16 %v3836, %v3835
    %v4741 = vpack.c.b16 %v3838, %v3837
    %v4742 = vpack.c.b16 %v3840, %v3839
    %v4743 = vpack.c.b16 %v3842, %v3841
    %v4744 = vpack.c.b16 %v3844, %v3843
    %v4745 = vpack.c.b16 %v3846, %v3845
    %v4746 = vpack.c.b16 %v3848, %v3847
    %v4747 = vpack.c.b16 %v3850, %v3849
    %v4748 = vpack.c.b16 %v3852, %v3851
    %v4749 = vpack.c.b16 %v3854, %v3853
    %v4750 = vpack.c.b16 %v3856, %v3855
    %v4751 = vpack.c.b16 %v3858, %v3857
    %v4752 = vpack.c.b16 %v3860, %v3859
    %v4753 = vpack.c.b16 %v3862, %v3861
    %v4754 = vpack.c.b16 %v3864, %v3863
    %v4755 = vpack.c.b16 %v3866, %v3865
    %v4756 = vpack.c.b16 %v3868, %v3867
    %v4757 = vpack.c.b16 %v3870, %v3869
    %v4758 = vpack.c.b16 %v3872, %v3871
    %v4759 = vpack.c.b16 %v3874, %v3873
    %v4760 = vpack.c.b16 %v3876, %v3875
    %v4761 = vpack.c.b16 %v3878, %v3877
    %v4762 = vpack.c.b16 %v3880, %v3879
    %v4763 = vpack.c.b16 %v3882, %v3881
    %v4764 = vpack.c.b16 %v3884, %v3883
    %v4765 = vpack.c.b16 %v3886, %v3885
    %v4766 = vpack.c.b16 %v3888, %v3887
    %v4767 = vpack.c.b16 %v3890, %v3889
    %v4768 = vpack.c.b16 %v3892, %v3891
    %v4769 = vpack.c.b16 %v3894, %v3893
    %v4770 = vpack.c.b16 %v3896, %v3895
    %v4771 = vpack.c.b16 %v3898, %v3897
    %v4772 = vpack.c.b16 %v3900, %v3899
    %v4773 = vpack.c.b16 %v3902, %v3901
    %v4774 = vpack.c.b16 %v3904, %v3903
    %v4775 = vpack.c.b16 %v3906, %v3905
    %v4776 = vpack.c.b16 %v3908, %v3907
    %v4777 = vpack.c.b16 %v3910, %v3909
    %v4778 = vpack.c.b16 %v3912, %v3911
    %v4779 = vpack.c.b16 %v3914, %v3913
    %v4780 = vpack.c.b16 %v3916, %v3915
    %v4781 = vpack.c.b16 %v3918, %v3917
    %v4782 = vpack.c.b16 %v3920, %v3919
    %v4783 = vpack.c.b16 %v3922, %v3921
    %v4784 = vpack.c.b16 %v3924, %v3923
    %v4785 = vpack.c.b16 %v3926, %v3925
    %v4786 = vpack.c.b16 %v3928, %v3927
    %v4787 = vpack.c.b16 %v3930, %v3929
    %v4788 = vpack.c.b16 %v3932, %v3931
    %v4789 = vpack.c.b16 %v3934, %v3933
    %v4790 = vpack.c.b16 %v3936, %v3935
    %v4791 = vpack.c.b16 %v3938, %v3937
    %v4792 = vpack.c.b16 %v3940, %v3939
    %v4793 = vpack.c.b16 %v3942, %v3941
    %v4794 = vpack.c.b16 %v3944, %v3943
    %v4795 = vpack.c.b16 %v3946, %v3945
    %v4796 = vpack.c.b16 %v3948, %v3947
    %v4797 = vpack.c.b16 %v3950, %v3949
    %v4798 = vpack.c.b16 %v3952, %v3951
    %v4799 = vpack.c.b16 %v3954, %v3953
    %v4800 = vpack.c.b16 %v3956, %v3955
    %v4801 = vpack.c.b16 %v3958, %v3957
    %v4802 = vpack.c.b16 %v3960, %v3959
    %v4803 = vpack.c.b16 %v3962, %v3961
    %v4804 = vpack.c.b16 %v3964, %v3963
    %v4805 = vpack.c.b16 %v3966, %v3965
    %v4806 = vpack.c.b16 %v3968, %v3967
    %v4807 = vpack.c.b16 %v3970, %v3969
    %v4808 = vpack.c.b16 %v3972, %v3971
    %v4809 = vpack.c.b16 %v3974, %v3973
    %v4810 = vpack.c.b16 %v3976, %v3975
    %v4811 = vpack.c.b16 %v3978, %v3977
    %v4812 = vpack.c.b16 %v3980, %v3979
    %v4813 = vpack.c.b16 %v3982, %v3981
    %v4814 = vpack.c.b16 %v3984, %v3983
    %v4815 = vpack.c.b16 %v3986, %v3985
    %v4816 = vpack.c.b16 %v3988, %v3987
    %v4817 = vpack.c.b16 %v3990, %v3989
    %v4818 = vpack.c.b16 %v3992, %v3991
    %v4819 = vpack.c.b16 %v3994, %v3993
    %v4820 = vpack.c.b16 %v3996, %v3995
    %v4821 = vpack.c.b16 %v3998, %v3997
    %v4822 = vpack.c.b16 %v4000, %v3999
    %v4823 = vpack.c.b16 %v4002, %v4001
    %v4824 = vpack.c.b16 %v4004, %v4003
    %v4825 = vpack.c.b16 %v4006, %v4005
    %v4826 = vpack.c.b16 %v4008, %v4007
    %v4827 = vpack.c.b16 %v4010, %v4009
    %v4828 = vpack.c.b16 %v4012, %v4011
    %v4829 = vpack.c.b16 %v4014, %v4013
    %v4830 = vpack.c.b16 %v4016, %v4015
    %v4831 = vpack.c.b16 %v4018, %v4017
    %v4832 = vpack.c.b16 %v4020, %v4019
    %v4833 = vpack.c.b16 %v4022, %v4021
    %v4834 = vpack.c.b16 %v4024, %v4023
    %v4835 = vpack.c.b16 %v4026, %v4025
    %v4836 = vpack.c.b16 %v4028, %v4027
    %v4837 = vpack.c.b16 %v4030, %v4029
    %v4838 = vpack.c.b16 %v4032, %v4031
    %v4839 = vpack.c.b16 %v4034, %v4033
    %v4840 = vpack.c.b16 %v4036, %v4035
    %v4841 = vpack.c.b16 %v4038, %v4037
    %v4842 = vpack.c.b16 %v4040, %v4039
    %v4843 = vpack.c.b16 %v4042, %v4041
    %v4844 = vpack.c.b16 %v4044, %v4043
    %v4845 = vpack.c.b16 %v4046, %v4045
    %v4846 = vpack.c.b16 %v4048, %v4047
    %v4847 = vpack.c.b16 %v4050, %v4049
    %v4848 = vpack.c.b16 %v4052, %v4051
    %v4849 = vpack.c.b16 %v4054, %v4053
    %v4850 = vpack.c.b16 %v4056, %v4055
    %v4851 = vpack.c.b16 %v4058, %v4057
    %v4852 = vpack.c.b16 %v4060, %v4059
    %v4853 = vpack.c.b16 %v4062, %v4061
    %v4854 = vpack.c.b16 %v4064, %v4063
    %v4855 = vpack.c.b16 %v4066, %v4065
    %v4856 = vpack.c.b16 %v4068, %v4067
    %v4857 = vpack.c.b16 %v4070, %v4069
    %v4858 = vpack.c.b16 %v4072, %v4071
    %v4859 = vpack.c.b16 %v4074, %v4073
    %v4860 = vpack.c.b16 %v4076, %v4075
    %v4861 = vpack.c.b16 %v4078, %v4077
    %v4862 = vpack.c.b16 %v4080, %v4079
    %v4863 = vpack.c.b16 %v4082, %v4081
    %v4864 = vpack.c.b16 %v4084, %v4083
    %v4865 = vpack.c.b16 %v4086, %v4085
    %v4866 = vpack.c.b16 %v4088, %v4087
    %v4867 = vpack.c.b16 %v4090, %v4089
    %v4868 = vpack.c.b16 %v4092, %v4091
    %v4869 = vpack.c.b16 %v4094, %v4093
    %v4870 = vpack.c.b16 %v4096, %v4095
    %v4871 = vpack.c.b16 %v4098, %v4097
    %v4872 = vpack.c.b16 %v4100, %v4099
    %v4873 = vpack.c.b16 %v4102, %v4101
    %v4874 = vpack.c.b16 %v4104, %v4103
    %v4875 = vpack.c.b16 %v4106, %v4105
    %v4876 = vpack.c.b16 %v4108, %v4107
    %v4877 = vpack.c.b16 %v4110, %v4109
    %v4878 = vpack.c.b16 %v4112, %v4111
    %v4879 = vpack.c.b16 %v4114, %v4113
    %v4880 = vpack.c.b16 %v4116, %v4115
    %v4881 = vpack.c.b16 %v4118, %v4117
    %v4882 = vpack.c.b16 %v4120, %v4119
    %v4883 = vpack.c.b16 %v4122, %v4121
    %v4884 = vpack.c.b16 %v4124, %v4123
    %v4885 = vpack.c.b16 %v4126, %v4125
    %v4886 = vpack.c.b16 %v4128, %v4127
    %v4887 = vpack.c.b16 %v4130, %v4129
    %v4888 = vpack.c.b16 %v4132, %v4131
    %v4889 = vpack.c.b16 %v4134, %v4133
    %v4890 = vpack.c.b16 %v4136, %v4135
    %v4891 = vpack.c.b16 %v4138, %v4137
    %v4892 = vpack.c.b16 %v4140, %v4139
    %v4893 = vpack.c.b16 %v4142, %v4141
    %v4894 = vpack.c.b16 %v4144, %v4143
    %v4895 = vpack.c.b16 %v4146, %v4145
    %v4896 = vpack.c.b16 %v4148, %v4147
    %v4897 = vpack.c.b16 %v4150, %v4149
    %v4898 = vpack.c.b16 %v4152, %v4151
    %v4899 = vpack.c.b16 %v4154, %v4153
    %v4900 = vpack.c.b16 %v4156, %v4155
    %v4901 = vpack.c.b16 %v4158, %v4157
    %v4902 = vpack.c.b16 %v4160, %v4159
    %v4903 = vpack.c.b16 %v4162, %v4161
    %v4904 = vpack.c.b16 %v4164, %v4163
    %v4905 = vpack.c.b16 %v4166, %v4165
    %v4906 = vpack.c.b16 %v4168, %v4167
    %v4907 = vpack.c.b16 %v4170, %v4169
    %v4908 = vpack.c.b16 %v4172, %v4171
    %v4909 = vpack.c.b16 %v4174, %v4173
    %v4910 = vpack.c.b16 %v4176, %v4175
    %v4911 = vpack.c.b16 %v4178, %v4177
    %v4912 = vpack.c.b16 %v4180, %v4179
    %v4913 = vpack.c.b16 %v4182, %v4181
    %v4914 = vpack.c.b16 %v4184, %v4183
    %v4915 = vpack.c.b16 %v4186, %v4185
    %v4916 = vpack.c.b16 %v4188, %v4187
    %v4917 = vpack.c.b16 %v4190, %v4189
    %v4918 = vpack.c.b16 %v4192, %v4191
    %v4919 = vpack.c.b16 %v4194, %v4193
    %v4920 = vpack.c.b16 %v4196, %v4195
    %v4921 = vpack.c.b16 %v4198, %v4197
    %v4922 = vpack.c.b16 %v4200, %v4199
    %v4923 = vpack.c.b16 %v4202, %v4201
    %v4924 = vpack.c.b16 %v4204, %v4203
    %v4925 = vpack.c.b16 %v4206, %v4205
    %v4926 = vpack.c.b16 %v4208, %v4207
    %v4927 = vpack.c.b16 %v4210, %v4209
    %v4928 = vpack.c.b16 %v4212, %v4211
    %v4929 = vpack.c.b16 %v4214, %v4213
    %v4930 = vpack.c.b16 %v4216, %v4215
    %v4931 = vpack.c.b16 %v4218, %v4217
    %v4932 = vpack.c.b16 %v4220, %v4219
    %v4933 = vpack.c.b16 %v4222, %v4221
    %v4934 = vpack.c.b16 %v4224, %v4223
    %v4935 = vpack.c.b16 %v4226, %v4225
    %v4936 = vpack.c.b16 %v4228, %v4227
    %v4937 = vpack.c.b16 %v4230, %v4229
    %v4938 = vpack.c.b16 %v4232, %v4231
    %v4939 = vpack.c.b16 %v4234, %v4233
    %v4940 = vpack.c.b16 %v4236, %v4235
    %v4941 = vpack.c.b16 %v4238, %v4237
    %v4942 = vpack.c.b16 %v4240, %v4239
    %v4943 = vpack.c.b16 %v4242, %v4241
    %v4944 = vpack.c.b16 %v4244, %v4243
    %v4945 = vpack.c.b16 %v4246, %v4245
    %v4946 = vpack.c.b16 %v4248, %v4247
    %v4947 = vpack.c.b16 %v4250, %v4249
    %v4948 = vpack.c.b16 %v4252, %v4251
    %v4949 = vpack.c.b16 %v4254, %v4253
    %v4950 = vpack.c.b16 %v4256, %v4255
    %v4951 = vpack.c.b16 %v4258, %v4257
    %v4952 = vpack.c.b16 %v4260, %v4259
    %v4953 = vpack.c.b16 %v4262, %v4261
    %v4954 = vpack.c.b16 %v4264, %v4263
    %v4955 = vpack.c.b16 %v4266, %v4265
    %v4956 = vpack.c.b16 %v4268, %v4267
    %v4957 = vpack.c.b16 %v4270, %v4269
    %v4958 = vpack.c.b16 %v4272, %v4271
    %v4959 = vpack.c.b16 %v4274, %v4273
    %v4960 = vpack.c.b16 %v4276, %v4275
    %v4961 = vpack.c.b16 %v4278, %v4277
    %v4962 = vpack.c.b16 %v4280, %v4279
    %v4963 = vpack.c.b16 %v4282, %v4281
    %v4964 = vpack.c.b16 %v4284, %v4283
    %v4965 = vpack.c.b16 %v4286, %v4285
    %v4966 = vpack.c.b16 %v4288, %v4287
    %v4967 = vpack.c.b16 %v4290, %v4289
    %v4968 = vpack.c.b16 %v4292, %v4291
    %v4969 = vpack.c.b16 %v4294, %v4293
    %v4970 = vpack.c.b16 %v4296, %v4295
    %v4971 = vpack.c.b16 %v4298, %v4297
    %v4972 = vpack.c.b16 %v4300, %v4299
    %v4973 = vpack.c.b16 %v4302, %v4301
    %v4974 = vpack.c.b16 %v4304, %v4303
    %v4975 = vpack.c.b16 %v4306, %v4305
    %v4976 = vpack.c.b16 %v4308, %v4307
    %v4977 = vpack.c.b16 %v4310, %v4309
    %v4978 = vpack.c.b16 %v4312, %v4311
    %v4979 = vpack.c.b16 %v4314, %v4313
    %v4980 = vpack.c.b16 %v4316, %v4315
    %v4981 = vpack.c.b16 %v4318, %v4317
    %v4982 = vpack.c.b16 %v4320, %v4319
    %v4983 = vpack.c.b16 %v4322, %v4321
    %v4984 = vpack.c.b16 %v4324, %v4323
    %v4985 = vpack.c.b16 %v4326, %v4325
    %v4986 = vpack.c.b16 %v4328, %v4327
    %v4987 = vpack.c.b16 %v4330, %v4329
    %v4988 = vpack.c.b16 %v4332, %v4331
    %v4989 = vpack.c.b16 %v4334, %v4333
    %v4990 = vpack.c.b16 %v4336, %v4335
    %v4991 = vpack.c.b16 %v4338, %v4337
    %v4992 = vpack.c.b16 %v4340, %v4339
    %v4993 = vpack.c.b16 %v4342, %v4341
    %v4994 = vpack.c.b16 %v4344, %v4343
    %v4995 = vpack.c.b16 %v4346, %v4345
    %v4996 = vpack.c.b16 %v4348, %v4347
    %v4997 = vpack.c.b16 %v4350, %v4349
    %v4998 = vpack.c.b16 %v4352, %v4351
    %v4999 = vpack.c.b16 %v4354, %v4353
    %v5000 = vpack.c.b16 %v4356, %v4355
    %v5001 = vpack.c.b16 %v4358, %v4357
    %v5002 = vpack.c.b16 %v4360, %v4359
    %v5003 = vpack.c.b16 %v4362, %v4361
    %v5004 = vpack.c.b16 %v4364, %v4363
    %5645 = vmatprep.subr.bf16.mxu0 0
    %5646 = vmatpush1.bf16.msra.mxu0 %v4365
    %5647 = vmatprep.subr.bf16.mxu0 0
    %5648 = vmatpush1.bf16.msra.mxu0 %v4366
    %5649 = vmatprep.subr.bf16.mxu0 0
    %5650 = vmatpush1.bf16.msra.mxu0 %v4367
    %5651 = vmatprep.subr.bf16.mxu0 0
    %5652 = vmatpush1.bf16.msra.mxu0 %v4368
    %5653 = vmatprep.subr.bf16.mxu0 0
    %5654 = vmatpush1.bf16.msra.mxu0 %v4369
    %5655 = vmatprep.subr.bf16.mxu0 0
    %5656 = vmatpush1.bf16.msra.mxu0 %v4370
    %5657 = vmatprep.subr.bf16.mxu0 0
    %5658 = vmatpush1.bf16.msra.mxu0 %v4371
    %5659 = vmatprep.subr.bf16.mxu0 0
    %5660 = vmatpush1.bf16.msra.mxu0 %v4372
    %5661 = vmatprep.subr.bf16.mxu0 0
    %5662 = vmatpush1.bf16.msra.mxu0 %v4373
    %5663 = vmatprep.subr.bf16.mxu0 0
    %5664 = vmatpush1.bf16.msra.mxu0 %v4374
    %5665 = vmatprep.subr.bf16.mxu0 0
    %5666 = vmatpush1.bf16.msra.mxu0 %v4375
    %5667 = vmatprep.subr.bf16.mxu0 0
    %5668 = vmatpush1.bf16.msra.mxu0 %v4376
    %5669 = vmatprep.subr.bf16.mxu0 0
    %5670 = vmatpush1.bf16.msra.mxu0 %v4377
    %5671 = vmatprep.subr.bf16.mxu0 0
    %5672 = vmatpush1.bf16.msra.mxu0 %v4378
    %5673 = vmatprep.subr.bf16.mxu0 0
    %5674 = vmatpush1.bf16.msra.mxu0 %v4379
    %5675 = vmatprep.subr.bf16.mxu0 0
    %5676 = vmatpush1.bf16.msra.mxu0 %v4380
    %5677 = vmatprep.mubr.bf16.mxu0 %v1646
    %5678 = vmatmul.mubr.bf16.gmra.mrb[0].mxu0 %v1645
    %v5679 = vpop.f32.mrb[0].mxu0
    %v5680 = vadd.f32 0.0, %v5679
    %v5681 = vpop.f32.mrb[0].mxu0
    %v5682 = vpop.f32.mrb[0].mxu0
    %v5683 = vadd.f32 0.0, %v5682
    %v5684 = vpop.f32.mrb[0].mxu0
    %5685 = vdwg.mxu0
    %5686 = vmatprep.subr.bf16.mxu0 0
    %5687 = vmatpush1.bf16.msra.mxu0 %v4381
    %5688 = vmatprep.subr.bf16.mxu0 0
    %5689 = vmatpush1.bf16.msra.mxu0 %v4382
    %5690 = vmatprep.subr.bf16.mxu0 0
    %5691 = vmatpush1.bf16.msra.mxu0 %v4383
    %5692 = vmatprep.subr.bf16.mxu0 0
    %5693 = vmatpush1.bf16.msra.mxu0 %v4384
    %5694 = vmatprep.subr.bf16.mxu0 0
    %5695 = vmatpush1.bf16.msra.mxu0 %v4385
    %5696 = vmatprep.subr.bf16.mxu0 0
    %5697 = vmatpush1.bf16.msra.mxu0 %v4386
    %5698 = vmatprep.subr.bf16.mxu0 0
    %5699 = vmatpush1.bf16.msra.mxu0 %v4387
    %5700 = vmatprep.subr.bf16.mxu0 0
    %5701 = vmatpush1.bf16.msra.mxu0 %v4388
    %5702 = vmatprep.subr.bf16.mxu0 0
    %5703 = vmatpush1.bf16.msra.mxu0 %v4389
    %5704 = vmatprep.subr.bf16.mxu0 0
    %5705 = vmatpush1.bf16.msra.mxu0 %v4390
    %5706 = vmatprep.subr.bf16.mxu0 0
    %5707 = vmatpush1.bf16.msra.mxu0 %v4391
    %5708 = vmatprep.subr.bf16.mxu0 0
    %5709 = vmatpush1.bf16.msra.mxu0 %v4392
    %5710 = vmatprep.subr.bf16.mxu0 0
    %5711 = vmatpush1.bf16.msra.mxu0 %v4393
    %5712 = vmatprep.subr.bf16.mxu0 0
    %5713 = vmatpush1.bf16.msra.mxu0 %v4394
    %5714 = vmatprep.subr.bf16.mxu0 0
    %5715 = vmatpush1.bf16.msra.mxu0 %v4395
    %5716 = vmatprep.subr.bf16.mxu0 0
    %5717 = vmatpush1.bf16.msra.mxu0 %v4396
    %5718 = vmatprep.mubr.bf16.mxu0 %v1648
    %5719 = vmatmul.mubr.bf16.gmra.mrb[0].mxu0 %v1647
    %v5720 = vpop.f32.mrb[0].mxu0
    %v5721 = vadd.f32 %v5680, %v5720
    %v5722 = vpop.f32.mrb[0].mxu0
    %v5723 = vpop.f32.mrb[0].mxu0
    %v5724 = vadd.f32 %v5683, %v5723
    %v5725 = vpop.f32.mrb[0].mxu0
    %5726 = vdwg.mxu0
    %5727 = vmatprep.subr.bf16.mxu0 0
    %5728 = vmatpush1.bf16.msra.mxu0 %v4397
    %5729 = vmatprep.subr.bf16.mxu0 0
    %5730 = vmatpush1.bf16.msra.mxu0 %v4398
    %5731 = vmatprep.subr.bf16.mxu0 0
    %5732 = vmatpush1.bf16.msra.mxu0 %v4399
    %5733 = vmatprep.subr.bf16.mxu0 0
    %5734 = vmatpush1.bf16.msra.mxu0 %v4400
    %5735 = vmatprep.subr.bf16.mxu0 0
    %5736 = vmatpush1.bf16.msra.mxu0 %v4401
    %5737 = vmatprep.subr.bf16.mxu0 0
    %5738 = vmatpush1.bf16.msra.mxu0 %v4402
    %5739 = vmatprep.subr.bf16.mxu0 0
    %5740 = vmatpush1.bf16.msra.mxu0 %v4403
    %5741 = vmatprep.subr.bf16.mxu0 0
    %5742 = vmatpush1.bf16.msra.mxu0 %v4404
    %5743 = vmatprep.subr.bf16.mxu0 0
    %5744 = vmatpush1.bf16.msra.mxu0 %v4405
    %5745 = vmatprep.subr.bf16.mxu0 0
    %5746 = vmatpush1.bf16.msra.mxu0 %v4406
    %5747 = vmatprep.subr.bf16.mxu0 0
    %5748 = vmatpush1.bf16.msra.mxu0 %v4407
    %5749 = vmatprep.subr.bf16.mxu0 0
    %5750 = vmatpush1.bf16.msra.mxu0 %v4408
    %5751 = vmatprep.subr.bf16.mxu0 0
    %5752 = vmatpush1.bf16.msra.mxu0 %v4409
    %5753 = vmatprep.subr.bf16.mxu0 0
    %5754 = vmatpush1.bf16.msra.mxu0 %v4410
    %5755 = vmatprep.subr.bf16.mxu0 0
    %5756 = vmatpush1.bf16.msra.mxu0 %v4411
    %5757 = vmatprep.subr.bf16.mxu0 0
    %5758 = vmatpush1.bf16.msra.mxu0 %v4412
    %5759 = vmatprep.mubr.bf16.mxu0 %v1650
    %5760 = vmatmul.mubr.bf16.gmra.mrb[0].mxu0 %v1649
    %v5761 = vpop.f32.mrb[0].mxu0
    %v5762 = vadd.f32 %v5721, %v5761
    %v5763 = vpop.f32.mrb[0].mxu0
    %v5764 = vpop.f32.mrb[0].mxu0
    %v5765 = vadd.f32 %v5724, %v5764
    %v5766 = vpop.f32.mrb[0].mxu0
    %5767 = vdwg.mxu0
    %5768 = vmatprep.subr.bf16.mxu0 0
    %5769 = vmatpush1.bf16.msra.mxu0 %v4413
    %5770 = vmatprep.subr.bf16.mxu0 0
    %5771 = vmatpush1.bf16.msra.mxu0 %v4414
    %5772 = vmatprep.subr.bf16.mxu0 0
    %5773 = vmatpush1.bf16.msra.mxu0 %v4415
    %5774 = vmatprep.subr.bf16.mxu0 0
    %5775 = vmatpush1.bf16.msra.mxu0 %v4416
    %5776 = vmatprep.subr.bf16.mxu0 0
    %5777 = vmatpush1.bf16.msra.mxu0 %v4417
    %5778 = vmatprep.subr.bf16.mxu0 0
    %5779 = vmatpush1.bf16.msra.mxu0 %v4418
    %5780 = vmatprep.subr.bf16.mxu0 0
    %5781 = vmatpush1.bf16.msra.mxu0 %v4419
    %5782 = vmatprep.subr.bf16.mxu0 0
    %5783 = vmatpush1.bf16.msra.mxu0 %v4420
    %5784 = vmatprep.subr.bf16.mxu0 0
    %5785 = vmatpush1.bf16.msra.mxu0 %v4421
    %5786 = vmatprep.subr.bf16.mxu0 0
    %5787 = vmatpush1.bf16.msra.mxu0 %v4422
    %5788 = vmatprep.subr.bf16.mxu0 0
    %5789 = vmatpush1.bf16.msra.mxu0 %v4423
    %5790 = vmatprep.subr.bf16.mxu0 0
    %5791 = vmatpush1.bf16.msra.mxu0 %v4424
    %5792 = vmatprep.subr.bf16.mxu0 0
    %5793 = vmatpush1.bf16.msra.mxu0 %v4425
    %5794 = vmatprep.subr.bf16.mxu0 0
    %5795 = vmatpush1.bf16.msra.mxu0 %v4426
    %5796 = vmatprep.subr.bf16.mxu0 0
    %5797 = vmatpush1.bf16.msra.mxu0 %v4427
    %5798 = vmatprep.subr.bf16.mxu0 0
    %5799 = vmatpush1.bf16.msra.mxu0 %v4428
    %5800 = vmatprep.mubr.bf16.mxu0 %v1652
    %5801 = vmatmul.mubr.bf16.gmra.mrb[0].mxu0 %v1651
    %v5802 = vpop.f32.mrb[0].mxu0
    %v5803 = vadd.f32 %v5762, %v5802
    %v5804 = vpop.f32.mrb[0].mxu0
    %v5805 = vpop.f32.mrb[0].mxu0
    %v5806 = vadd.f32 %v5765, %v5805
    %v5807 = vpop.f32.mrb[0].mxu0
    %5808 = vdwg.mxu0
    %5809 = vmatprep.subr.bf16.mxu0 0
    %5810 = vmatpush1.bf16.msra.mxu0 %v4429
    %5811 = vmatprep.subr.bf16.mxu0 0
    %5812 = vmatpush1.bf16.msra.mxu0 %v4430
    %5813 = vmatprep.subr.bf16.mxu0 0
    %5814 = vmatpush1.bf16.msra.mxu0 %v4431
    %5815 = vmatprep.subr.bf16.mxu0 0
    %5816 = vmatpush1.bf16.msra.mxu0 %v4432
    %5817 = vmatprep.subr.bf16.mxu0 0
    %5818 = vmatpush1.bf16.msra.mxu0 %v4433
    %5819 = vmatprep.subr.bf16.mxu0 0
    %5820 = vmatpush1.bf16.msra.mxu0 %v4434
    %5821 = vmatprep.subr.bf16.mxu0 0
    %5822 = vmatpush1.bf16.msra.mxu0 %v4435
    %5823 = vmatprep.subr.bf16.mxu0 0
    %5824 = vmatpush1.bf16.msra.mxu0 %v4436
    %5825 = vmatprep.subr.bf16.mxu0 0
    %5826 = vmatpush1.bf16.msra.mxu0 %v4437
    %5827 = vmatprep.subr.bf16.mxu0 0
    %5828 = vmatpush1.bf16.msra.mxu0 %v4438
    %5829 = vmatprep.subr.bf16.mxu0 0
    %5830 = vmatpush1.bf16.msra.mxu0 %v4439
    %5831 = vmatprep.subr.bf16.mxu0 0
    %5832 = vmatpush1.bf16.msra.mxu0 %v4440
    %5833 = vmatprep.subr.bf16.mxu0 0
    %5834 = vmatpush1.bf16.msra.mxu0 %v4441
    %5835 = vmatprep.subr.bf16.mxu0 0
    %5836 = vmatpush1.bf16.msra.mxu0 %v4442
    %5837 = vmatprep.subr.bf16.mxu0 0
    %5838 = vmatpush1.bf16.msra.mxu0 %v4443
    %5839 = vmatprep.subr.bf16.mxu0 0
    %5840 = vmatpush1.bf16.msra.mxu0 %v4444
    %5841 = vmatprep.mubr.bf16.mxu0 %v1654
    %5842 = vmatmul.mubr.bf16.gmra.mrb[0].mxu0 %v1653
    %v5843 = vpop.f32.mrb[0].mxu0
    %v5844 = vadd.f32 %v5803, %v5843
    %v5845 = vpop.f32.mrb[0].mxu0
    %v5846 = vpop.f32.mrb[0].mxu0
    %v5847 = vadd.f32 %v5806, %v5846
    %v5848 = vpop.f32.mrb[0].mxu0
    %5849 = vdwg.mxu0
    %5850 = vmatprep.subr.bf16.mxu0 0
    %5851 = vmatpush1.bf16.msra.mxu0 %v4445
    %5852 = vmatprep.subr.bf16.mxu0 0
    %5853 = vmatpush1.bf16.msra.mxu0 %v4446
    %5854 = vmatprep.subr.bf16.mxu0 0
    %5855 = vmatpush1.bf16.msra.mxu0 %v4447
    %5856 = vmatprep.subr.bf16.mxu0 0
    %5857 = vmatpush1.bf16.msra.mxu0 %v4448
    %5858 = vmatprep.subr.bf16.mxu0 0
    %5859 = vmatpush1.bf16.msra.mxu0 %v4449
    %5860 = vmatprep.subr.bf16.mxu0 0
    %5861 = vmatpush1.bf16.msra.mxu0 %v4450
    %5862 = vmatprep.subr.bf16.mxu0 0
    %5863 = vmatpush1.bf16.msra.mxu0 %v4451
    %5864 = vmatprep.subr.bf16.mxu0 0
    %5865 = vmatpush1.bf16.msra.mxu0 %v4452
    %5866 = vmatprep.subr.bf16.mxu0 0
    %5867 = vmatpush1.bf16.msra.mxu0 %v4453
    %5868 = vmatprep.subr.bf16.mxu0 0
    %5869 = vmatpush1.bf16.msra.mxu0 %v4454
    %5870 = vmatprep.subr.bf16.mxu0 0
    %5871 = vmatpush1.bf16.msra.mxu0 %v4455
    %5872 = vmatprep.subr.bf16.mxu0 0
    %5873 = vmatpush1.bf16.msra.mxu0 %v4456
    %5874 = vmatprep.subr.bf16.mxu0 0
    %5875 = vmatpush1.bf16.msra.mxu0 %v4457
    %5876 = vmatprep.subr.bf16.mxu0 0
    %5877 = vmatpush1.bf16.msra.mxu0 %v4458
    %5878 = vmatprep.subr.bf16.mxu0 0
    %5879 = vmatpush1.bf16.msra.mxu0 %v4459
    %5880 = vmatprep.subr.bf16.mxu0 0
    %5881 = vmatpush1.bf16.msra.mxu0 %v4460
    %5882 = vmatprep.mubr.bf16.mxu0 %v1656
    %5883 = vmatmul.mubr.bf16.gmra.mrb[0].mxu0 %v1655
    %v5884 = vpop.f32.mrb[0].mxu0
    %v5885 = vadd.f32 %v5844, %v5884
    %v5886 = vpop.f32.mrb[0].mxu0
    %v5887 = vpop.f32.mrb[0].mxu0
    %v5888 = vadd.f32 %v5847, %v5887
    %v5889 = vpop.f32.mrb[0].mxu0
    %5890 = vdwg.mxu0
    %5891 = vmatprep.subr.bf16.mxu0 0
    %5892 = vmatpush1.bf16.msra.mxu0 %v4461
    %5893 = vmatprep.subr.bf16.mxu0 0
    %5894 = vmatpush1.bf16.msra.mxu0 %v4462
    %5895 = vmatprep.subr.bf16.mxu0 0
    %5896 = vmatpush1.bf16.msra.mxu0 %v4463
    %5897 = vmatprep.subr.bf16.mxu0 0
    %5898 = vmatpush1.bf16.msra.mxu0 %v4464
    %5899 = vmatprep.subr.bf16.mxu0 0
    %5900 = vmatpush1.bf16.msra.mxu0 %v4465
    %5901 = vmatprep.subr.bf16.mxu0 0
    %5902 = vmatpush1.bf16.msra.mxu0 %v4466
    %5903 = vmatprep.subr.bf16.mxu0 0
    %5904 = vmatpush1.bf16.msra.mxu0 %v4467
    %5905 = vmatprep.subr.bf16.mxu0 0
    %5906 = vmatpush1.bf16.msra.mxu0 %v4468
    %5907 = vmatprep.subr.bf16.mxu0 0
    %5908 = vmatpush1.bf16.msra.mxu0 %v4469
    %5909 = vmatprep.subr.bf16.mxu0 0
    %5910 = vmatpush1.bf16.msra.mxu0 %v4470
    %5911 = vmatprep.subr.bf16.mxu0 0
    %5912 = vmatpush1.bf16.msra.mxu0 %v4471
    %5913 = vmatprep.subr.bf16.mxu0 0
    %5914 = vmatpush1.bf16.msra.mxu0 %v4472
    %5915 = vmatprep.subr.bf16.mxu0 0
    %5916 = vmatpush1.bf16.msra.mxu0 %v4473
    %5917 = vmatprep.subr.bf16.mxu0 0
    %5918 = vmatpush1.bf16.msra.mxu0 %v4474
    %5919 = vmatprep.subr.bf16.mxu0 0
    %5920 = vmatpush1.bf16.msra.mxu0 %v4475
    %5921 = vmatprep.subr.bf16.mxu0 0
    %5922 = vmatpush1.bf16.msra.mxu0 %v4476
    %5923 = vmatprep.mubr.bf16.mxu0 %v1658
    %5924 = vmatmul.mubr.bf16.gmra.mrb[0].mxu0 %v1657
    %v5925 = vpop.f32.mrb[0].mxu0
    %v5926 = vadd.f32 %v5885, %v5925
    %v5927 = vpop.f32.mrb[0].mxu0
    %v5928 = vpop.f32.mrb[0].mxu0
    %v5929 = vadd.f32 %v5888, %v5928
    %v5930 = vpop.f32.mrb[0].mxu0
    %5931 = vdwg.mxu0
    %5932 = vmatprep.subr.bf16.mxu0 0
    %5933 = vmatpush1.bf16.msra.mxu0 %v4477
    %5934 = vmatprep.subr.bf16.mxu0 0
    %5935 = vmatpush1.bf16.msra.mxu0 %v4478
    %5936 = vmatprep.subr.bf16.mxu0 0
    %5937 = vmatpush1.bf16.msra.mxu0 %v4479
    %5938 = vmatprep.subr.bf16.mxu0 0
    %5939 = vmatpush1.bf16.msra.mxu0 %v4480
    %5940 = vmatprep.subr.bf16.mxu0 0
    %5941 = vmatpush1.bf16.msra.mxu0 %v4481
    %5942 = vmatprep.subr.bf16.mxu0 0
    %5943 = vmatpush1.bf16.msra.mxu0 %v4482
    %5944 = vmatprep.subr.bf16.mxu0 0
    %5945 = vmatpush1.bf16.msra.mxu0 %v4483
    %5946 = vmatprep.subr.bf16.mxu0 0
    %5947 = vmatpush1.bf16.msra.mxu0 %v4484
    %5948 = vmatprep.subr.bf16.mxu0 0
    %5949 = vmatpush1.bf16.msra.mxu0 %v4485
    %5950 = vmatprep.subr.bf16.mxu0 0
    %5951 = vmatpush1.bf16.msra.mxu0 %v4486
    %5952 = vmatprep.subr.bf16.mxu0 0
    %5953 = vmatpush1.bf16.msra.mxu0 %v4487
    %5954 = vmatprep.subr.bf16.mxu0 0
    %5955 = vmatpush1.bf16.msra.mxu0 %v4488
    %5956 = vmatprep.subr.bf16.mxu0 0
    %5957 = vmatpush1.bf16.msra.mxu0 %v4489
    %5958 = vmatprep.subr.bf16.mxu0 0
    %5959 = vmatpush1.bf16.msra.mxu0 %v4490
    %5960 = vmatprep.subr.bf16.mxu0 0
    %5961 = vmatpush1.bf16.msra.mxu0 %v4491
    %5962 = vmatprep.subr.bf16.mxu0 0
    %5963 = vmatpush1.bf16.msra.mxu0 %v4492
    %5964 = vmatprep.mubr.bf16.mxu0 %v1660
    %5965 = vmatmul.mubr.bf16.gmra.mrb[0].mxu0 %v1659
    %v5966 = vpop.f32.mrb[0].mxu0
    %v5967 = vadd.f32 %v5926, %v5966
    %v5968 = vpop.f32.mrb[0].mxu0
    %v5969 = vpop.f32.mrb[0].mxu0
    %v5970 = vadd.f32 %v5929, %v5969
    %v5971 = vpop.f32.mrb[0].mxu0
    %5972 = vdwg.mxu0
    %5973 = vmatprep.subr.bf16.mxu0 0
    %5974 = vmatpush1.bf16.msra.mxu0 %v4493
    %5975 = vmatprep.subr.bf16.mxu0 0
    %5976 = vmatpush1.bf16.msra.mxu0 %v4494
    %5977 = vmatprep.subr.bf16.mxu0 0
    %5978 = vmatpush1.bf16.msra.mxu0 %v4495
    %5979 = vmatprep.subr.bf16.mxu0 0
    %5980 = vmatpush1.bf16.msra.mxu0 %v4496
    %5981 = vmatprep.subr.bf16.mxu0 0
    %5982 = vmatpush1.bf16.msra.mxu0 %v4497
    %5983 = vmatprep.subr.bf16.mxu0 0
    %5984 = vmatpush1.bf16.msra.mxu0 %v4498
    %5985 = vmatprep.subr.bf16.mxu0 0
    %5986 = vmatpush1.bf16.msra.mxu0 %v4499
    %5987 = vmatprep.subr.bf16.mxu0 0
    %5988 = vmatpush1.bf16.msra.mxu0 %v4500
    %5989 = vmatprep.subr.bf16.mxu0 0
    %5990 = vmatpush1.bf16.msra.mxu0 %v4501
    %5991 = vmatprep.subr.bf16.mxu0 0
    %5992 = vmatpush1.bf16.msra.mxu0 %v4502
    %5993 = vmatprep.subr.bf16.mxu0 0
    %5994 = vmatpush1.bf16.msra.mxu0 %v4503
    %5995 = vmatprep.subr.bf16.mxu0 0
    %5996 = vmatpush1.bf16.msra.mxu0 %v4504
    %5997 = vmatprep.subr.bf16.mxu0 0
    %5998 = vmatpush1.bf16.msra.mxu0 %v4505
    %5999 = vmatprep.subr.bf16.mxu0 0
    %6000 = vmatpush1.bf16.msra.mxu0 %v4506
    %6001 = vmatprep.subr.bf16.mxu0 0
    %6002 = vmatpush1.bf16.msra.mxu0 %v4507
    %6003 = vmatprep.subr.bf16.mxu0 0
    %6004 = vmatpush1.bf16.msra.mxu0 %v4508
    %6005 = vmatprep.mubr.bf16.mxu0 %v1662
    %6006 = vmatmul.mubr.bf16.gmra.mrb[0].mxu0 %v1661
    %v6007 = vpop.f32.mrb[0].mxu0
    %v6008 = vadd.f32 %v5967, %v6007
    %v6009 = vpop.f32.mrb[0].mxu0
    %v6010 = vpop.f32.mrb[0].mxu0
    %v6011 = vadd.f32 %v5970, %v6010
    %v6012 = vpop.f32.mrb[0].mxu0
    %6013 = vdwg.mxu0
    %6014 = vmatprep.subr.bf16.mxu0 0
    %6015 = vmatpush1.bf16.msra.mxu0 %v4509
    %6016 = vmatprep.subr.bf16.mxu0 0
    %6017 = vmatpush1.bf16.msra.mxu0 %v4510
    %6018 = vmatprep.subr.bf16.mxu0 0
    %6019 = vmatpush1.bf16.msra.mxu0 %v4511
    %6020 = vmatprep.subr.bf16.mxu0 0
    %6021 = vmatpush1.bf16.msra.mxu0 %v4512
    %6022 = vmatprep.subr.bf16.mxu0 0
    %6023 = vmatpush1.bf16.msra.mxu0 %v4513
    %6024 = vmatprep.subr.bf16.mxu0 0
    %6025 = vmatpush1.bf16.msra.mxu0 %v4514
    %6026 = vmatprep.subr.bf16.mxu0 0
    %6027 = vmatpush1.bf16.msra.mxu0 %v4515
    %6028 = vmatprep.subr.bf16.mxu0 0
    %6029 = vmatpush1.bf16.msra.mxu0 %v4516
    %6030 = vmatprep.subr.bf16.mxu0 0
    %6031 = vmatpush1.bf16.msra.mxu0 %v4517
    %6032 = vmatprep.subr.bf16.mxu0 0
    %6033 = vmatpush1.bf16.msra.mxu0 %v4518
    %6034 = vmatprep.subr.bf16.mxu0 0
    %6035 = vmatpush1.bf16.msra.mxu0 %v4519
    %6036 = vmatprep.subr.bf16.mxu0 0
    %6037 = vmatpush1.bf16.msra.mxu0 %v4520
    %6038 = vmatprep.subr.bf16.mxu0 0
    %6039 = vmatpush1.bf16.msra.mxu0 %v4521
    %6040 = vmatprep.subr.bf16.mxu0 0
    %6041 = vmatpush1.bf16.msra.mxu0 %v4522
    %6042 = vmatprep.subr.bf16.mxu0 0
    %6043 = vmatpush1.bf16.msra.mxu0 %v4523
    %6044 = vmatprep.subr.bf16.mxu0 0
    %6045 = vmatpush1.bf16.msra.mxu0 %v4524
    %6046 = vmatprep.mubr.bf16.mxu0 %v1664
    %6047 = vmatmul.mubr.bf16.gmra.mrb[0].mxu0 %v1663
    %v6048 = vpop.f32.mrb[0].mxu0
    %v6049 = vadd.f32 %v6008, %v6048
    %v6050 = vpop.f32.mrb[0].mxu0
    %v6051 = vpop.f32.mrb[0].mxu0
    %v6052 = vadd.f32 %v6011, %v6051
    %v6053 = vpop.f32.mrb[0].mxu0
    %6054 = vdwg.mxu0
    %6055 = vmatprep.subr.bf16.mxu0 0
    %6056 = vmatpush1.bf16.msra.mxu0 %v4525
    %6057 = vmatprep.subr.bf16.mxu0 0
    %6058 = vmatpush1.bf16.msra.mxu0 %v4526
    %6059 = vmatprep.subr.bf16.mxu0 0
    %6060 = vmatpush1.bf16.msra.mxu0 %v4527
    %6061 = vmatprep.subr.bf16.mxu0 0
    %6062 = vmatpush1.bf16.msra.mxu0 %v4528
    %6063 = vmatprep.subr.bf16.mxu0 0
    %6064 = vmatpush1.bf16.msra.mxu0 %v4529
    %6065 = vmatprep.subr.bf16.mxu0 0
    %6066 = vmatpush1.bf16.msra.mxu0 %v4530
    %6067 = vmatprep.subr.bf16.mxu0 0
    %6068 = vmatpush1.bf16.msra.mxu0 %v4531
    %6069 = vmatprep.subr.bf16.mxu0 0
    %6070 = vmatpush1.bf16.msra.mxu0 %v4532
    %6071 = vmatprep.subr.bf16.mxu0 0
    %6072 = vmatpush1.bf16.msra.mxu0 %v4533
    %6073 = vmatprep.subr.bf16.mxu0 0
    %6074 = vmatpush1.bf16.msra.mxu0 %v4534
    %6075 = vmatprep.subr.bf16.mxu0 0
    %6076 = vmatpush1.bf16.msra.mxu0 %v4535
    %6077 = vmatprep.subr.bf16.mxu0 0
    %6078 = vmatpush1.bf16.msra.mxu0 %v4536
    %6079 = vmatprep.subr.bf16.mxu0 0
    %6080 = vmatpush1.bf16.msra.mxu0 %v4537
    %6081 = vmatprep.subr.bf16.mxu0 0
    %6082 = vmatpush1.bf16.msra.mxu0 %v4538
    %6083 = vmatprep.subr.bf16.mxu0 0
    %6084 = vmatpush1.bf16.msra.mxu0 %v4539
    %6085 = vmatprep.subr.bf16.mxu0 0
    %6086 = vmatpush1.bf16.msra.mxu0 %v4540
    %6087 = vmatprep.mubr.bf16.mxu0 %v1666
    %6088 = vmatmul.mubr.bf16.gmra.mrb[0].mxu0 %v1665
    %v6089 = vpop.f32.mrb[0].mxu0
    %v6090 = vadd.f32 %v6049, %v6089
    %v6091 = vpop.f32.mrb[0].mxu0
    %v6092 = vpop.f32.mrb[0].mxu0
    %v6093 = vadd.f32 %v6052, %v6092
    %v6094 = vpop.f32.mrb[0].mxu0
    %6095 = vdwg.mxu0
    %6096 = vmatprep.subr.bf16.mxu0 0
    %6097 = vmatpush1.bf16.msra.mxu0 %v4541
    %6098 = vmatprep.subr.bf16.mxu0 0
    %6099 = vmatpush1.bf16.msra.mxu0 %v4542
    %6100 = vmatprep.subr.bf16.mxu0 0
    %6101 = vmatpush1.bf16.msra.mxu0 %v4543
    %6102 = vmatprep.subr.bf16.mxu0 0
    %6103 = vmatpush1.bf16.msra.mxu0 %v4544
    %6104 = vmatprep.subr.bf16.mxu0 0
    %6105 = vmatpush1.bf16.msra.mxu0 %v4545
    %6106 = vmatprep.subr.bf16.mxu0 0
    %6107 = vmatpush1.bf16.msra.mxu0 %v4546
    %6108 = vmatprep.subr.bf16.mxu0 0
    %6109 = vmatpush1.bf16.msra.mxu0 %v4547
    %6110 = vmatprep.subr.bf16.mxu0 0
    %6111 = vmatpush1.bf16.msra.mxu0 %v4548
    %6112 = vmatprep.subr.bf16.mxu0 0
    %6113 = vmatpush1.bf16.msra.mxu0 %v4549
    %6114 = vmatprep.subr.bf16.mxu0 0
    %6115 = vmatpush1.bf16.msra.mxu0 %v4550
    %6116 = vmatprep.subr.bf16.mxu0 0
    %6117 = vmatpush1.bf16.msra.mxu0 %v4551
    %6118 = vmatprep.subr.bf16.mxu0 0
    %6119 = vmatpush1.bf16.msra.mxu0 %v4552
    %6120 = vmatprep.subr.bf16.mxu0 0
    %6121 = vmatpush1.bf16.msra.mxu0 %v4553
    %6122 = vmatprep.subr.bf16.mxu0 0
    %6123 = vmatpush1.bf16.msra.mxu0 %v4554
    %6124 = vmatprep.subr.bf16.mxu0 0
    %6125 = vmatpush1.bf16.msra.mxu0 %v4555
    %6126 = vmatprep.subr.bf16.mxu0 0
    %6127 = vmatpush1.bf16.msra.mxu0 %v4556
    %6128 = vmatprep.mubr.bf16.mxu0 %v1668
    %6129 = vmatmul.mubr.bf16.gmra.mrb[0].mxu0 %v1667
    %v6130 = vpop.f32.mrb[0].mxu0
    %v6131 = vadd.f32 %v6090, %v6130
    %v6132 = vpop.f32.mrb[0].mxu0
    %v6133 = vpop.f32.mrb[0].mxu0
    %v6134 = vadd.f32 %v6093, %v6133
    %v6135 = vpop.f32.mrb[0].mxu0
    %6136 = vdwg.mxu0
    %6137 = vmatprep.subr.bf16.mxu0 0
    %6138 = vmatpush1.bf16.msra.mxu0 %v4557
    %6139 = vmatprep.subr.bf16.mxu0 0
    %6140 = vmatpush1.bf16.msra.mxu0 %v4558
    %6141 = vmatprep.subr.bf16.mxu0 0
    %6142 = vmatpush1.bf16.msra.mxu0 %v4559
    %6143 = vmatprep.subr.bf16.mxu0 0
    %6144 = vmatpush1.bf16.msra.mxu0 %v4560
    %6145 = vmatprep.subr.bf16.mxu0 0
    %6146 = vmatpush1.bf16.msra.mxu0 %v4561
    %6147 = vmatprep.subr.bf16.mxu0 0
    %6148 = vmatpush1.bf16.msra.mxu0 %v4562
    %6149 = vmatprep.subr.bf16.mxu0 0
    %6150 = vmatpush1.bf16.msra.mxu0 %v4563
    %6151 = vmatprep.subr.bf16.mxu0 0
    %6152 = vmatpush1.bf16.msra.mxu0 %v4564
    %6153 = vmatprep.subr.bf16.mxu0 0
    %6154 = vmatpush1.bf16.msra.mxu0 %v4565
    %6155 = vmatprep.subr.bf16.mxu0 0
    %6156 = vmatpush1.bf16.msra.mxu0 %v4566
    %6157 = vmatprep.subr.bf16.mxu0 0
    %6158 = vmatpush1.bf16.msra.mxu0 %v4567
    %6159 = vmatprep.subr.bf16.mxu0 0
    %6160 = vmatpush1.bf16.msra.mxu0 %v4568
    %6161 = vmatprep.subr.bf16.mxu0 0
    %6162 = vmatpush1.bf16.msra.mxu0 %v4569
    %6163 = vmatprep.subr.bf16.mxu0 0
    %6164 = vmatpush1.bf16.msra.mxu0 %v4570
    %6165 = vmatprep.subr.bf16.mxu0 0
    %6166 = vmatpush1.bf16.msra.mxu0 %v4571
    %6167 = vmatprep.subr.bf16.mxu0 0
    %6168 = vmatpush1.bf16.msra.mxu0 %v4572
    %6169 = vmatprep.mubr.bf16.mxu0 %v1670
    %6170 = vmatmul.mubr.bf16.gmra.mrb[0].mxu0 %v1669
    %v6171 = vpop.f32.mrb[0].mxu0
    %v6172 = vadd.f32 %v6131, %v6171
    %v6173 = vpop.f32.mrb[0].mxu0
    %v6174 = vpop.f32.mrb[0].mxu0
    %v6175 = vadd.f32 %v6134, %v6174
    %v6176 = vpop.f32.mrb[0].mxu0
    %6177 = vdwg.mxu0
    %6178 = vmatprep.subr.bf16.mxu0 0
    %6179 = vmatpush1.bf16.msra.mxu0 %v4573
    %6180 = vmatprep.subr.bf16.mxu0 0
    %6181 = vmatpush1.bf16.msra.mxu0 %v4574
    %6182 = vmatprep.subr.bf16.mxu0 0
    %6183 = vmatpush1.bf16.msra.mxu0 %v4575
    %6184 = vmatprep.subr.bf16.mxu0 0
    %6185 = vmatpush1.bf16.msra.mxu0 %v4576
    %6186 = vmatprep.subr.bf16.mxu0 0
    %6187 = vmatpush1.bf16.msra.mxu0 %v4577
    %6188 = vmatprep.subr.bf16.mxu0 0
    %6189 = vmatpush1.bf16.msra.mxu0 %v4578
    %6190 = vmatprep.subr.bf16.mxu0 0
    %6191 = vmatpush1.bf16.msra.mxu0 %v4579
    %6192 = vmatprep.subr.bf16.mxu0 0
    %6193 = vmatpush1.bf16.msra.mxu0 %v4580
    %6194 = vmatprep.subr.bf16.mxu0 0
    %6195 = vmatpush1.bf16.msra.mxu0 %v4581
    %6196 = vmatprep.subr.bf16.mxu0 0
    %6197 = vmatpush1.bf16.msra.mxu0 %v4582
    %6198 = vmatprep.subr.bf16.mxu0 0
    %6199 = vmatpush1.bf16.msra.mxu0 %v4583
    %6200 = vmatprep.subr.bf16.mxu0 0
    %6201 = vmatpush1.bf16.msra.mxu0 %v4584
    %6202 = vmatprep.subr.bf16.mxu0 0
    %6203 = vmatpush1.bf16.msra.mxu0 %v4585
    %6204 = vmatprep.subr.bf16.mxu0 0
    %6205 = vmatpush1.bf16.msra.mxu0 %v4586
    %6206 = vmatprep.subr.bf16.mxu0 0
    %6207 = vmatpush1.bf16.msra.mxu0 %v4587
    %6208 = vmatprep.subr.bf16.mxu0 0
    %6209 = vmatpush1.bf16.msra.mxu0 %v4588
    %6210 = vmatprep.mubr.bf16.mxu0 %v1672
    %6211 = vmatmul.mubr.bf16.gmra.mrb[0].mxu0 %v1671
    %v6212 = vpop.f32.mrb[0].mxu0
    %v6213 = vadd.f32 %v6172, %v6212
    %v6214 = vpop.f32.mrb[0].mxu0
    %v6215 = vpop.f32.mrb[0].mxu0
    %v6216 = vadd.f32 %v6175, %v6215
    %v6217 = vpop.f32.mrb[0].mxu0
    %6218 = vdwg.mxu0
    %6219 = vmatprep.subr.bf16.mxu0 0
    %6220 = vmatpush1.bf16.msra.mxu0 %v4589
    %6221 = vmatprep.subr.bf16.mxu0 0
    %6222 = vmatpush1.bf16.msra.mxu0 %v4590
    %6223 = vmatprep.subr.bf16.mxu0 0
    %6224 = vmatpush1.bf16.msra.mxu0 %v4591
    %6225 = vmatprep.subr.bf16.mxu0 0
    %6226 = vmatpush1.bf16.msra.mxu0 %v4592
    %6227 = vmatprep.subr.bf16.mxu0 0
    %6228 = vmatpush1.bf16.msra.mxu0 %v4593
    %6229 = vmatprep.subr.bf16.mxu0 0
    %6230 = vmatpush1.bf16.msra.mxu0 %v4594
    %6231 = vmatprep.subr.bf16.mxu0 0
    %6232 = vmatpush1.bf16.msra.mxu0 %v4595
    %6233 = vmatprep.subr.bf16.mxu0 0
    %6234 = vmatpush1.bf16.msra.mxu0 %v4596
    %6235 = vmatprep.subr.bf16.mxu0 0
    %6236 = vmatpush1.bf16.msra.mxu0 %v4597
    %6237 = vmatprep.subr.bf16.mxu0 0
    %6238 = vmatpush1.bf16.msra.mxu0 %v4598
    %6239 = vmatprep.subr.bf16.mxu0 0
    %6240 = vmatpush1.bf16.msra.mxu0 %v4599
    %6241 = vmatprep.subr.bf16.mxu0 0
    %6242 = vmatpush1.bf16.msra.mxu0 %v4600
    %6243 = vmatprep.subr.bf16.mxu0 0
    %6244 = vmatpush1.bf16.msra.mxu0 %v4601
    %6245 = vmatprep.subr.bf16.mxu0 0
    %6246 = vmatpush1.bf16.msra.mxu0 %v4602
    %6247 = vmatprep.subr.bf16.mxu0 0
    %6248 = vmatpush1.bf16.msra.mxu0 %v4603
    %6249 = vmatprep.subr.bf16.mxu0 0
    %6250 = vmatpush1.bf16.msra.mxu0 %v4604
    %6251 = vmatprep.mubr.bf16.mxu0 %v1674
    %6252 = vmatmul.mubr.bf16.gmra.mrb[0].mxu0 %v1673
    %v6253 = vpop.f32.mrb[0].mxu0
    %v6254 = vadd.f32 %v6213, %v6253
    %v6255 = vpop.f32.mrb[0].mxu0
    %v6256 = vpop.f32.mrb[0].mxu0
    %v6257 = vadd.f32 %v6216, %v6256
    %v6258 = vpop.f32.mrb[0].mxu0
    %6259 = vdwg.mxu0
    %6260 = vmatprep.subr.bf16.mxu0 0
    %6261 = vmatpush1.bf16.msra.mxu0 %v4605
    %6262 = vmatprep.subr.bf16.mxu0 0
    %6263 = vmatpush1.bf16.msra.mxu0 %v4606
    %6264 = vmatprep.subr.bf16.mxu0 0
    %6265 = vmatpush1.bf16.msra.mxu0 %v4607
    %6266 = vmatprep.subr.bf16.mxu0 0
    %6267 = vmatpush1.bf16.msra.mxu0 %v4608
    %6268 = vmatprep.subr.bf16.mxu0 0
    %6269 = vmatpush1.bf16.msra.mxu0 %v4609
    %6270 = vmatprep.subr.bf16.mxu0 0
    %6271 = vmatpush1.bf16.msra.mxu0 %v4610
    %6272 = vmatprep.subr.bf16.mxu0 0
    %6273 = vmatpush1.bf16.msra.mxu0 %v4611
    %6274 = vmatprep.subr.bf16.mxu0 0
    %6275 = vmatpush1.bf16.msra.mxu0 %v4612
    %6276 = vmatprep.subr.bf16.mxu0 0
    %6277 = vmatpush1.bf16.msra.mxu0 %v4613
    %6278 = vmatprep.subr.bf16.mxu0 0
    %6279 = vmatpush1.bf16.msra.mxu0 %v4614
    %6280 = vmatprep.subr.bf16.mxu0 0
    %6281 = vmatpush1.bf16.msra.mxu0 %v4615
    %6282 = vmatprep.subr.bf16.mxu0 0
    %6283 = vmatpush1.bf16.msra.mxu0 %v4616
    %6284 = vmatprep.subr.bf16.mxu0 0
    %6285 = vmatpush1.bf16.msra.mxu0 %v4617
    %6286 = vmatprep.subr.bf16.mxu0 0
    %6287 = vmatpush1.bf16.msra.mxu0 %v4618
    %6288 = vmatprep.subr.bf16.mxu0 0
    %6289 = vmatpush1.bf16.msra.mxu0 %v4619
    %6290 = vmatprep.subr.bf16.mxu0 0
    %6291 = vmatpush1.bf16.msra.mxu0 %v4620
    %6292 = vmatprep.mubr.bf16.mxu0 %v1676
    %6293 = vmatmul.mubr.bf16.gmra.mrb[0].mxu0 %v1675
    %v6294 = vpop.f32.mrb[0].mxu0
    %v6295 = vadd.f32 %v6254, %v6294
    %v6296 = vpop.f32.mrb[0].mxu0
    %v6297 = vpop.f32.mrb[0].mxu0
    %v6298 = vadd.f32 %v6257, %v6297
    %v6299 = vpop.f32.mrb[0].mxu0
    %6300 = vdwg.mxu0
    %6301 = vmatprep.subr.bf16.mxu0 0
    %6302 = vmatpush1.bf16.msra.mxu0 %v4621
    %6303 = vmatprep.subr.bf16.mxu0 0
    %6304 = vmatpush1.bf16.msra.mxu0 %v4622
    %6305 = vmatprep.subr.bf16.mxu0 0
    %6306 = vmatpush1.bf16.msra.mxu0 %v4623
    %6307 = vmatprep.subr.bf16.mxu0 0
    %6308 = vmatpush1.bf16.msra.mxu0 %v4624
    %6309 = vmatprep.subr.bf16.mxu0 0
    %6310 = vmatpush1.bf16.msra.mxu0 %v4625
    %6311 = vmatprep.subr.bf16.mxu0 0
    %6312 = vmatpush1.bf16.msra.mxu0 %v4626
    %6313 = vmatprep.subr.bf16.mxu0 0
    %6314 = vmatpush1.bf16.msra.mxu0 %v4627
    %6315 = vmatprep.subr.bf16.mxu0 0
    %6316 = vmatpush1.bf16.msra.mxu0 %v4628
    %6317 = vmatprep.subr.bf16.mxu0 0
    %6318 = vmatpush1.bf16.msra.mxu0 %v4629
    %6319 = vmatprep.subr.bf16.mxu0 0
    %6320 = vmatpush1.bf16.msra.mxu0 %v4630
    %6321 = vmatprep.subr.bf16.mxu0 0
    %6322 = vmatpush1.bf16.msra.mxu0 %v4631
    %6323 = vmatprep.subr.bf16.mxu0 0
    %6324 = vmatpush1.bf16.msra.mxu0 %v4632
    %6325 = vmatprep.subr.bf16.mxu0 0
    %6326 = vmatpush1.bf16.msra.mxu0 %v4633
    %6327 = vmatprep.subr.bf16.mxu0 0
    %6328 = vmatpush1.bf16.msra.mxu0 %v4634
    %6329 = vmatprep.subr.bf16.mxu0 0
    %6330 = vmatpush1.bf16.msra.mxu0 %v4635
    %6331 = vmatprep.subr.bf16.mxu0 0
    %6332 = vmatpush1.bf16.msra.mxu0 %v4636
    %6333 = vmatprep.mubr.bf16.mxu0 %v1678
    %6334 = vmatmul.mubr.bf16.gmra.mrb[0].mxu0 %v1677
    %v6335 = vpop.f32.mrb[0].mxu0
    %v6336 = vadd.f32 %v6295, %v6335
    %v6337 = vpop.f32.mrb[0].mxu0
    %v6338 = vpop.f32.mrb[0].mxu0
    %v6339 = vadd.f32 %v6298, %v6338
    %v6340 = vpop.f32.mrb[0].mxu0
    %6341 = vdwg.mxu0
    %6342 = vmatprep.subr.bf16.mxu0 0
    %6343 = vmatpush1.bf16.msra.mxu0 %v4637
    %6344 = vmatprep.subr.bf16.mxu0 0
    %6345 = vmatpush1.bf16.msra.mxu0 %v4638
    %6346 = vmatprep.subr.bf16.mxu0 0
    %6347 = vmatpush1.bf16.msra.mxu0 %v4639
    %6348 = vmatprep.subr.bf16.mxu0 0
    %6349 = vmatpush1.bf16.msra.mxu0 %v4640
    %6350 = vmatprep.subr.bf16.mxu0 0
    %6351 = vmatpush1.bf16.msra.mxu0 %v4641
    %6352 = vmatprep.subr.bf16.mxu0 0
    %6353 = vmatpush1.bf16.msra.mxu0 %v4642
    %6354 = vmatprep.subr.bf16.mxu0 0
    %6355 = vmatpush1.bf16.msra.mxu0 %v4643
    %6356 = vmatprep.subr.bf16.mxu0 0
    %6357 = vmatpush1.bf16.msra.mxu0 %v4644
    %6358 = vmatprep.subr.bf16.mxu0 0
    %6359 = vmatpush1.bf16.msra.mxu0 %v4645
    %6360 = vmatprep.subr.bf16.mxu0 0
    %6361 = vmatpush1.bf16.msra.mxu0 %v4646
    %6362 = vmatprep.subr.bf16.mxu0 0
    %6363 = vmatpush1.bf16.msra.mxu0 %v4647
    %6364 = vmatprep.subr.bf16.mxu0 0
    %6365 = vmatpush1.bf16.msra.mxu0 %v4648
    %6366 = vmatprep.subr.bf16.mxu0 0
    %6367 = vmatpush1.bf16.msra.mxu0 %v4649
    %6368 = vmatprep.subr.bf16.mxu0 0
    %6369 = vmatpush1.bf16.msra.mxu0 %v4650
    %6370 = vmatprep.subr.bf16.mxu0 0
    %6371 = vmatpush1.bf16.msra.mxu0 %v4651
    %6372 = vmatprep.subr.bf16.mxu0 0
    %6373 = vmatpush1.bf16.msra.mxu0 %v4652
    %6374 = vmatprep.mubr.bf16.mxu0 %v1680
    %6375 = vmatmul.mubr.bf16.gmra.mrb[0].mxu0 %v1679
    %v6376 = vpop.f32.mrb[0].mxu0
    %v6377 = vadd.f32 %v6336, %v6376
    %v6378 = vpop.f32.mrb[0].mxu0
    %v6379 = vpop.f32.mrb[0].mxu0
    %v6380 = vadd.f32 %v6339, %v6379
    %v6381 = vpop.f32.mrb[0].mxu0
    %6382 = vdwg.mxu0
    %6383 = vmatprep.subr.bf16.mxu0 0
    %6384 = vmatpush1.bf16.msra.mxu0 %v4653
    %6385 = vmatprep.subr.bf16.mxu0 0
    %6386 = vmatpush1.bf16.msra.mxu0 %v4654
    %6387 = vmatprep.subr.bf16.mxu0 0
    %6388 = vmatpush1.bf16.msra.mxu0 %v4655
    %6389 = vmatprep.subr.bf16.mxu0 0
    %6390 = vmatpush1.bf16.msra.mxu0 %v4656
    %6391 = vmatprep.subr.bf16.mxu0 0
    %6392 = vmatpush1.bf16.msra.mxu0 %v4657
    %6393 = vmatprep.subr.bf16.mxu0 0
    %6394 = vmatpush1.bf16.msra.mxu0 %v4658
    %6395 = vmatprep.subr.bf16.mxu0 0
    %6396 = vmatpush1.bf16.msra.mxu0 %v4659
    %6397 = vmatprep.subr.bf16.mxu0 0
    %6398 = vmatpush1.bf16.msra.mxu0 %v4660
    %6399 = vmatprep.subr.bf16.mxu0 0
    %6400 = vmatpush1.bf16.msra.mxu0 %v4661
    %6401 = vmatprep.subr.bf16.mxu0 0
    %6402 = vmatpush1.bf16.msra.mxu0 %v4662
    %6403 = vmatprep.subr.bf16.mxu0 0
    %6404 = vmatpush1.bf16.msra.mxu0 %v4663
    %6405 = vmatprep.subr.bf16.mxu0 0
    %6406 = vmatpush1.bf16.msra.mxu0 %v4664
    %6407 = vmatprep.subr.bf16.mxu0 0
    %6408 = vmatpush1.bf16.msra.mxu0 %v4665
    %6409 = vmatprep.subr.bf16.mxu0 0
    %6410 = vmatpush1.bf16.msra.mxu0 %v4666
    %6411 = vmatprep.subr.bf16.mxu0 0
    %6412 = vmatpush1.bf16.msra.mxu0 %v4667
    %6413 = vmatprep.subr.bf16.mxu0 0
    %6414 = vmatpush1.bf16.msra.mxu0 %v4668
    %6415 = vmatprep.mubr.bf16.mxu0 %v1682
    %6416 = vmatmul.mubr.bf16.gmra.mrb[0].mxu0 %v1681
    %v6417 = vpop.f32.mrb[0].mxu0
    %v6418 = vadd.f32 %v6377, %v6417
    %v6419 = vpop.f32.mrb[0].mxu0
    %v6420 = vpop.f32.mrb[0].mxu0
    %v6421 = vadd.f32 %v6380, %v6420
    %v6422 = vpop.f32.mrb[0].mxu0
    %6423 = vdwg.mxu0
    %6424 = vmatprep.subr.bf16.mxu0 0
    %6425 = vmatpush1.bf16.msra.mxu0 %v4669
    %6426 = vmatprep.subr.bf16.mxu0 0
    %6427 = vmatpush1.bf16.msra.mxu0 %v4670
    %6428 = vmatprep.subr.bf16.mxu0 0
    %6429 = vmatpush1.bf16.msra.mxu0 %v4671
    %6430 = vmatprep.subr.bf16.mxu0 0
    %6431 = vmatpush1.bf16.msra.mxu0 %v4672
    %6432 = vmatprep.subr.bf16.mxu0 0
    %6433 = vmatpush1.bf16.msra.mxu0 %v4673
    %6434 = vmatprep.subr.bf16.mxu0 0
    %6435 = vmatpush1.bf16.msra.mxu0 %v4674
    %6436 = vmatprep.subr.bf16.mxu0 0
    %6437 = vmatpush1.bf16.msra.mxu0 %v4675
    %6438 = vmatprep.subr.bf16.mxu0 0
    %6439 = vmatpush1.bf16.msra.mxu0 %v4676
    %6440 = vmatprep.subr.bf16.mxu0 0
    %6441 = vmatpush1.bf16.msra.mxu0 %v4677
    %6442 = vmatprep.subr.bf16.mxu0 0
    %6443 = vmatpush1.bf16.msra.mxu0 %v4678
    %6444 = vmatprep.subr.bf16.mxu0 0
    %6445 = vmatpush1.bf16.msra.mxu0 %v4679
    %6446 = vmatprep.subr.bf16.mxu0 0
    %6447 = vmatpush1.bf16.msra.mxu0 %v4680
    %6448 = vmatprep.subr.bf16.mxu0 0
    %6449 = vmatpush1.bf16.msra.mxu0 %v4681
    %6450 = vmatprep.subr.bf16.mxu0 0
    %6451 = vmatpush1.bf16.msra.mxu0 %v4682
    %6452 = vmatprep.subr.bf16.mxu0 0
    %6453 = vmatpush1.bf16.msra.mxu0 %v4683
    %6454 = vmatprep.subr.bf16.mxu0 0
    %6455 = vmatpush1.bf16.msra.mxu0 %v4684
    %6456 = vmatprep.mubr.bf16.mxu0 %v1684
    %6457 = vmatmul.mubr.bf16.gmra.mrb[0].mxu0 %v1683
    %v6458 = vpop.f32.mrb[0].mxu0
    %v6459 = vadd.f32 %v6418, %v6458
    %v6460 = vpop.f32.mrb[0].mxu0
    %v6461 = vpop.f32.mrb[0].mxu0
    %v6462 = vadd.f32 %v6421, %v6461
    %v6463 = vpop.f32.mrb[0].mxu0
    %6464 = vdwg.mxu0
    %6465 = vmatprep.subr.bf16.mxu0 0
    %6466 = vmatpush1.bf16.msra.mxu0 %v4685
    %6467 = vmatprep.subr.bf16.mxu0 0
    %6468 = vmatpush1.bf16.msra.mxu0 %v4686
    %6469 = vmatprep.subr.bf16.mxu0 0
    %6470 = vmatpush1.bf16.msra.mxu0 %v4687
    %6471 = vmatprep.subr.bf16.mxu0 0
    %6472 = vmatpush1.bf16.msra.mxu0 %v4688
    %6473 = vmatprep.subr.bf16.mxu0 0
    %6474 = vmatpush1.bf16.msra.mxu0 %v4689
    %6475 = vmatprep.subr.bf16.mxu0 0
    %6476 = vmatpush1.bf16.msra.mxu0 %v4690
    %6477 = vmatprep.subr.bf16.mxu0 0
    %6478 = vmatpush1.bf16.msra.mxu0 %v4691
    %6479 = vmatprep.subr.bf16.mxu0 0
    %6480 = vmatpush1.bf16.msra.mxu0 %v4692
    %6481 = vmatprep.subr.bf16.mxu0 0
    %6482 = vmatpush1.bf16.msra.mxu0 %v4693
    %6483 = vmatprep.subr.bf16.mxu0 0
    %6484 = vmatpush1.bf16.msra.mxu0 %v4694
    %6485 = vmatprep.subr.bf16.mxu0 0
    %6486 = vmatpush1.bf16.msra.mxu0 %v4695
    %6487 = vmatprep.subr.bf16.mxu0 0
    %6488 = vmatpush1.bf16.msra.mxu0 %v4696
    %6489 = vmatprep.subr.bf16.mxu0 0
    %6490 = vmatpush1.bf16.msra.mxu0 %v4697
    %6491 = vmatprep.subr.bf16.mxu0 0
    %6492 = vmatpush1.bf16.msra.mxu0 %v4698
    %6493 = vmatprep.subr.bf16.mxu0 0
    %6494 = vmatpush1.bf16.msra.mxu0 %v4699
    %6495 = vmatprep.subr.bf16.mxu0 0
    %6496 = vmatpush1.bf16.msra.mxu0 %v4700
    %6497 = vmatprep.mubr.bf16.mxu0 %v1686
    %6498 = vmatmul.mubr.bf16.gmra.mrb[0].mxu0 %v1685
    %v6499 = vpop.f32.mrb[0].mxu0
    %v6500 = vadd.f32 %v6459, %v6499
    %v6501 = vpop.f32.mrb[0].mxu0
    %v6502 = vpop.f32.mrb[0].mxu0
    %v6503 = vadd.f32 %v6462, %v6502
    %v6504 = vpop.f32.mrb[0].mxu0
    %6505 = vdwg.mxu0
    %6506 = vmatprep.subr.bf16.mxu0 0
    %6507 = vmatpush1.bf16.msra.mxu0 %v4701
    %6508 = vmatprep.subr.bf16.mxu0 0
    %6509 = vmatpush1.bf16.msra.mxu0 %v4702
    %6510 = vmatprep.subr.bf16.mxu0 0
    %6511 = vmatpush1.bf16.msra.mxu0 %v4703
    %6512 = vmatprep.subr.bf16.mxu0 0
    %6513 = vmatpush1.bf16.msra.mxu0 %v4704
    %6514 = vmatprep.subr.bf16.mxu0 0
    %6515 = vmatpush1.bf16.msra.mxu0 %v4705
    %6516 = vmatprep.subr.bf16.mxu0 0
    %6517 = vmatpush1.bf16.msra.mxu0 %v4706
    %6518 = vmatprep.subr.bf16.mxu0 0
    %6519 = vmatpush1.bf16.msra.mxu0 %v4707
    %6520 = vmatprep.subr.bf16.mxu0 0
    %6521 = vmatpush1.bf16.msra.mxu0 %v4708
    %6522 = vmatprep.subr.bf16.mxu0 0
    %6523 = vmatpush1.bf16.msra.mxu0 %v4709
    %6524 = vmatprep.subr.bf16.mxu0 0
    %6525 = vmatpush1.bf16.msra.mxu0 %v4710
    %6526 = vmatprep.subr.bf16.mxu0 0
    %6527 = vmatpush1.bf16.msra.mxu0 %v4711
    %6528 = vmatprep.subr.bf16.mxu0 0
    %6529 = vmatpush1.bf16.msra.mxu0 %v4712
    %6530 = vmatprep.subr.bf16.mxu0 0
    %6531 = vmatpush1.bf16.msra.mxu0 %v4713
    %6532 = vmatprep.subr.bf16.mxu0 0
    %6533 = vmatpush1.bf16.msra.mxu0 %v4714
    %6534 = vmatprep.subr.bf16.mxu0 0
    %6535 = vmatpush1.bf16.msra.mxu0 %v4715
    %6536 = vmatprep.subr.bf16.mxu0 0
    %6537 = vmatpush1.bf16.msra.mxu0 %v4716
    %6538 = vmatprep.mubr.bf16.mxu0 %v1688
    %6539 = vmatmul.mubr.bf16.gmra.mrb[0].mxu0 %v1687
    %v6540 = vpop.f32.mrb[0].mxu0
    %v6541 = vadd.f32 %v6500, %v6540
    %v6542 = vpop.f32.mrb[0].mxu0
    %v6543 = vpop.f32.mrb[0].mxu0
    %v6544 = vadd.f32 %v6503, %v6543
    %v6545 = vpop.f32.mrb[0].mxu0
    %6546 = vdwg.mxu0
    %6547 = vmatprep.subr.bf16.mxu0 0
    %6548 = vmatpush1.bf16.msra.mxu0 %v4717
    %6549 = vmatprep.subr.bf16.mxu0 0
    %6550 = vmatpush1.bf16.msra.mxu0 %v4718
    %6551 = vmatprep.subr.bf16.mxu0 0
    %6552 = vmatpush1.bf16.msra.mxu0 %v4719
    %6553 = vmatprep.subr.bf16.mxu0 0
    %6554 = vmatpush1.bf16.msra.mxu0 %v4720
    %6555 = vmatprep.subr.bf16.mxu0 0
    %6556 = vmatpush1.bf16.msra.mxu0 %v4721
    %6557 = vmatprep.subr.bf16.mxu0 0
    %6558 = vmatpush1.bf16.msra.mxu0 %v4722
    %6559 = vmatprep.subr.bf16.mxu0 0
    %6560 = vmatpush1.bf16.msra.mxu0 %v4723
    %6561 = vmatprep.subr.bf16.mxu0 0
    %6562 = vmatpush1.bf16.msra.mxu0 %v4724
    %6563 = vmatprep.subr.bf16.mxu0 0
    %6564 = vmatpush1.bf16.msra.mxu0 %v4725
    %6565 = vmatprep.subr.bf16.mxu0 0
    %6566 = vmatpush1.bf16.msra.mxu0 %v4726
    %6567 = vmatprep.subr.bf16.mxu0 0
    %6568 = vmatpush1.bf16.msra.mxu0 %v4727
    %6569 = vmatprep.subr.bf16.mxu0 0
    %6570 = vmatpush1.bf16.msra.mxu0 %v4728
    %6571 = vmatprep.subr.bf16.mxu0 0
    %6572 = vmatpush1.bf16.msra.mxu0 %v4729
    %6573 = vmatprep.subr.bf16.mxu0 0
    %6574 = vmatpush1.bf16.msra.mxu0 %v4730
    %6575 = vmatprep.subr.bf16.mxu0 0
    %6576 = vmatpush1.bf16.msra.mxu0 %v4731
    %6577 = vmatprep.subr.bf16.mxu0 0
    %6578 = vmatpush1.bf16.msra.mxu0 %v4732
    %6579 = vmatprep.mubr.bf16.mxu0 %v1690
    %6580 = vmatmul.mubr.bf16.gmra.mrb[0].mxu0 %v1689
    %v6581 = vpop.f32.mrb[0].mxu0
    %v6582 = vadd.f32 %v6541, %v6581
    %v6583 = vpop.f32.mrb[0].mxu0
    %v6584 = vpop.f32.mrb[0].mxu0
    %v6585 = vadd.f32 %v6544, %v6584
    %v6586 = vpop.f32.mrb[0].mxu0
    %6587 = vdwg.mxu0
    %6588 = vmatprep.subr.bf16.mxu0 0
    %6589 = vmatpush1.bf16.msra.mxu0 %v4733
    %6590 = vmatprep.subr.bf16.mxu0 0
    %6591 = vmatpush1.bf16.msra.mxu0 %v4734
    %6592 = vmatprep.subr.bf16.mxu0 0
    %6593 = vmatpush1.bf16.msra.mxu0 %v4735
    %6594 = vmatprep.subr.bf16.mxu0 0
    %6595 = vmatpush1.bf16.msra.mxu0 %v4736
    %6596 = vmatprep.subr.bf16.mxu0 0
    %6597 = vmatpush1.bf16.msra.mxu0 %v4737
    %6598 = vmatprep.subr.bf16.mxu0 0
    %6599 = vmatpush1.bf16.msra.mxu0 %v4738
    %6600 = vmatprep.subr.bf16.mxu0 0
    %6601 = vmatpush1.bf16.msra.mxu0 %v4739
    %6602 = vmatprep.subr.bf16.mxu0 0
    %6603 = vmatpush1.bf16.msra.mxu0 %v4740
    %6604 = vmatprep.subr.bf16.mxu0 0
    %6605 = vmatpush1.bf16.msra.mxu0 %v4741
    %6606 = vmatprep.subr.bf16.mxu0 0
    %6607 = vmatpush1.bf16.msra.mxu0 %v4742
    %6608 = vmatprep.subr.bf16.mxu0 0
    %6609 = vmatpush1.bf16.msra.mxu0 %v4743
    %6610 = vmatprep.subr.bf16.mxu0 0
    %6611 = vmatpush1.bf16.msra.mxu0 %v4744
    %6612 = vmatprep.subr.bf16.mxu0 0
    %6613 = vmatpush1.bf16.msra.mxu0 %v4745
    %6614 = vmatprep.subr.bf16.mxu0 0
    %6615 = vmatpush1.bf16.msra.mxu0 %v4746
    %6616 = vmatprep.subr.bf16.mxu0 0
    %6617 = vmatpush1.bf16.msra.mxu0 %v4747
    %6618 = vmatprep.subr.bf16.mxu0 0
    %6619 = vmatpush1.bf16.msra.mxu0 %v4748
    %6620 = vmatprep.mubr.bf16.mxu0 %v1692
    %6621 = vmatmul.mubr.bf16.gmra.mrb[0].mxu0 %v1691
    %v6622 = vpop.f32.mrb[0].mxu0
    %v6623 = vadd.f32 %v6582, %v6622
    %v6624 = vpop.f32.mrb[0].mxu0
    %v6625 = vpop.f32.mrb[0].mxu0
    %v6626 = vadd.f32 %v6585, %v6625
    %v6627 = vpop.f32.mrb[0].mxu0
    %6628 = vdwg.mxu0
    %6629 = vmatprep.subr.bf16.mxu0 0
    %6630 = vmatpush1.bf16.msra.mxu0 %v4749
    %6631 = vmatprep.subr.bf16.mxu0 0
    %6632 = vmatpush1.bf16.msra.mxu0 %v4750
    %6633 = vmatprep.subr.bf16.mxu0 0
    %6634 = vmatpush1.bf16.msra.mxu0 %v4751
    %6635 = vmatprep.subr.bf16.mxu0 0
    %6636 = vmatpush1.bf16.msra.mxu0 %v4752
    %6637 = vmatprep.subr.bf16.mxu0 0
    %6638 = vmatpush1.bf16.msra.mxu0 %v4753
    %6639 = vmatprep.subr.bf16.mxu0 0
    %6640 = vmatpush1.bf16.msra.mxu0 %v4754
    %6641 = vmatprep.subr.bf16.mxu0 0
    %6642 = vmatpush1.bf16.msra.mxu0 %v4755
    %6643 = vmatprep.subr.bf16.mxu0 0
    %6644 = vmatpush1.bf16.msra.mxu0 %v4756
    %6645 = vmatprep.subr.bf16.mxu0 0
    %6646 = vmatpush1.bf16.msra.mxu0 %v4757
    %6647 = vmatprep.subr.bf16.mxu0 0
    %6648 = vmatpush1.bf16.msra.mxu0 %v4758
    %6649 = vmatprep.subr.bf16.mxu0 0
    %6650 = vmatpush1.bf16.msra.mxu0 %v4759
    %6651 = vmatprep.subr.bf16.mxu0 0
    %6652 = vmatpush1.bf16.msra.mxu0 %v4760
    %6653 = vmatprep.subr.bf16.mxu0 0
    %6654 = vmatpush1.bf16.msra.mxu0 %v4761
    %6655 = vmatprep.subr.bf16.mxu0 0
    %6656 = vmatpush1.bf16.msra.mxu0 %v4762
    %6657 = vmatprep.subr.bf16.mxu0 0
    %6658 = vmatpush1.bf16.msra.mxu0 %v4763
    %6659 = vmatprep.subr.bf16.mxu0 0
    %6660 = vmatpush1.bf16.msra.mxu0 %v4764
    %6661 = vmatprep.mubr.bf16.mxu0 %v1694
    %6662 = vmatmul.mubr.bf16.gmra.mrb[0].mxu0 %v1693
    %v6663 = vpop.f32.mrb[0].mxu0
    %v6664 = vadd.f32 %v6623, %v6663
    %v6665 = vpop.f32.mrb[0].mxu0
    %v6666 = vpop.f32.mrb[0].mxu0
    %v6667 = vadd.f32 %v6626, %v6666
    %v6668 = vpop.f32.mrb[0].mxu0
    %6669 = vdwg.mxu0
    %6670 = vmatprep.subr.bf16.mxu0 0
    %6671 = vmatpush1.bf16.msra.mxu0 %v4765
    %6672 = vmatprep.subr.bf16.mxu0 0
    %6673 = vmatpush1.bf16.msra.mxu0 %v4766
    %6674 = vmatprep.subr.bf16.mxu0 0
    %6675 = vmatpush1.bf16.msra.mxu0 %v4767
    %6676 = vmatprep.subr.bf16.mxu0 0
    %6677 = vmatpush1.bf16.msra.mxu0 %v4768
    %6678 = vmatprep.subr.bf16.mxu0 0
    %6679 = vmatpush1.bf16.msra.mxu0 %v4769
    %6680 = vmatprep.subr.bf16.mxu0 0
    %6681 = vmatpush1.bf16.msra.mxu0 %v4770
    %6682 = vmatprep.subr.bf16.mxu0 0
    %6683 = vmatpush1.bf16.msra.mxu0 %v4771
    %6684 = vmatprep.subr.bf16.mxu0 0
    %6685 = vmatpush1.bf16.msra.mxu0 %v4772
    %6686 = vmatprep.subr.bf16.mxu0 0
    %6687 = vmatpush1.bf16.msra.mxu0 %v4773
    %6688 = vmatprep.subr.bf16.mxu0 0
    %6689 = vmatpush1.bf16.msra.mxu0 %v4774
    %6690 = vmatprep.subr.bf16.mxu0 0
    %6691 = vmatpush1.bf16.msra.mxu0 %v4775
    %6692 = vmatprep.subr.bf16.mxu0 0
    %6693 = vmatpush1.bf16.msra.mxu0 %v4776
    %6694 = vmatprep.subr.bf16.mxu0 0
    %6695 = vmatpush1.bf16.msra.mxu0 %v4777
    %6696 = vmatprep.subr.bf16.mxu0 0
    %6697 = vmatpush1.bf16.msra.mxu0 %v4778
    %6698 = vmatprep.subr.bf16.mxu0 0
    %6699 = vmatpush1.bf16.msra.mxu0 %v4779
    %6700 = vmatprep.subr.bf16.mxu0 0
    %6701 = vmatpush1.bf16.msra.mxu0 %v4780
    %6702 = vmatprep.mubr.bf16.mxu0 %v1696
    %6703 = vmatmul.mubr.bf16.gmra.mrb[0].mxu0 %v1695
    %v6704 = vpop.f32.mrb[0].mxu0
    %v6705 = vadd.f32 %v6664, %v6704
    %v6706 = vpop.f32.mrb[0].mxu0
    %v6707 = vpop.f32.mrb[0].mxu0
    %v6708 = vadd.f32 %v6667, %v6707
    %v6709 = vpop.f32.mrb[0].mxu0
    %6710 = vdwg.mxu0
    %6711 = vmatprep.subr.bf16.mxu0 0
    %6712 = vmatpush1.bf16.msra.mxu0 %v4781
    %6713 = vmatprep.subr.bf16.mxu0 0
    %6714 = vmatpush1.bf16.msra.mxu0 %v4782
    %6715 = vmatprep.subr.bf16.mxu0 0
    %6716 = vmatpush1.bf16.msra.mxu0 %v4783
    %6717 = vmatprep.subr.bf16.mxu0 0
    %6718 = vmatpush1.bf16.msra.mxu0 %v4784
    %6719 = vmatprep.subr.bf16.mxu0 0
    %6720 = vmatpush1.bf16.msra.mxu0 %v4785
    %6721 = vmatprep.subr.bf16.mxu0 0
    %6722 = vmatpush1.bf16.msra.mxu0 %v4786
    %6723 = vmatprep.subr.bf16.mxu0 0
    %6724 = vmatpush1.bf16.msra.mxu0 %v4787
    %6725 = vmatprep.subr.bf16.mxu0 0
    %6726 = vmatpush1.bf16.msra.mxu0 %v4788
    %6727 = vmatprep.subr.bf16.mxu0 0
    %6728 = vmatpush1.bf16.msra.mxu0 %v4789
    %6729 = vmatprep.subr.bf16.mxu0 0
    %6730 = vmatpush1.bf16.msra.mxu0 %v4790
    %6731 = vmatprep.subr.bf16.mxu0 0
    %6732 = vmatpush1.bf16.msra.mxu0 %v4791
    %6733 = vmatprep.subr.bf16.mxu0 0
    %6734 = vmatpush1.bf16.msra.mxu0 %v4792
    %6735 = vmatprep.subr.bf16.mxu0 0
    %6736 = vmatpush1.bf16.msra.mxu0 %v4793
    %6737 = vmatprep.subr.bf16.mxu0 0
    %6738 = vmatpush1.bf16.msra.mxu0 %v4794
    %6739 = vmatprep.subr.bf16.mxu0 0
    %6740 = vmatpush1.bf16.msra.mxu0 %v4795
    %6741 = vmatprep.subr.bf16.mxu0 0
    %6742 = vmatpush1.bf16.msra.mxu0 %v4796
    %6743 = vmatprep.mubr.bf16.mxu0 %v1698
    %6744 = vmatmul.mubr.bf16.gmra.mrb[0].mxu0 %v1697
    %v6745 = vpop.f32.mrb[0].mxu0
    %v6746 = vadd.f32 %v6705, %v6745
    %v6747 = vpop.f32.mrb[0].mxu0
    %v6748 = vpop.f32.mrb[0].mxu0
    %v6749 = vadd.f32 %v6708, %v6748
    %v6750 = vpop.f32.mrb[0].mxu0
    %6751 = vdwg.mxu0
    %6752 = vmatprep.subr.bf16.mxu0 0
    %6753 = vmatpush1.bf16.msra.mxu0 %v4797
    %6754 = vmatprep.subr.bf16.mxu0 0
    %6755 = vmatpush1.bf16.msra.mxu0 %v4798
    %6756 = vmatprep.subr.bf16.mxu0 0
    %6757 = vmatpush1.bf16.msra.mxu0 %v4799
    %6758 = vmatprep.subr.bf16.mxu0 0
    %6759 = vmatpush1.bf16.msra.mxu0 %v4800
    %6760 = vmatprep.subr.bf16.mxu0 0
    %6761 = vmatpush1.bf16.msra.mxu0 %v4801
    %6762 = vmatprep.subr.bf16.mxu0 0
    %6763 = vmatpush1.bf16.msra.mxu0 %v4802
    %6764 = vmatprep.subr.bf16.mxu0 0
    %6765 = vmatpush1.bf16.msra.mxu0 %v4803
    %6766 = vmatprep.subr.bf16.mxu0 0
    %6767 = vmatpush1.bf16.msra.mxu0 %v4804
    %6768 = vmatprep.subr.bf16.mxu0 0
    %6769 = vmatpush1.bf16.msra.mxu0 %v4805
    %6770 = vmatprep.subr.bf16.mxu0 0
    %6771 = vmatpush1.bf16.msra.mxu0 %v4806
    %6772 = vmatprep.subr.bf16.mxu0 0
    %6773 = vmatpush1.bf16.msra.mxu0 %v4807
    %6774 = vmatprep.subr.bf16.mxu0 0
    %6775 = vmatpush1.bf16.msra.mxu0 %v4808
    %6776 = vmatprep.subr.bf16.mxu0 0
    %6777 = vmatpush1.bf16.msra.mxu0 %v4809
    %6778 = vmatprep.subr.bf16.mxu0 0
    %6779 = vmatpush1.bf16.msra.mxu0 %v4810
    %6780 = vmatprep.subr.bf16.mxu0 0
    %6781 = vmatpush1.bf16.msra.mxu0 %v4811
    %6782 = vmatprep.subr.bf16.mxu0 0
    %6783 = vmatpush1.bf16.msra.mxu0 %v4812
    %6784 = vmatprep.mubr.bf16.mxu0 %v1700
    %6785 = vmatmul.mubr.bf16.gmra.mrb[0].mxu0 %v1699
    %v6786 = vpop.f32.mrb[0].mxu0
    %v6787 = vadd.f32 %v6746, %v6786
    %v6788 = vpop.f32.mrb[0].mxu0
    %v6789 = vpop.f32.mrb[0].mxu0
    %v6790 = vadd.f32 %v6749, %v6789
    %v6791 = vpop.f32.mrb[0].mxu0
    %6792 = vdwg.mxu0
    %6793 = vmatprep.subr.bf16.mxu0 0
    %6794 = vmatpush1.bf16.msra.mxu0 %v4813
    %6795 = vmatprep.subr.bf16.mxu0 0
    %6796 = vmatpush1.bf16.msra.mxu0 %v4814
    %6797 = vmatprep.subr.bf16.mxu0 0
    %6798 = vmatpush1.bf16.msra.mxu0 %v4815
    %6799 = vmatprep.subr.bf16.mxu0 0
    %6800 = vmatpush1.bf16.msra.mxu0 %v4816
    %6801 = vmatprep.subr.bf16.mxu0 0
    %6802 = vmatpush1.bf16.msra.mxu0 %v4817
    %6803 = vmatprep.subr.bf16.mxu0 0
    %6804 = vmatpush1.bf16.msra.mxu0 %v4818
    %6805 = vmatprep.subr.bf16.mxu0 0
    %6806 = vmatpush1.bf16.msra.mxu0 %v4819
    %6807 = vmatprep.subr.bf16.mxu0 0
    %6808 = vmatpush1.bf16.msra.mxu0 %v4820
    %6809 = vmatprep.subr.bf16.mxu0 0
    %6810 = vmatpush1.bf16.msra.mxu0 %v4821
    %6811 = vmatprep.subr.bf16.mxu0 0
    %6812 = vmatpush1.bf16.msra.mxu0 %v4822
    %6813 = vmatprep.subr.bf16.mxu0 0
    %6814 = vmatpush1.bf16.msra.mxu0 %v4823
    %6815 = vmatprep.subr.bf16.mxu0 0
    %6816 = vmatpush1.bf16.msra.mxu0 %v4824
    %6817 = vmatprep.subr.bf16.mxu0 0
    %6818 = vmatpush1.bf16.msra.mxu0 %v4825
    %6819 = vmatprep.subr.bf16.mxu0 0
    %6820 = vmatpush1.bf16.msra.mxu0 %v4826
    %6821 = vmatprep.subr.bf16.mxu0 0
    %6822 = vmatpush1.bf16.msra.mxu0 %v4827
    %6823 = vmatprep.subr.bf16.mxu0 0
    %6824 = vmatpush1.bf16.msra.mxu0 %v4828
    %6825 = vmatprep.mubr.bf16.mxu0 %v1702
    %6826 = vmatmul.mubr.bf16.gmra.mrb[0].mxu0 %v1701
    %v6827 = vpop.f32.mrb[0].mxu0
    %v6828 = vadd.f32 %v6787, %v6827
    %v6829 = vpop.f32.mrb[0].mxu0
    %v6830 = vpop.f32.mrb[0].mxu0
    %v6831 = vadd.f32 %v6790, %v6830
    %v6832 = vpop.f32.mrb[0].mxu0
    %6833 = vdwg.mxu0
    %6834 = vmatprep.subr.bf16.mxu0 0
    %6835 = vmatpush1.bf16.msra.mxu0 %v4829
    %6836 = vmatprep.subr.bf16.mxu0 0
    %6837 = vmatpush1.bf16.msra.mxu0 %v4830
    %6838 = vmatprep.subr.bf16.mxu0 0
    %6839 = vmatpush1.bf16.msra.mxu0 %v4831
    %6840 = vmatprep.subr.bf16.mxu0 0
    %6841 = vmatpush1.bf16.msra.mxu0 %v4832
    %6842 = vmatprep.subr.bf16.mxu0 0
    %6843 = vmatpush1.bf16.msra.mxu0 %v4833
    %6844 = vmatprep.subr.bf16.mxu0 0
    %6845 = vmatpush1.bf16.msra.mxu0 %v4834
    %6846 = vmatprep.subr.bf16.mxu0 0
    %6847 = vmatpush1.bf16.msra.mxu0 %v4835
    %6848 = vmatprep.subr.bf16.mxu0 0
    %6849 = vmatpush1.bf16.msra.mxu0 %v4836
    %6850 = vmatprep.subr.bf16.mxu0 0
    %6851 = vmatpush1.bf16.msra.mxu0 %v4837
    %6852 = vmatprep.subr.bf16.mxu0 0
    %6853 = vmatpush1.bf16.msra.mxu0 %v4838
    %6854 = vmatprep.subr.bf16.mxu0 0
    %6855 = vmatpush1.bf16.msra.mxu0 %v4839
    %6856 = vmatprep.subr.bf16.mxu0 0
    %6857 = vmatpush1.bf16.msra.mxu0 %v4840
    %6858 = vmatprep.subr.bf16.mxu0 0
    %6859 = vmatpush1.bf16.msra.mxu0 %v4841
    %6860 = vmatprep.subr.bf16.mxu0 0
    %6861 = vmatpush1.bf16.msra.mxu0 %v4842
    %6862 = vmatprep.subr.bf16.mxu0 0
    %6863 = vmatpush1.bf16.msra.mxu0 %v4843
    %6864 = vmatprep.subr.bf16.mxu0 0
    %6865 = vmatpush1.bf16.msra.mxu0 %v4844
    %6866 = vmatprep.mubr.bf16.mxu0 %v1704
    %6867 = vmatmul.mubr.bf16.gmra.mrb[0].mxu0 %v1703
    %v6868 = vpop.f32.mrb[0].mxu0
    %v6869 = vadd.f32 %v6828, %v6868
    %v6870 = vpop.f32.mrb[0].mxu0
    %v6871 = vpop.f32.mrb[0].mxu0
    %v6872 = vadd.f32 %v6831, %v6871
    %v6873 = vpop.f32.mrb[0].mxu0
    %6874 = vdwg.mxu0
    %6875 = vmatprep.subr.bf16.mxu0 0
    %6876 = vmatpush1.bf16.msra.mxu0 %v4845
    %6877 = vmatprep.subr.bf16.mxu0 0
    %6878 = vmatpush1.bf16.msra.mxu0 %v4846
    %6879 = vmatprep.subr.bf16.mxu0 0
    %6880 = vmatpush1.bf16.msra.mxu0 %v4847
    %6881 = vmatprep.subr.bf16.mxu0 0
    %6882 = vmatpush1.bf16.msra.mxu0 %v4848
    %6883 = vmatprep.subr.bf16.mxu0 0
    %6884 = vmatpush1.bf16.msra.mxu0 %v4849
    %6885 = vmatprep.subr.bf16.mxu0 0
    %6886 = vmatpush1.bf16.msra.mxu0 %v4850
    %6887 = vmatprep.subr.bf16.mxu0 0
    %6888 = vmatpush1.bf16.msra.mxu0 %v4851
    %6889 = vmatprep.subr.bf16.mxu0 0
    %6890 = vmatpush1.bf16.msra.mxu0 %v4852
    %6891 = vmatprep.subr.bf16.mxu0 0
    %6892 = vmatpush1.bf16.msra.mxu0 %v4853
    %6893 = vmatprep.subr.bf16.mxu0 0
    %6894 = vmatpush1.bf16.msra.mxu0 %v4854
    %6895 = vmatprep.subr.bf16.mxu0 0
    %6896 = vmatpush1.bf16.msra.mxu0 %v4855
    %6897 = vmatprep.subr.bf16.mxu0 0
    %6898 = vmatpush1.bf16.msra.mxu0 %v4856
    %6899 = vmatprep.subr.bf16.mxu0 0
    %6900 = vmatpush1.bf16.msra.mxu0 %v4857
    %6901 = vmatprep.subr.bf16.mxu0 0
    %6902 = vmatpush1.bf16.msra.mxu0 %v4858
    %6903 = vmatprep.subr.bf16.mxu0 0
    %6904 = vmatpush1.bf16.msra.mxu0 %v4859
    %6905 = vmatprep.subr.bf16.mxu0 0
    %6906 = vmatpush1.bf16.msra.mxu0 %v4860
    %6907 = vmatprep.mubr.bf16.mxu0 %v1706
    %6908 = vmatmul.mubr.bf16.gmra.mrb[0].mxu0 %v1705
    %v6909 = vpop.f32.mrb[0].mxu0
    %v6910 = vadd.f32 %v6869, %v6909
    %v6911 = vpop.f32.mrb[0].mxu0
    %v6912 = vpop.f32.mrb[0].mxu0
    %v6913 = vadd.f32 %v6872, %v6912
    %v6914 = vpop.f32.mrb[0].mxu0
    %6915 = vdwg.mxu0
    %6916 = vmatprep.subr.bf16.mxu0 0
    %6917 = vmatpush1.bf16.msra.mxu0 %v4861
    %6918 = vmatprep.subr.bf16.mxu0 0
    %6919 = vmatpush1.bf16.msra.mxu0 %v4862
    %6920 = vmatprep.subr.bf16.mxu0 0
    %6921 = vmatpush1.bf16.msra.mxu0 %v4863
    %6922 = vmatprep.subr.bf16.mxu0 0
    %6923 = vmatpush1.bf16.msra.mxu0 %v4864
    %6924 = vmatprep.subr.bf16.mxu0 0
    %6925 = vmatpush1.bf16.msra.mxu0 %v4865
    %6926 = vmatprep.subr.bf16.mxu0 0
    %6927 = vmatpush1.bf16.msra.mxu0 %v4866
    %6928 = vmatprep.subr.bf16.mxu0 0
    %6929 = vmatpush1.bf16.msra.mxu0 %v4867
    %6930 = vmatprep.subr.bf16.mxu0 0
    %6931 = vmatpush1.bf16.msra.mxu0 %v4868
    %6932 = vmatprep.subr.bf16.mxu0 0
    %6933 = vmatpush1.bf16.msra.mxu0 %v4869
    %6934 = vmatprep.subr.bf16.mxu0 0
    %6935 = vmatpush1.bf16.msra.mxu0 %v4870
    %6936 = vmatprep.subr.bf16.mxu0 0
    %6937 = vmatpush1.bf16.msra.mxu0 %v4871
    %6938 = vmatprep.subr.bf16.mxu0 0
    %6939 = vmatpush1.bf16.msra.mxu0 %v4872
    %6940 = vmatprep.subr.bf16.mxu0 0
    %6941 = vmatpush1.bf16.msra.mxu0 %v4873
    %6942 = vmatprep.subr.bf16.mxu0 0
    %6943 = vmatpush1.bf16.msra.mxu0 %v4874
    %6944 = vmatprep.subr.bf16.mxu0 0
    %6945 = vmatpush1.bf16.msra.mxu0 %v4875
    %6946 = vmatprep.subr.bf16.mxu0 0
    %6947 = vmatpush1.bf16.msra.mxu0 %v4876
    %6948 = vmatprep.mubr.bf16.mxu0 %v1708
    %6949 = vmatmul.mubr.bf16.gmra.mrb[0].mxu0 %v1707
    %v6950 = vpop.f32.mrb[0].mxu0
    %v6951 = vadd.f32 %v6910, %v6950
    %v6952 = vpop.f32.mrb[0].mxu0
    %v6953 = vpop.f32.mrb[0].mxu0
    %v6954 = vadd.f32 %v6913, %v6953
    %v6955 = vpop.f32.mrb[0].mxu0
    %6956 = vdwg.mxu0
    %6957 = vmatprep.subr.bf16.mxu0 0
    %6958 = vmatpush1.bf16.msra.mxu0 %v4877
    %6959 = vmatprep.subr.bf16.mxu0 0
    %6960 = vmatpush1.bf16.msra.mxu0 %v4878
    %6961 = vmatprep.subr.bf16.mxu0 0
    %6962 = vmatpush1.bf16.msra.mxu0 %v4879
    %6963 = vmatprep.subr.bf16.mxu0 0
    %6964 = vmatpush1.bf16.msra.mxu0 %v4880
    %6965 = vmatprep.subr.bf16.mxu0 0
    %6966 = vmatpush1.bf16.msra.mxu0 %v4881
    %6967 = vmatprep.subr.bf16.mxu0 0
    %6968 = vmatpush1.bf16.msra.mxu0 %v4882
    %6969 = vmatprep.subr.bf16.mxu0 0
    %6970 = vmatpush1.bf16.msra.mxu0 %v4883
    %6971 = vmatprep.subr.bf16.mxu0 0
    %6972 = vmatpush1.bf16.msra.mxu0 %v4884
    %6973 = vmatprep.subr.bf16.mxu0 0
    %6974 = vmatpush1.bf16.msra.mxu0 %v4885
    %6975 = vmatprep.subr.bf16.mxu0 0
    %6976 = vmatpush1.bf16.msra.mxu0 %v4886
    %6977 = vmatprep.subr.bf16.mxu0 0
    %6978 = vmatpush1.bf16.msra.mxu0 %v4887
    %6979 = vmatprep.subr.bf16.mxu0 0
    %6980 = vmatpush1.bf16.msra.mxu0 %v4888
    %6981 = vmatprep.subr.bf16.mxu0 0
    %6982 = vmatpush1.bf16.msra.mxu0 %v4889
    %6983 = vmatprep.subr.bf16.mxu0 0
    %6984 = vmatpush1.bf16.msra.mxu0 %v4890
    %6985 = vmatprep.subr.bf16.mxu0 0
    %6986 = vmatpush1.bf16.msra.mxu0 %v4891
    %6987 = vmatprep.subr.bf16.mxu0 0
    %6988 = vmatpush1.bf16.msra.mxu0 %v4892
    %6989 = vmatprep.mubr.bf16.mxu0 %v1710
    %6990 = vmatmul.mubr.bf16.gmra.mrb[0].mxu0 %v1709
    %v6991 = vpop.f32.mrb[0].mxu0
    %v6992 = vadd.f32 %v6951, %v6991
    %v6993 = vpop.f32.mrb[0].mxu0
    %v6994 = vpop.f32.mrb[0].mxu0
    %v6995 = vadd.f32 %v6954, %v6994
    %v6996 = vpop.f32.mrb[0].mxu0
    %6997 = vdwg.mxu0
    %6998 = vmatprep.subr.bf16.mxu0 0
    %6999 = vmatpush1.bf16.msra.mxu0 %v4893
    %7000 = vmatprep.subr.bf16.mxu0 0
    %7001 = vmatpush1.bf16.msra.mxu0 %v4894
    %7002 = vmatprep.subr.bf16.mxu0 0
    %7003 = vmatpush1.bf16.msra.mxu0 %v4895
    %7004 = vmatprep.subr.bf16.mxu0 0
    %7005 = vmatpush1.bf16.msra.mxu0 %v4896
    %7006 = vmatprep.subr.bf16.mxu0 0
    %7007 = vmatpush1.bf16.msra.mxu0 %v4897
    %7008 = vmatprep.subr.bf16.mxu0 0
    %7009 = vmatpush1.bf16.msra.mxu0 %v4898
    %7010 = vmatprep.subr.bf16.mxu0 0
    %7011 = vmatpush1.bf16.msra.mxu0 %v4899
    %7012 = vmatprep.subr.bf16.mxu0 0
    %7013 = vmatpush1.bf16.msra.mxu0 %v4900
    %7014 = vmatprep.subr.bf16.mxu0 0
    %7015 = vmatpush1.bf16.msra.mxu0 %v4901
    %7016 = vmatprep.subr.bf16.mxu0 0
    %7017 = vmatpush1.bf16.msra.mxu0 %v4902
    %7018 = vmatprep.subr.bf16.mxu0 0
    %7019 = vmatpush1.bf16.msra.mxu0 %v4903
    %7020 = vmatprep.subr.bf16.mxu0 0
    %7021 = vmatpush1.bf16.msra.mxu0 %v4904
    %7022 = vmatprep.subr.bf16.mxu0 0
    %7023 = vmatpush1.bf16.msra.mxu0 %v4905
    %7024 = vmatprep.subr.bf16.mxu0 0
    %7025 = vmatpush1.bf16.msra.mxu0 %v4906
    %7026 = vmatprep.subr.bf16.mxu0 0
    %7027 = vmatpush1.bf16.msra.mxu0 %v4907
    %7028 = vmatprep.subr.bf16.mxu0 0
    %7029 = vmatpush1.bf16.msra.mxu0 %v4908
    %7030 = vmatprep.mubr.bf16.mxu0 %v1712
    %7031 = vmatmul.mubr.bf16.gmra.mrb[0].mxu0 %v1711
    %v7032 = vpop.f32.mrb[0].mxu0
    %v7033 = vadd.f32 %v6992, %v7032
    %v7034 = vpop.f32.mrb[0].mxu0
    %v7035 = vpop.f32.mrb[0].mxu0
    %v7036 = vadd.f32 %v6995, %v7035
    %v7037 = vpop.f32.mrb[0].mxu0
    %7038 = vdwg.mxu0
    %7039 = vmatprep.subr.bf16.mxu0 0
    %7040 = vmatpush1.bf16.msra.mxu0 %v4909
    %7041 = vmatprep.subr.bf16.mxu0 0
    %7042 = vmatpush1.bf16.msra.mxu0 %v4910
    %7043 = vmatprep.subr.bf16.mxu0 0
    %7044 = vmatpush1.bf16.msra.mxu0 %v4911
    %7045 = vmatprep.subr.bf16.mxu0 0
    %7046 = vmatpush1.bf16.msra.mxu0 %v4912
    %7047 = vmatprep.subr.bf16.mxu0 0
    %7048 = vmatpush1.bf16.msra.mxu0 %v4913
    %7049 = vmatprep.subr.bf16.mxu0 0
    %7050 = vmatpush1.bf16.msra.mxu0 %v4914
    %7051 = vmatprep.subr.bf16.mxu0 0
    %7052 = vmatpush1.bf16.msra.mxu0 %v4915
    %7053 = vmatprep.subr.bf16.mxu0 0
    %7054 = vmatpush1.bf16.msra.mxu0 %v4916
    %7055 = vmatprep.subr.bf16.mxu0 0
    %7056 = vmatpush1.bf16.msra.mxu0 %v4917
    %7057 = vmatprep.subr.bf16.mxu0 0
    %7058 = vmatpush1.bf16.msra.mxu0 %v4918
    %7059 = vmatprep.subr.bf16.mxu0 0
    %7060 = vmatpush1.bf16.msra.mxu0 %v4919
    %7061 = vmatprep.subr.bf16.mxu0 0
    %7062 = vmatpush1.bf16.msra.mxu0 %v4920
    %7063 = vmatprep.subr.bf16.mxu0 0
    %7064 = vmatpush1.bf16.msra.mxu0 %v4921
    %7065 = vmatprep.subr.bf16.mxu0 0
    %7066 = vmatpush1.bf16.msra.mxu0 %v4922
    %7067 = vmatprep.subr.bf16.mxu0 0
    %7068 = vmatpush1.bf16.msra.mxu0 %v4923
    %7069 = vmatprep.subr.bf16.mxu0 0
    %7070 = vmatpush1.bf16.msra.mxu0 %v4924
    %7071 = vmatprep.mubr.bf16.mxu0 %v1714
    %7072 = vmatmul.mubr.bf16.gmra.mrb[0].mxu0 %v1713
    %v7073 = vpop.f32.mrb[0].mxu0
    %v7074 = vadd.f32 %v7033, %v7073
    %v7075 = vpop.f32.mrb[0].mxu0
    %v7076 = vpop.f32.mrb[0].mxu0
    %v7077 = vadd.f32 %v7036, %v7076
    %v7078 = vpop.f32.mrb[0].mxu0
    %7079 = vdwg.mxu0
    %7080 = vmatprep.subr.bf16.mxu0 0
    %7081 = vmatpush1.bf16.msra.mxu0 %v4925
    %7082 = vmatprep.subr.bf16.mxu0 0
    %7083 = vmatpush1.bf16.msra.mxu0 %v4926
    %7084 = vmatprep.subr.bf16.mxu0 0
    %7085 = vmatpush1.bf16.msra.mxu0 %v4927
    %7086 = vmatprep.subr.bf16.mxu0 0
    %7087 = vmatpush1.bf16.msra.mxu0 %v4928
    %7088 = vmatprep.subr.bf16.mxu0 0
    %7089 = vmatpush1.bf16.msra.mxu0 %v4929
    %7090 = vmatprep.subr.bf16.mxu0 0
    %7091 = vmatpush1.bf16.msra.mxu0 %v4930
    %7092 = vmatprep.subr.bf16.mxu0 0
    %7093 = vmatpush1.bf16.msra.mxu0 %v4931
    %7094 = vmatprep.subr.bf16.mxu0 0
    %7095 = vmatpush1.bf16.msra.mxu0 %v4932
    %7096 = vmatprep.subr.bf16.mxu0 0
    %7097 = vmatpush1.bf16.msra.mxu0 %v4933
    %7098 = vmatprep.subr.bf16.mxu0 0
    %7099 = vmatpush1.bf16.msra.mxu0 %v4934
    %7100 = vmatprep.subr.bf16.mxu0 0
    %7101 = vmatpush1.bf16.msra.mxu0 %v4935
    %7102 = vmatprep.subr.bf16.mxu0 0
    %7103 = vmatpush1.bf16.msra.mxu0 %v4936
    %7104 = vmatprep.subr.bf16.mxu0 0
    %7105 = vmatpush1.bf16.msra.mxu0 %v4937
    %7106 = vmatprep.subr.bf16.mxu0 0
    %7107 = vmatpush1.bf16.msra.mxu0 %v4938
    %7108 = vmatprep.subr.bf16.mxu0 0
    %7109 = vmatpush1.bf16.msra.mxu0 %v4939
    %7110 = vmatprep.subr.bf16.mxu0 0
    %7111 = vmatpush1.bf16.msra.mxu0 %v4940
    %7112 = vmatprep.mubr.bf16.mxu0 %v1716
    %7113 = vmatmul.mubr.bf16.gmra.mrb[0].mxu0 %v1715
    %v7114 = vpop.f32.mrb[0].mxu0
    %v7115 = vadd.f32 %v7074, %v7114
    %v7116 = vpop.f32.mrb[0].mxu0
    %v7117 = vpop.f32.mrb[0].mxu0
    %v7118 = vadd.f32 %v7077, %v7117
    %v7119 = vpop.f32.mrb[0].mxu0
    %7120 = vdwg.mxu0
    %7121 = vmatprep.subr.bf16.mxu0 0
    %7122 = vmatpush1.bf16.msra.mxu0 %v4941
    %7123 = vmatprep.subr.bf16.mxu0 0
    %7124 = vmatpush1.bf16.msra.mxu0 %v4942
    %7125 = vmatprep.subr.bf16.mxu0 0
    %7126 = vmatpush1.bf16.msra.mxu0 %v4943
    %7127 = vmatprep.subr.bf16.mxu0 0
    %7128 = vmatpush1.bf16.msra.mxu0 %v4944
    %7129 = vmatprep.subr.bf16.mxu0 0
    %7130 = vmatpush1.bf16.msra.mxu0 %v4945
    %7131 = vmatprep.subr.bf16.mxu0 0
    %7132 = vmatpush1.bf16.msra.mxu0 %v4946
    %7133 = vmatprep.subr.bf16.mxu0 0
    %7134 = vmatpush1.bf16.msra.mxu0 %v4947
    %7135 = vmatprep.subr.bf16.mxu0 0
    %7136 = vmatpush1.bf16.msra.mxu0 %v4948
    %7137 = vmatprep.subr.bf16.mxu0 0
    %7138 = vmatpush1.bf16.msra.mxu0 %v4949
    %7139 = vmatprep.subr.bf16.mxu0 0
    %7140 = vmatpush1.bf16.msra.mxu0 %v4950
    %7141 = vmatprep.subr.bf16.mxu0 0
    %7142 = vmatpush1.bf16.msra.mxu0 %v4951
    %7143 = vmatprep.subr.bf16.mxu0 0
    %7144 = vmatpush1.bf16.msra.mxu0 %v4952
    %7145 = vmatprep.subr.bf16.mxu0 0
    %7146 = vmatpush1.bf16.msra.mxu0 %v4953
    %7147 = vmatprep.subr.bf16.mxu0 0
    %7148 = vmatpush1.bf16.msra.mxu0 %v4954
    %7149 = vmatprep.subr.bf16.mxu0 0
    %7150 = vmatpush1.bf16.msra.mxu0 %v4955
    %7151 = vmatprep.subr.bf16.mxu0 0
    %7152 = vmatpush1.bf16.msra.mxu0 %v4956
    %7153 = vmatprep.mubr.bf16.mxu0 %v1718
    %7154 = vmatmul.mubr.bf16.gmra.mrb[0].mxu0 %v1717
    %v7155 = vpop.f32.mrb[0].mxu0
    %v7156 = vadd.f32 %v7115, %v7155
    %v7157 = vpop.f32.mrb[0].mxu0
    %v7158 = vpop.f32.mrb[0].mxu0
    %v7159 = vadd.f32 %v7118, %v7158
    %v7160 = vpop.f32.mrb[0].mxu0
    %7161 = vdwg.mxu0
    %7162 = vmatprep.subr.bf16.mxu0 0
    %7163 = vmatpush1.bf16.msra.mxu0 %v4957
    %7164 = vmatprep.subr.bf16.mxu0 0
    %7165 = vmatpush1.bf16.msra.mxu0 %v4958
    %7166 = vmatprep.subr.bf16.mxu0 0
    %7167 = vmatpush1.bf16.msra.mxu0 %v4959
    %7168 = vmatprep.subr.bf16.mxu0 0
    %7169 = vmatpush1.bf16.msra.mxu0 %v4960
    %7170 = vmatprep.subr.bf16.mxu0 0
    %7171 = vmatpush1.bf16.msra.mxu0 %v4961
    %7172 = vmatprep.subr.bf16.mxu0 0
    %7173 = vmatpush1.bf16.msra.mxu0 %v4962
    %7174 = vmatprep.subr.bf16.mxu0 0
    %7175 = vmatpush1.bf16.msra.mxu0 %v4963
    %7176 = vmatprep.subr.bf16.mxu0 0
    %7177 = vmatpush1.bf16.msra.mxu0 %v4964
    %7178 = vmatprep.subr.bf16.mxu0 0
    %7179 = vmatpush1.bf16.msra.mxu0 %v4965
    %7180 = vmatprep.subr.bf16.mxu0 0
    %7181 = vmatpush1.bf16.msra.mxu0 %v4966
    %7182 = vmatprep.subr.bf16.mxu0 0
    %7183 = vmatpush1.bf16.msra.mxu0 %v4967
    %7184 = vmatprep.subr.bf16.mxu0 0
    %7185 = vmatpush1.bf16.msra.mxu0 %v4968
    %7186 = vmatprep.subr.bf16.mxu0 0
    %7187 = vmatpush1.bf16.msra.mxu0 %v4969
    %7188 = vmatprep.subr.bf16.mxu0 0
    %7189 = vmatpush1.bf16.msra.mxu0 %v4970
    %7190 = vmatprep.subr.bf16.mxu0 0
    %7191 = vmatpush1.bf16.msra.mxu0 %v4971
    %7192 = vmatprep.subr.bf16.mxu0 0
    %7193 = vmatpush1.bf16.msra.mxu0 %v4972
    %7194 = vmatprep.mubr.bf16.mxu0 %v1720
    %7195 = vmatmul.mubr.bf16.gmra.mrb[0].mxu0 %v1719
    %v7196 = vpop.f32.mrb[0].mxu0
    %v7197 = vadd.f32 %v7156, %v7196
    %v7198 = vpop.f32.mrb[0].mxu0
    %v7199 = vpop.f32.mrb[0].mxu0
    %v7200 = vadd.f32 %v7159, %v7199
    %v7201 = vpop.f32.mrb[0].mxu0
    %7202 = vdwg.mxu0
    %7203 = vmatprep.subr.bf16.mxu0 0
    %7204 = vmatpush1.bf16.msra.mxu0 %v4973
    %7205 = vmatprep.subr.bf16.mxu0 0
    %7206 = vmatpush1.bf16.msra.mxu0 %v4974
    %7207 = vmatprep.subr.bf16.mxu0 0
    %7208 = vmatpush1.bf16.msra.mxu0 %v4975
    %7209 = vmatprep.subr.bf16.mxu0 0
    %7210 = vmatpush1.bf16.msra.mxu0 %v4976
    %7211 = vmatprep.subr.bf16.mxu0 0
    %7212 = vmatpush1.bf16.msra.mxu0 %v4977
    %7213 = vmatprep.subr.bf16.mxu0 0
    %7214 = vmatpush1.bf16.msra.mxu0 %v4978
    %7215 = vmatprep.subr.bf16.mxu0 0
    %7216 = vmatpush1.bf16.msra.mxu0 %v4979
    %7217 = vmatprep.subr.bf16.mxu0 0
    %7218 = vmatpush1.bf16.msra.mxu0 %v4980
    %7219 = vmatprep.subr.bf16.mxu0 0
    %7220 = vmatpush1.bf16.msra.mxu0 %v4981
    %7221 = vmatprep.subr.bf16.mxu0 0
    %7222 = vmatpush1.bf16.msra.mxu0 %v4982
    %7223 = vmatprep.subr.bf16.mxu0 0
    %7224 = vmatpush1.bf16.msra.mxu0 %v4983
    %7225 = vmatprep.subr.bf16.mxu0 0
    %7226 = vmatpush1.bf16.msra.mxu0 %v4984
    %7227 = vmatprep.subr.bf16.mxu0 0
    %7228 = vmatpush1.bf16.msra.mxu0 %v4985
    %7229 = vmatprep.subr.bf16.mxu0 0
    %7230 = vmatpush1.bf16.msra.mxu0 %v4986
    %7231 = vmatprep.subr.bf16.mxu0 0
    %7232 = vmatpush1.bf16.msra.mxu0 %v4987
    %7233 = vmatprep.subr.bf16.mxu0 0
    %7234 = vmatpush1.bf16.msra.mxu0 %v4988
    %7235 = vmatprep.mubr.bf16.mxu0 %v1722
    %7236 = vmatmul.mubr.bf16.gmra.mrb[0].mxu0 %v1721
    %v7237 = vpop.f32.mrb[0].mxu0
    %v7238 = vadd.f32 %v7197, %v7237
    %v7239 = vpop.f32.mrb[0].mxu0
    %v7240 = vpop.f32.mrb[0].mxu0
    %v7241 = vadd.f32 %v7200, %v7240
    %v7242 = vpop.f32.mrb[0].mxu0
    %7243 = vdwg.mxu0
    %7244 = vmatprep.subr.bf16.mxu0 0
    %7245 = vmatpush1.bf16.msra.mxu0 %v4989
    %7246 = vmatprep.subr.bf16.mxu0 0
    %7247 = vmatpush1.bf16.msra.mxu0 %v4990
    %7248 = vmatprep.subr.bf16.mxu0 0
    %7249 = vmatpush1.bf16.msra.mxu0 %v4991
    %7250 = vmatprep.subr.bf16.mxu0 0
    %7251 = vmatpush1.bf16.msra.mxu0 %v4992
    %7252 = vmatprep.subr.bf16.mxu0 0
    %7253 = vmatpush1.bf16.msra.mxu0 %v4993
    %7254 = vmatprep.subr.bf16.mxu0 0
    %7255 = vmatpush1.bf16.msra.mxu0 %v4994
    %7256 = vmatprep.subr.bf16.mxu0 0
    %7257 = vmatpush1.bf16.msra.mxu0 %v4995
    %7258 = vmatprep.subr.bf16.mxu0 0
    %7259 = vmatpush1.bf16.msra.mxu0 %v4996
    %7260 = vmatprep.subr.bf16.mxu0 0
    %7261 = vmatpush1.bf16.msra.mxu0 %v4997
    %7262 = vmatprep.subr.bf16.mxu0 0
    %7263 = vmatpush1.bf16.msra.mxu0 %v4998
    %7264 = vmatprep.subr.bf16.mxu0 0
    %7265 = vmatpush1.bf16.msra.mxu0 %v4999
    %7266 = vmatprep.subr.bf16.mxu0 0
    %7267 = vmatpush1.bf16.msra.mxu0 %v5000
    %7268 = vmatprep.subr.bf16.mxu0 0
    %7269 = vmatpush1.bf16.msra.mxu0 %v5001
    %7270 = vmatprep.subr.bf16.mxu0 0
    %7271 = vmatpush1.bf16.msra.mxu0 %v5002
    %7272 = vmatprep.subr.bf16.mxu0 0
    %7273 = vmatpush1.bf16.msra.mxu0 %v5003
    %7274 = vmatprep.subr.bf16.mxu0 0
    %7275 = vmatpush1.bf16.msra.mxu0 %v5004
    %7276 = vmatprep.mubr.bf16.mxu0 %v1724
    %7277 = vmatmul.mubr.bf16.gmra.mrb[0].mxu0 %v1723
    %v7278 = vpop.f32.mrb[0].mxu0
    %v7279 = vadd.f32 %v7238, %v7278
    %v7280 = vpop.f32.mrb[0].mxu0
    %v7281 = vpop.f32.mrb[0].mxu0
    %v7282 = vadd.f32 %v7241, %v7281
    %v7283 = vpop.f32.mrb[0].mxu0
    %7284 = vdwg.mxu0
    %v7285 = vxor.u32 %v7279, 2147483648
    %v7286 = vxor.u32 %v7282, 2147483648
    %v7287 = vmul.f32 %v7285, 1.442695
    %v7288 = vpow.pop %v7287
    %v7289 = vmul.f32 %v7286, 1.442695
    %v7290 = vpow.pop %v7289
    %v7291 = vadd.f32 %v7288, 1.0
    %v7292 = vadd.f32 %v7290, 1.0
    %v7293 = vrcp.pop %v7291
    %v7294 = vmul.f32 1.0, %v7293
    %v7295 = vrcp.pop %v7292
    %v7296 = vmul.f32 1.0, %v7295
    %v7297 = vld [vmem:[#allocation5] sm:$0x1]
    %v7299 = vlaneseq
    %v7300 = vshrl.u32 %v7299, 7
    %v7301 = vsub.s32 0, %v7300
    %v7302 = vrot.slane %v7297, %v7301
    %v7304 = vmul.f32 %v7294, %v7302
    %v7305 = vmul.f32 %v7296, %v7302
    %7306 = vadd.xlane.f32.xlu0 %v7304
    %v7307 = vpop.xlane.xlu0 %7306
    %7308 = vadd.xlane.f32.xlu0 %v7305
    %v7309 = vpop.xlane.xlu0 %7308
    %s7310 = sld [smem:[#allocation2]]
    %v7311 = vstv %s7310
    %v7312 = vadd.f32 %v7307, %v7311
    %v7313 = vadd.f32 %v7309, %v7311
    %v7314 = vxor.u32 %v7312, 2147483648
    %v7315 = vxor.u32 %v7313, 2147483648
    %v7316 = vmul.f32 %v7314, 1.442695
    %v7317 = vpow.pop %v7316
    %v7318 = vmul.f32 %v7315, 1.442695
    %v7319 = vpow.pop %v7318
    %v7320 = vadd.f32 %v7317, 1.0
    %v7321 = vadd.f32 %v7319, 1.0
    %v7322 = vrcp.pop %v7320
    %v7323 = vmul.f32 1.0, %v7322
    %v7324 = vrcp.pop %v7321
    %v7325 = vmul.f32 1.0, %v7324
    %vm7326 = vcmask 7168
    %7327 = vst.msk [vmem:[%s4] sm:$0xff] %vm7326, %v7323
    %7328 = vst.msk [vmem:[%s4 + $0x8] sm:$0xff] %vm7326, %v7325
    // Predicated region
    $region26: #{classifier_forward.1} parent=1 // pred_check
      _
    $region27: #{classifier_forward.1} parent=1 // pred_check_branch
      %7330 = sbr.rel (0) target = $region29
    $region28: #{classifier_forward.1} parent=1 // pred_region
      _
    $region29: #{classifier_forward.1} parent=1 // pred_fallthru
      _
    // Predicated region
    $region30: #{classifier_forward.1} parent=1 // pred_check
      _
    $region31: #{classifier_forward.1} parent=1 // pred_check_branch
      %7332 = sbr.rel (0) target = $region33
    $region32: #{classifier_forward.1} parent=1 // pred_region
      _
    $region33: #{classifier_forward.1} parent=1 // pred_fallthru
      _
    %7333 = vsyncpa [#allocation4], 1
    %7334 = vsyncpa [#allocation6], 1

</llo_original>
